<compile_context>
chip_gen: v5e
topology: v5e:2x2
jax: 0.10.0
libtpu: 0.0.40
codegen_flags: <defaults>
</compile_context>

<pallas_src>
import functools

import jax
import jax.numpy as jnp
from jax.experimental import pallas as pl
from jax.experimental.pallas import tpu as pltpu


# Left/right zero margin (in flat pixels) of the shift-band scratch.
# Must be >= 2*W; 128 keeps the band stores and im2col reads lane-aligned.
_PAD_MARGIN = 128


# ------------------------------ Fused kernel ------------------------------- #

def _fused_kernel(x_ref, w_ref, o_ref, pad_ref, cols_ref, *,
                  loop, has_scn_loop, width, in_channel, event_moments,
                  hidden, offs):
    """Whole ESLBackBone forward for one batch element, resident in VMEM.

    x_ref    : (1, in_channel+event_moments, HW) f32   frames ++ events
    w_ref    : (R, 9*cmax) bf16                        all conv weights (one slab)
    o_ref    : (1, high, HW) f32
    pad_ref  : (3*cmax, HW + 2*margin) f32 scratch     pre-masked shift bands
    cols_ref : (9*cmax, HW) bf16 scratch               im2col matrix (MXU RHS)
    """
    high = o_ref.shape[1]
    hw = o_ref.shape[2]
    cmax = cols_ref.shape[0] // 9
    margin = (pad_ref.shape[1] - hw) // 2

    # Column masks in *source* coordinates, generated in-kernel (no extra DMA)
    # and pre-broadcast ONCE to (cmax, HW) so per-conv multiplies do not
    # re-emit broadcast_in_dim.
    col = jax.lax.broadcasted_iota(jnp.int32, (cmax, hw), 1) % width
    m_nr = (col != width - 1).astype(jnp.float32)   # kills src col W-1 (kx==0 taps)
    m_nl = (col != 0).astype(jnp.float32)           # kills src col 0   (kx==2 taps)

    # The tap loads reach at most W+1 lanes into the margins; those strips are
    # never written by the band stores, so re-zero just them.  Done every grid
    # step (12 masked stores, ~12 KiB) because with a "parallel" batch axis on
    # a multi-TensorCore chip each core has its own scratch copy and a
    # pid==0-only init would leave one core's margins uninitialized.
    strip = 2 * width
    zs = jnp.zeros((pad_ref.shape[0], strip), jnp.float32)
    pad_ref[:, margin - strip:margin] = zs
    pad_ref[:, margin + hw:margin + hw + strip] = zs

    def wslice(w_off, rows, cols):
        return w_ref[w_off:w_off + rows, 0:cols]    # static slab slice

    def conv1x1(x, w_off, cout):
        # (Cout, Cin) @ (Cin, HW) -> (Cout, HW); bf16 operands, f32 accumulate.
        cin = x.shape[0]
        return jnp.dot(wslice(w_off, cout, cin), x.astype(jnp.bfloat16),
                       preferred_element_type=jnp.float32)

    band_of_kx = (1, 0, 2)   # kx==0 -> m_nr band, kx==1 -> plain, kx==2 -> m_nl

    def conv3x3(x, w_off, cout):
        # 3x3, stride 1, padding 1, no bias, as one im2col matmul.
        cin = x.shape[0]
        # Three pre-masked bands, written lane-aligned once per conv.  Row
        # wraparound of the flat-shift trick is absorbed by the zero strips;
        # column wraparound is killed by the masks baked into bands 1 and 2.
        pad_ref[0 * cmax:0 * cmax + cin, margin:margin + hw] = x
        pad_ref[1 * cmax:1 * cmax + cin, margin:margin + hw] = x * m_nr[:cin]
        pad_ref[2 * cmax:2 * cmax + cin, margin:margin + hw] = x * m_nl[:cin]
        # The 9 taps are plain (un-masked) shifted slices of the bands written
        # straight into the bf16 im2col scratch feeding the MXU -- no
        # jnp.concatenate, no (9*Cin, HW) register-resident intermediate.
        for ky in range(3):
            for kx in range(3):
                t = 3 * ky + kx
                off = (ky - 1) * width + (kx - 1)
                b = band_of_kx[kx] * cmax
                cols_ref[t * cin:(t + 1) * cin, :] = pad_ref[
                    b:b + cin, margin + off:margin + off + hw
                ].astype(jnp.bfloat16)
        # (Cout, 9*Cin) @ (9*Cin, HW), bf16 operands, f32 accumulate.
        return jnp.dot(wslice(w_off, cout, 9 * cin), cols_ref[0:9 * cin, :],
                       preferred_element_type=jnp.float32)

    def scn(x1, e, e2, w1_off, s1_off, s2_off):
        # _SCN.forward (is_deformable=False)
        x1 = x1 * e
        z = conv3x3(x1, w1_off, high)
        tmp = z
        for _ in range(loop):
            ttmp = jnp.maximum(tmp, 0.0)            # ReLU
            x = conv3x3(ttmp, s1_off, hidden)
            x = x * e2                              # hoisted e*e
            x = conv3x3(x, s2_off, high)
            # TODO(synk): is_deformable=True (DCNv3NCHW) has no clean Pallas
            # equivalent; branch not taken in this config.
            tmp = (ttmp - x) + z
        return jnp.maximum(tmp, 0.0)                # ReLU

    xin = x_ref[0]                                  # (in_channel+em, HW) f32
    frames = xin[0:in_channel]
    events = xin[in_channel:in_channel + event_moments]

    x1 = conv1x1(frames, offs["image_d"], hidden)
    e = jax.nn.sigmoid(conv1x1(events, offs["event_c1"], hidden))
    e = jax.nn.sigmoid(conv1x1(e, offs["event_c2"], hidden))
    e2 = e * e                                      # shared by both SCN blocks

    out = scn(x1, e, e2, offs["scn1_W1"], offs["scn1_S1"], offs["scn1_S2"])
    if has_scn_loop:
        out = conv1x1(out, offs["to_low_dim"], hidden)
        out = scn(out, e, e2, offs["scn2_W1"], offs["scn2_S1"], offs["scn2_S2"])
    out = conv3x3(out, offs["end_conv"], high)

    o_ref[0] = out                                  # lane-dense (high, HW) store


# ------------------------------ Host wrapper -------------------------------- #

def esl_backbone_forward(events_nchw, frames_nchw, wslab, *, offs, loop,
                         has_scn_loop, hidden, high):
    """NCHW in, NCHW out. (wslab, offs) = prepare_kernel_weights(...)."""
    n, em, h, w = events_nchw.shape
    _, cin, _, _ = frames_nchw.shape
    hw = h * w
    cmax = max(hidden, high)
    margin = _PAD_MARGIN
    assert margin >= 2 * w, "margin must cover the 3x3 shift strips"

    # NCHW -> (N, C, H*W): contiguous reshape (no transpose).  Frames ++ events
    # are packed into one per-step input block (one DMA instead of two).
    x_in = jnp.concatenate([frames_nchw.reshape(n, cin, hw),
                            events_nchw.reshape(n, em, hw)], axis=1)

    kernel = functools.partial(
        _fused_kernel, loop=loop, has_scn_loop=has_scn_loop, width=w,
        in_channel=cin, event_moments=em, hidden=hidden, offs=offs)

    # TODO(synk): for real frame resolutions, tile the HW axis (row blocks with
    # W-pixel halos, sized against v7x's 64 MiB VMEM) and batch-tile the grid
    # (unrolled fori_loop over several images per step) -- unnecessary at
    # 16x16 / N=2.
    out = pl.pallas_call(
        kernel,
        out_shape=jax.ShapeDtypeStruct((n, high, hw), jnp.float32),
        grid=(n,),                       # keep >1 grid steps so v7x can use
                                         # both TensorCores
        in_specs=[
            pl.BlockSpec((1, cin + em, hw), lambda i: (i, 0, 0)),
            pl.BlockSpec(wslab.shape, lambda i: (0, 0)),   # whole weight slab
        ],
        out_specs=pl.BlockSpec((1, high, hw), lambda i: (i, 0, 0)),
        scratch_shapes=[
            pltpu.VMEM((3 * cmax, hw + 2 * margin), jnp.float32),  # shift bands
            pltpu.VMEM((9 * cmax, hw), jnp.bfloat16),              # im2col RHS
        ],
        compiler_params=pltpu.CompilerParams(
            dimension_semantics=("parallel",)),
    )(x_in, wslab)

    # (N, Cout, H*W) is already NCHW-contiguous.
    return out.reshape(n, high, h, w)


# --------------------------- Parameters (OIHW) ------------------------------ #

def init_torch_params(key, in_channel, event_moments, hidden, high,
                      has_scn_loop):
    """Random weights in PyTorch Conv2d layout (Cout, Cin, kh, kw), bias=False."""
    keys = iter(jax.random.split(key, 16))

    def conv_w(k, cout, cin, ksz):
        fan_in = cin * ksz * ksz
        return (jax.random.normal(k, (cout, cin, ksz, ksz), jnp.float32)
                / jnp.sqrt(float(fan_in)))

    p = {
        "image_d": conv_w(next(keys), hidden, in_channel, 1),
        "event_c1": conv_w(next(keys), hidden, event_moments, 1),
        "event_c2": conv_w(next(keys), hidden, hidden, 1),
        "scn_1": {"W1": conv_w(next(keys), high, hidden, 3),
                  "S1": conv_w(next(keys), hidden, high, 3),
                  "S2": conv_w(next(keys), high, hidden, 3)},
        "end_conv": conv_w(next(keys), high, high, 3),
    }
    if has_scn_loop:
        p["to_low_dim"] = conv_w(next(keys), hidden, high, 1)
        p["scn_2"] = {"W1": conv_w(next(keys), high, hidden, 3),
                      "S1": conv_w(next(keys), hidden, high, 3),
                      "S2": conv_w(next(keys), high, hidden, 3)}
    return p


def prepare_kernel_weights(p, has_scn_loop, hidden, high):
    """Pack every conv weight into ONE bf16 slab -> a single constant DMA.

    One row block per conv (high-out blocks first so 16-row blocks stay
    sublane-group aligned); columns:
      1x1: (Cout, Cin)                                at cols [0, Cin)
      3x3: (Cout, 9*Cin), column order (ky, kx, cin)  at cols [0, 9*Cin)
    matching the in-kernel im2col tap ordering.  Unused columns are zero.
    Returns (slab, offs) with offs[name] = first slab row of that conv.
    """
    cmax = max(hidden, high)
    ncols = 9 * cmax
    blocks, offs = [], {}
    row = 0

    def add(name, mat):
        nonlocal row
        offs[name] = row
        row += mat.shape[0]
        blocks.append(jnp.pad(mat, ((0, 0), (0, ncols - mat.shape[1]))))

    def w1x1(w):
        cout, cin = w.shape[:2]
        return w.reshape(cout, cin)

    def w3x3(w):
        cout, cin = w.shape[:2]
        return jnp.transpose(w, (0, 2, 3, 1)).reshape(cout, 9 * cin)

    # high-out (16-row) blocks first, then hidden-out (8-row) blocks.
    add("scn1_W1", w3x3(p["scn_1"]["W1"]))
    add("scn1_S2", w3x3(p["scn_1"]["S2"]))
    if has_scn_loop:
        add("scn2_W1", w3x3(p["scn_2"]["W1"]))
        add("scn2_S2", w3x3(p["scn_2"]["S2"]))
    add("end_conv", w3x3(p["end_conv"]))
    add("scn1_S1", w3x3(p["scn_1"]["S1"]))
    if has_scn_loop:
        add("scn2_S1", w3x3(p["scn_2"]["S1"]))
        add("to_low_dim", w1x1(p["to_low_dim"]))
    add("image_d", w1x1(p["image_d"]))
    add("event_c1", w1x1(p["event_c1"]))
    add("event_c2", w1x1(p["event_c2"]))

    slab = jnp.concatenate(blocks, axis=0).astype(jnp.bfloat16)
    return slab, offs


# ----------------------------------- Main ----------------------------------- #

if __name__ == "__main__":
    # Module config
    input_frames = 2
    is_color = False
    event_moments = 4
    hidden_channels = 8
    high_dim_channels = 16
    is_deformable = False        # DCNv3 branch not taken
    loop = 2
    has_scn_loop = True

    image_channel = 3 if is_color else 1
    in_channel = image_channel * input_frames

    n, h, w = 2, 16, 16

    key = jax.random.PRNGKey(0)
    k_params, k_events, k_frames = jax.random.split(key, 3)

    torch_params = init_torch_params(k_params, in_channel, event_moments,
                                     hidden_channels, high_dim_channels,
                                     has_scn_loop)
    wslab, offs = prepare_kernel_weights(torch_params, has_scn_loop,
                                         hidden_channels, high_dim_channels)

    events = jax.random.normal(k_events, (n, event_moments, h, w), jnp.float32)
    frames = jax.random.normal(k_frames, (n, in_channel, h, w), jnp.float32)

    fwd = jax.jit(functools.partial(esl_backbone_forward, offs=offs, loop=loop,
                                    has_scn_loop=has_scn_loop,
                                    hidden=hidden_channels,
                                    high=high_dim_channels))
    out = jax.block_until_ready(fwd(events, frames, wslab))

    assert out.shape == (n, high_dim_channels, h, w), out.shape
    assert bool(jnp.all(jnp.isfinite(out)))
    print("KERNEL_OK")
</pallas_src>

<mosaic_0001>
module attributes {stable_mosaic.version = 11 : i64} {
  func.func @_fused_kernel(%arg0: i32, %arg1: memref<1x6x256xf32, #tpu.memory_space<vmem>>, %arg2: memref<128x144xbf16, #tpu.memory_space<vmem>>, %arg3: memref<1x16x256xf32, #tpu.memory_space<vmem>>, %arg4: memref<48x512xf32, #tpu.memory_space<vmem>>, %arg5: memref<144x256xbf16, #tpu.memory_space<vmem>>) attributes {dimension_semantics = [#tpu.dimension_semantics<parallel>], iteration_bounds = array<i64: 2>, scalar_prefetch = 0 : i64, scratch_operands = 2 : i64, tpu.core_type = #tpu.core_type<tc>, window_params = [{transform_indices = @transform_0, window_bounds = array<i64: 1, 6, 256>}, {pipeline_mode = #tpu.pipeline_mode<synchronous>, transform_indices = @transform_1, window_bounds = array<i64: 128, 144>}, {transform_indices = @transform_2, window_bounds = array<i64: 1, 16, 256>}]} {
    %0 = tpu.iota {dimensions = array<i32: 1>} : vector<16x256xi32>
    %c16_i32 = arith.constant 16 : i32
    %c0_i32 = arith.constant 0 : i32
    %1 = arith.cmpi eq, %c16_i32, %c0_i32 : i32
    %c1_i32 = arith.constant 1 : i32
    %2 = arith.select %1, %c1_i32, %c16_i32 : i32
    %3 = vector.broadcast %2 : i32 to vector<16x256xi32>
    %4 = arith.remsi %0, %3 : vector<16x256xi32>
    %c0_i32_0 = arith.constant 0 : i32
    %5 = vector.broadcast %c0_i32_0 : i32 to vector<16x256xi32>
    %6 = arith.cmpi ne, %4, %5 : vector<16x256xi32>
    %c0_i32_1 = arith.constant 0 : i32
    %7 = vector.broadcast %c0_i32_1 : i32 to vector<16x256xi32>
    %8 = arith.cmpi slt, %4, %7 : vector<16x256xi32>
    %c0_i32_2 = arith.constant 0 : i32
    %9 = arith.cmpi slt, %2, %c0_i32_2 : i32
    %10 = vector.broadcast %9 : i1 to vector<16x256xi1>
    %11 = vector.broadcast %10 : vector<16x256xi1> to vector<16x256xi1>
    %12 = arith.xori %8, %11 : vector<16x256xi1>
    %13 = arith.andi %12, %6 : vector<16x256xi1>
    %14 = vector.broadcast %2 : i32 to vector<16x256xi32>
    %15 = arith.addi %4, %14 : vector<16x256xi32>
    %16 = arith.select %13, %15, %4 : vector<16x256xi1>, vector<16x256xi32>
    %c15_i32 = arith.constant 15 : i32
    %17 = vector.broadcast %c15_i32 : i32 to vector<16x256xi32>
    %18 = arith.cmpi ne, %16, %17 : vector<16x256xi32>
    %19 = arith.extui %18 : vector<16x256xi1> to vector<16x256xi32>
    %20 = arith.sitofp %19 : vector<16x256xi32> to vector<16x256xf32>
    %c0_i32_3 = arith.constant 0 : i32
    %21 = vector.broadcast %c0_i32_3 : i32 to vector<16x256xi32>
    %22 = arith.cmpi ne, %16, %21 : vector<16x256xi32>
    %23 = arith.extui %22 : vector<16x256xi1> to vector<16x256xi32>
    %24 = arith.sitofp %23 : vector<16x256xi32> to vector<16x256xf32>
    %cst = arith.constant 0.000000e+00 : f32
    %25 = vector.broadcast %cst : f32 to vector<48x32xf32>
    %c0 = arith.constant 0 : index
    %c96 = arith.constant 96 : index
    %26 = vector.load %arg4[%c0, %c96] : memref<48x512xf32, #tpu.memory_space<vmem>>, vector<48x32xf32>
    tpu.vector_store %arg4[%c0, %c96], %25 {strides = array<i32>} : memref<48x512xf32, #tpu.memory_space<vmem>>, vector<48x32xf32>,
    %c0_4 = arith.constant 0 : index
    %c384 = arith.constant 384 : index
    %27 = vector.load %arg4[%c0_4, %c384] : memref<48x512xf32, #tpu.memory_space<vmem>>, vector<48x32xf32>
    tpu.vector_store %arg4[%c0_4, %c384], %25 {strides = array<i32>} : memref<48x512xf32, #tpu.memory_space<vmem>>, vector<48x32xf32>,
    %c0_5 = arith.constant 0 : index
    %c0_6 = arith.constant 0 : index
    %c0_7 = arith.constant 0 : index
    %28 = vector.load %arg1[%c0_5, %c0_6, %c0_7] : memref<1x6x256xf32, #tpu.memory_space<vmem>>, vector<1x6x256xf32>
    %29 = vector.shape_cast %28 : vector<1x6x256xf32> to vector<6x256xf32>
    %30 = vector.extract_strided_slice %29 {offsets = [0, 0], sizes = [2, 256], strides = [1, 1]} : vector<6x256xf32> to vector<2x256xf32>
    %31 = vector.extract_strided_slice %29 {offsets = [2, 0], sizes = [4, 256], strides = [1, 1]} : vector<6x256xf32> to vector<4x256xf32>
    %c104 = arith.constant 104 : index
    %c0_8 = arith.constant 0 : index
    %32 = vector.load %arg2[%c104, %c0_8] : memref<128x144xbf16, #tpu.memory_space<vmem>>, vector<8x2xbf16>
    %33 = arith.truncf %30 : vector<2x256xf32> to vector<2x256xbf16>
    %cst_9 = arith.constant dense<0.000000e+00> : vector<8x256xf32>
    %34 = tpu.matmul %32, %33, %cst_9 {dimension_numbers = #tpu.dot_dimension_numbers<[1], [0], [0], [1], [0, 0, 1, 1], [], []>} : vector<8x2xbf16>, vector<2x256xbf16>, vector<8x256xf32> -> vector<8x256xf32>
    %c112 = arith.constant 112 : index
    %c0_10 = arith.constant 0 : index
    %35 = vector.load %arg2[%c112, %c0_10] : memref<128x144xbf16, #tpu.memory_space<vmem>>, vector<8x4xbf16>
    %36 = arith.truncf %31 : vector<4x256xf32> to vector<4x256xbf16>
    %cst_11 = arith.constant dense<0.000000e+00> : vector<8x256xf32>
    %37 = tpu.matmul %35, %36, %cst_11 {dimension_numbers = #tpu.dot_dimension_numbers<[1], [0], [0], [1], [0, 0, 1, 1], [], []>} : vector<8x4xbf16>, vector<4x256xbf16>, vector<8x256xf32> -> vector<8x256xf32>
    %38 = arith.negf %37 : vector<8x256xf32>
    %39 = math.exp %38 : vector<8x256xf32>
    %cst_12 = arith.constant 1.000000e+00 : f32
    %40 = vector.broadcast %cst_12 : f32 to vector<8x256xf32>
    %41 = arith.addf %40, %39 : vector<8x256xf32>
    %42 = arith.divf %40, %41 : vector<8x256xf32>
    %c120 = arith.constant 120 : index
    %c0_13 = arith.constant 0 : index
    %43 = vector.load %arg2[%c120, %c0_13] : memref<128x144xbf16, #tpu.memory_space<vmem>>, vector<8x8xbf16>
    %44 = arith.truncf %42 : vector<8x256xf32> to vector<8x256xbf16>
    %cst_14 = arith.constant dense<0.000000e+00> : vector<8x256xf32>
    %45 = tpu.matmul %43, %44, %cst_14 {dimension_numbers = #tpu.dot_dimension_numbers<[1], [0], [0], [1], [0, 0, 1, 1], [], []>} : vector<8x8xbf16>, vector<8x256xbf16>, vector<8x256xf32> -> vector<8x256xf32>
    %46 = arith.negf %45 : vector<8x256xf32>
    %47 = math.exp %46 : vector<8x256xf32>
    %cst_15 = arith.constant 1.000000e+00 : f32
    %48 = vector.broadcast %cst_15 : f32 to vector<8x256xf32>
    %49 = arith.addf %48, %47 : vector<8x256xf32>
    %50 = arith.divf %48, %49 : vector<8x256xf32>
    %51 = arith.mulf %50, %50 : vector<8x256xf32>
    %52 = arith.mulf %34, %50 : vector<8x256xf32>
    %c0_16 = arith.constant 0 : index
    %c128 = arith.constant 128 : index
    %53 = vector.load %arg4[%c0_16, %c128] : memref<48x512xf32, #tpu.memory_space<vmem>>, vector<8x256xf32>
    tpu.vector_store %arg4[%c0_16, %c128], %52 {strides = array<i32>} : memref<48x512xf32, #tpu.memory_space<vmem>>, vector<8x256xf32>,
    %54 = vector.extract_strided_slice %20 {offsets = [0, 0], sizes = [8, 256], strides = [1, 1]} : vector<16x256xf32> to vector<8x256xf32>
    %55 = arith.mulf %52, %54 : vector<8x256xf32>
    %c16 = arith.constant 16 : index
    %c128_17 = arith.constant 128 : index
    %56 = vector.load %arg4[%c16, %c128_17] : memref<48x512xf32, #tpu.memory_space<vmem>>, vector<8x256xf32>
    tpu.vector_store %arg4[%c16, %c128_17], %55 {strides = array<i32>} : memref<48x512xf32, #tpu.memory_space<vmem>>, vector<8x256xf32>,
    %57 = vector.extract_strided_slice %24 {offsets = [0, 0], sizes = [8, 256], strides = [1, 1]} : vector<16x256xf32> to vector<8x256xf32>
    %58 = arith.mulf %52, %57 : vector<8x256xf32>
    %c32 = arith.constant 32 : index
    %c128_18 = arith.constant 128 : index
    %59 = vector.load %arg4[%c32, %c128_18] : memref<48x512xf32, #tpu.memory_space<vmem>>, vector<8x256xf32>
    tpu.vector_store %arg4[%c32, %c128_18], %58 {strides = array<i32>} : memref<48x512xf32, #tpu.memory_space<vmem>>, vector<8x256xf32>,
    %c16_19 = arith.constant 16 : index
    %c111 = arith.constant 111 : index
    %60 = vector.load %arg4[%c16_19, %c111] : memref<48x512xf32, #tpu.memory_space<vmem>>, vector<8x256xf32>
    %61 = arith.truncf %60 : vector<8x256xf32> to vector<8x256xbf16>
    %c0_20 = arith.constant 0 : index
    %c0_21 = arith.constant 0 : index
    %62 = vector.load %arg5[%c0_20, %c0_21] : memref<144x256xbf16, #tpu.memory_space<vmem>>, vector<8x256xbf16>
    tpu.vector_store %arg5[%c0_20, %c0_21], %61 {strides = array<i32>} : memref<144x256xbf16, #tpu.memory_space<vmem>>, vector<8x256xbf16>,
    %c0_22 = arith.constant 0 : index
    %c112_23 = arith.constant 112 : index
    %63 = vector.load %arg4[%c0_22, %c112_23] : memref<48x512xf32, #tpu.memory_space<vmem>>, vector<8x256xf32>
    %64 = arith.truncf %63 : vector<8x256xf32> to vector<8x256xbf16>
    %c8 = arith.constant 8 : index
    %c0_24 = arith.constant 0 : index
    %65 = vector.load %arg5[%c8, %c0_24] : memref<144x256xbf16, #tpu.memory_space<vmem>>, vector<8x256xbf16>
    tpu.vector_store %arg5[%c8, %c0_24], %64 {strides = array<i32>} : memref<144x256xbf16, #tpu.memory_space<vmem>>, vector<8x256xbf16>,
    %c32_25 = arith.constant 32 : index
    %c113 = arith.constant 113 : index
    %66 = vector.load %arg4[%c32_25, %c113] : memref<48x512xf32, #tpu.memory_space<vmem>>, vector<8x256xf32>
    %67 = arith.truncf %66 : vector<8x256xf32> to vector<8x256xbf16>
    %c16_26 = arith.constant 16 : index
    %c0_27 = arith.constant 0 : index
    %68 = vector.load %arg5[%c16_26, %c0_27] : memref<144x256xbf16, #tpu.memory_space<vmem>>, vector<8x256xbf16>
    tpu.vector_store %arg5[%c16_26, %c0_27], %67 {strides = array<i32>} : memref<144x256xbf16, #tpu.memory_space<vmem>>, vector<8x256xbf16>,
    %c16_28 = arith.constant 16 : index
    %c127 = arith.constant 127 : index
    %69 = vector.load %arg4[%c16_28, %c127] : memref<48x512xf32, #tpu.memory_space<vmem>>, vector<8x256xf32>
    %70 = arith.truncf %69 : vector<8x256xf32> to vector<8x256xbf16>
    %c24 = arith.constant 24 : index
    %c0_29 = arith.constant 0 : index
    %71 = vector.load %arg5[%c24, %c0_29] : memref<144x256xbf16, #tpu.memory_space<vmem>>, vector<8x256xbf16>
    tpu.vector_store %arg5[%c24, %c0_29], %70 {strides = array<i32>} : memref<144x256xbf16, #tpu.memory_space<vmem>>, vector<8x256xbf16>,
    %c0_30 = arith.constant 0 : index
    %c128_31 = arith.constant 128 : index
    %72 = vector.load %arg4[%c0_30, %c128_31] : memref<48x512xf32, #tpu.memory_space<vmem>>, vector<8x256xf32>
    %73 = arith.truncf %72 : vector<8x256xf32> to vector<8x256xbf16>
    %c32_32 = arith.constant 32 : index
    %c0_33 = arith.constant 0 : index
    %74 = vector.load %arg5[%c32_32, %c0_33] : memref<144x256xbf16, #tpu.memory_space<vmem>>, vector<8x256xbf16>
    tpu.vector_store %arg5[%c32_32, %c0_33], %73 {strides = array<i32>} : memref<144x256xbf16, #tpu.memory_space<vmem>>, vector<8x256xbf16>,
    %c32_34 = arith.constant 32 : index
    %c129 = arith.constant 129 : index
    %75 = vector.load %arg4[%c32_34, %c129] : memref<48x512xf32, #tpu.memory_space<vmem>>, vector<8x256xf32>
    %76 = arith.truncf %75 : vector<8x256xf32> to vector<8x256xbf16>
    %c40 = arith.constant 40 : index
    %c0_35 = arith.constant 0 : index
    %77 = vector.load %arg5[%c40, %c0_35] : memref<144x256xbf16, #tpu.memory_space<vmem>>, vector<8x256xbf16>
    tpu.vector_store %arg5[%c40, %c0_35], %76 {strides = array<i32>} : memref<144x256xbf16, #tpu.memory_space<vmem>>, vector<8x256xbf16>,
    %c16_36 = arith.constant 16 : index
    %c143 = arith.constant 143 : index
    %78 = vector.load %arg4[%c16_36, %c143] : memref<48x512xf32, #tpu.memory_space<vmem>>, vector<8x256xf32>
    %79 = arith.truncf %78 : vector<8x256xf32> to vector<8x256xbf16>
    %c48 = arith.constant 48 : index
    %c0_37 = arith.constant 0 : index
    %80 = vector.load %arg5[%c48, %c0_37] : memref<144x256xbf16, #tpu.memory_space<vmem>>, vector<8x256xbf16>
    tpu.vector_store %arg5[%c48, %c0_37], %79 {strides = array<i32>} : memref<144x256xbf16, #tpu.memory_space<vmem>>, vector<8x256xbf16>,
    %c0_38 = arith.constant 0 : index
    %c144 = arith.constant 144 : index
    %81 = vector.load %arg4[%c0_38, %c144] : memref<48x512xf32, #tpu.memory_space<vmem>>, vector<8x256xf32>
    %82 = arith.truncf %81 : vector<8x256xf32> to vector<8x256xbf16>
    %c56 = arith.constant 56 : index
    %c0_39 = arith.constant 0 : index
    %83 = vector.load %arg5[%c56, %c0_39] : memref<144x256xbf16, #tpu.memory_space<vmem>>, vector<8x256xbf16>
    tpu.vector_store %arg5[%c56, %c0_39], %82 {strides = array<i32>} : memref<144x256xbf16, #tpu.memory_space<vmem>>, vector<8x256xbf16>,
    %c32_40 = arith.constant 32 : index
    %c145 = arith.constant 145 : index
    %84 = vector.load %arg4[%c32_40, %c145] : memref<48x512xf32, #tpu.memory_space<vmem>>, vector<8x256xf32>
    %85 = arith.truncf %84 : vector<8x256xf32> to vector<8x256xbf16>
    %c64 = arith.constant 64 : index
    %c0_41 = arith.constant 0 : index
    %86 = vector.load %arg5[%c64, %c0_41] : memref<144x256xbf16, #tpu.memory_space<vmem>>, vector<8x256xbf16>
    tpu.vector_store %arg5[%c64, %c0_41], %85 {strides = array<i32>} : memref<144x256xbf16, #tpu.memory_space<vmem>>, vector<8x256xbf16>,
    %c0_42 = arith.constant 0 : index
    %c0_43 = arith.constant 0 : index
    %87 = vector.load %arg2[%c0_42, %c0_43] : memref<128x144xbf16, #tpu.memory_space<vmem>>, vector<16x72xbf16>
    %c0_44 = arith.constant 0 : index
    %c0_45 = arith.constant 0 : index
    %88 = vector.load %arg5[%c0_44, %c0_45] : memref<144x256xbf16, #tpu.memory_space<vmem>>, vector<72x256xbf16>
    %cst_46 = arith.constant dense<0.000000e+00> : vector<16x256xf32>
    %89 = tpu.matmul %87, %88, %cst_46 {dimension_numbers = #tpu.dot_dimension_numbers<[1], [0], [0], [1], [0, 0, 1, 1], [], []>} : vector<16x72xbf16>, vector<72x256xbf16>, vector<16x256xf32> -> vector<16x256xf32>
    %cst_47 = arith.constant 0.000000e+00 : f32
    %90 = vector.broadcast %cst_47 : f32 to vector<16x256xf32>
    %91 = arith.maximumf %89, %90 : vector<16x256xf32>
    %c0_48 = arith.constant 0 : index
    %c128_49 = arith.constant 128 : index
    %92 = vector.load %arg4[%c0_48, %c128_49] : memref<48x512xf32, #tpu.memory_space<vmem>>, vector<16x256xf32>
    tpu.vector_store %arg4[%c0_48, %c128_49], %91 {strides = array<i32>} : memref<48x512xf32, #tpu.memory_space<vmem>>, vector<16x256xf32>,
    %93 = arith.mulf %91, %20 : vector<16x256xf32>
    %c16_50 = arith.constant 16 : index
    %c128_51 = arith.constant 128 : index
    %94 = vector.load %arg4[%c16_50, %c128_51] : memref<48x512xf32, #tpu.memory_space<vmem>>, vector<16x256xf32>
    tpu.vector_store %arg4[%c16_50, %c128_51], %93 {strides = array<i32>} : memref<48x512xf32, #tpu.memory_space<vmem>>, vector<16x256xf32>,
    %95 = arith.mulf %91, %24 : vector<16x256xf32>
    %c32_52 = arith.constant 32 : index
    %c128_53 = arith.constant 128 : index
    %96 = vector.load %arg4[%c32_52, %c128_53] : memref<48x512xf32, #tpu.memory_space<vmem>>, vector<16x256xf32>
    tpu.vector_store %arg4[%c32_52, %c128_53], %95 {strides = array<i32>} : memref<48x512xf32, #tpu.memory_space<vmem>>, vector<16x256xf32>,
    %c16_54 = arith.constant 16 : index
    %c111_55 = arith.constant 111 : index
    %97 = vector.load %arg4[%c16_54, %c111_55] : memref<48x512xf32, #tpu.memory_space<vmem>>, vector<16x256xf32>
    %98 = arith.truncf %97 : vector<16x256xf32> to vector<16x256xbf16>
    %c0_56 = arith.constant 0 : index
    %c0_57 = arith.constant 0 : index
    %99 = vector.load %arg5[%c0_56, %c0_57] : memref<144x256xbf16, #tpu.memory_space<vmem>>, vector<16x256xbf16>
    tpu.vector_store %arg5[%c0_56, %c0_57], %98 {strides = array<i32>} : memref<144x256xbf16, #tpu.memory_space<vmem>>, vector<16x256xbf16>,
    %c0_58 = arith.constant 0 : index
    %c112_59 = arith.constant 112 : index
    %100 = vector.load %arg4[%c0_58, %c112_59] : memref<48x512xf32, #tpu.memory_space<vmem>>, vector<16x256xf32>
    %101 = arith.truncf %100 : vector<16x256xf32> to vector<16x256xbf16>
    %c16_60 = arith.constant 16 : index
    %c0_61 = arith.constant 0 : index
    %102 = vector.load %arg5[%c16_60, %c0_61] : memref<144x256xbf16, #tpu.memory_space<vmem>>, vector<16x256xbf16>
    tpu.vector_store %arg5[%c16_60, %c0_61], %101 {strides = array<i32>} : memref<144x256xbf16, #tpu.memory_space<vmem>>, vector<16x256xbf16>,
    %c32_62 = arith.constant 32 : index
    %c113_63 = arith.constant 113 : index
    %103 = vector.load %arg4[%c32_62, %c113_63] : memref<48x512xf32, #tpu.memory_space<vmem>>, vector<16x256xf32>
    %104 = arith.truncf %103 : vector<16x256xf32> to vector<16x256xbf16>
    %c32_64 = arith.constant 32 : index
    %c0_65 = arith.constant 0 : index
    %105 = vector.load %arg5[%c32_64, %c0_65] : memref<144x256xbf16, #tpu.memory_space<vmem>>, vector<16x256xbf16>
    tpu.vector_store %arg5[%c32_64, %c0_65], %104 {strides = array<i32>} : memref<144x256xbf16, #tpu.memory_space<vmem>>, vector<16x256xbf16>,
    %c16_66 = arith.constant 16 : index
    %c127_67 = arith.constant 127 : index
    %106 = vector.load %arg4[%c16_66, %c127_67] : memref<48x512xf32, #tpu.memory_space<vmem>>, vector<16x256xf32>
    %107 = arith.truncf %106 : vector<16x256xf32> to vector<16x256xbf16>
    %c48_68 = arith.constant 48 : index
    %c0_69 = arith.constant 0 : index
    %108 = vector.load %arg5[%c48_68, %c0_69] : memref<144x256xbf16, #tpu.memory_space<vmem>>, vector<16x256xbf16>
    tpu.vector_store %arg5[%c48_68, %c0_69], %107 {strides = array<i32>} : memref<144x256xbf16, #tpu.memory_space<vmem>>, vector<16x256xbf16>,
    %c0_70 = arith.constant 0 : index
    %c128_71 = arith.constant 128 : index
    %109 = vector.load %arg4[%c0_70, %c128_71] : memref<48x512xf32, #tpu.memory_space<vmem>>, vector<16x256xf32>
    %110 = arith.truncf %109 : vector<16x256xf32> to vector<16x256xbf16>
    %c64_72 = arith.constant 64 : index
    %c0_73 = arith.constant 0 : index
    %111 = vector.load %arg5[%c64_72, %c0_73] : memref<144x256xbf16, #tpu.memory_space<vmem>>, vector<16x256xbf16>
    tpu.vector_store %arg5[%c64_72, %c0_73], %110 {strides = array<i32>} : memref<144x256xbf16, #tpu.memory_space<vmem>>, vector<16x256xbf16>,
    %c32_74 = arith.constant 32 : index
    %c129_75 = arith.constant 129 : index
    %112 = vector.load %arg4[%c32_74, %c129_75] : memref<48x512xf32, #tpu.memory_space<vmem>>, vector<16x256xf32>
    %113 = arith.truncf %112 : vector<16x256xf32> to vector<16x256xbf16>
    %c80 = arith.constant 80 : index
    %c0_76 = arith.constant 0 : index
    %114 = vector.load %arg5[%c80, %c0_76] : memref<144x256xbf16, #tpu.memory_space<vmem>>, vector<16x256xbf16>
    tpu.vector_store %arg5[%c80, %c0_76], %113 {strides = array<i32>} : memref<144x256xbf16, #tpu.memory_space<vmem>>, vector<16x256xbf16>,
    %c16_77 = arith.constant 16 : index
    %c143_78 = arith.constant 143 : index
    %115 = vector.load %arg4[%c16_77, %c143_78] : memref<48x512xf32, #tpu.memory_space<vmem>>, vector<16x256xf32>
    %116 = arith.truncf %115 : vector<16x256xf32> to vector<16x256xbf16>
    %c96_79 = arith.constant 96 : index
    %c0_80 = arith.constant 0 : index
    %117 = vector.load %arg5[%c96_79, %c0_80] : memref<144x256xbf16, #tpu.memory_space<vmem>>, vector<16x256xbf16>
    tpu.vector_store %arg5[%c96_79, %c0_80], %116 {strides = array<i32>} : memref<144x256xbf16, #tpu.memory_space<vmem>>, vector<16x256xbf16>,
    %c0_81 = arith.constant 0 : index
    %c144_82 = arith.constant 144 : index
    %118 = vector.load %arg4[%c0_81, %c144_82] : memref<48x512xf32, #tpu.memory_space<vmem>>, vector<16x256xf32>
    %119 = arith.truncf %118 : vector<16x256xf32> to vector<16x256xbf16>
    %c112_83 = arith.constant 112 : index
    %c0_84 = arith.constant 0 : index
    %120 = vector.load %arg5[%c112_83, %c0_84] : memref<144x256xbf16, #tpu.memory_space<vmem>>, vector<16x256xbf16>
    tpu.vector_store %arg5[%c112_83, %c0_84], %119 {strides = array<i32>} : memref<144x256xbf16, #tpu.memory_space<vmem>>, vector<16x256xbf16>,
    %c32_85 = arith.constant 32 : index
    %c145_86 = arith.constant 145 : index
    %121 = vector.load %arg4[%c32_85, %c145_86] : memref<48x512xf32, #tpu.memory_space<vmem>>, vector<16x256xf32>
    %122 = arith.truncf %121 : vector<16x256xf32> to vector<16x256xbf16>
    %c128_87 = arith.constant 128 : index
    %c0_88 = arith.constant 0 : index
    %123 = vector.load %arg5[%c128_87, %c0_88] : memref<144x256xbf16, #tpu.memory_space<vmem>>, vector<16x256xbf16>
    tpu.vector_store %arg5[%c128_87, %c0_88], %122 {strides = array<i32>} : memref<144x256xbf16, #tpu.memory_space<vmem>>, vector<16x256xbf16>,
    %c80_89 = arith.constant 80 : index
    %c0_90 = arith.constant 0 : index
    %124 = vector.load %arg2[%c80_89, %c0_90] : memref<128x144xbf16, #tpu.memory_space<vmem>>, vector<8x144xbf16>
    %c0_91 = arith.constant 0 : index
    %c0_92 = arith.constant 0 : index
    %125 = vector.load %arg5[%c0_91, %c0_92] : memref<144x256xbf16, #tpu.memory_space<vmem>>, vector<144x256xbf16>
    %cst_93 = arith.constant dense<0.000000e+00> : vector<8x256xf32>
    %126 = tpu.matmul %124, %125, %cst_93 {dimension_numbers = #tpu.dot_dimension_numbers<[1], [0], [0], [1], [0, 0, 1, 1], [], []>} : vector<8x144xbf16>, vector<144x256xbf16>, vector<8x256xf32> -> vector<8x256xf32>
    %127 = arith.mulf %126, %51 : vector<8x256xf32>
    %c0_94 = arith.constant 0 : index
    %c128_95 = arith.constant 128 : index
    %128 = vector.load %arg4[%c0_94, %c128_95] : memref<48x512xf32, #tpu.memory_space<vmem>>, vector<8x256xf32>
    tpu.vector_store %arg4[%c0_94, %c128_95], %127 {strides = array<i32>} : memref<48x512xf32, #tpu.memory_space<vmem>>, vector<8x256xf32>,
    %129 = vector.extract_strided_slice %20 {offsets = [0, 0], sizes = [8, 256], strides = [1, 1]} : vector<16x256xf32> to vector<8x256xf32>
    %130 = arith.mulf %127, %129 : vector<8x256xf32>
    %c16_96 = arith.constant 16 : index
    %c128_97 = arith.constant 128 : index
    %131 = vector.load %arg4[%c16_96, %c128_97] : memref<48x512xf32, #tpu.memory_space<vmem>>, vector<8x256xf32>
    tpu.vector_store %arg4[%c16_96, %c128_97], %130 {strides = array<i32>} : memref<48x512xf32, #tpu.memory_space<vmem>>, vector<8x256xf32>,
    %132 = vector.extract_strided_slice %24 {offsets = [0, 0], sizes = [8, 256], strides = [1, 1]} : vector<16x256xf32> to vector<8x256xf32>
    %133 = arith.mulf %127, %132 : vector<8x256xf32>
    %c32_98 = arith.constant 32 : index
    %c128_99 = arith.constant 128 : index
    %134 = vector.load %arg4[%c32_98, %c128_99] : memref<48x512xf32, #tpu.memory_space<vmem>>, vector<8x256xf32>
    tpu.vector_store %arg4[%c32_98, %c128_99], %133 {strides = array<i32>} : memref<48x512xf32, #tpu.memory_space<vmem>>, vector<8x256xf32>,
    %c16_100 = arith.constant 16 : index
    %c111_101 = arith.constant 111 : index
    %135 = vector.load %arg4[%c16_100, %c111_101] : memref<48x512xf32, #tpu.memory_space<vmem>>, vector<8x256xf32>
    %136 = arith.truncf %135 : vector<8x256xf32> to vector<8x256xbf16>
    %c0_102 = arith.constant 0 : index
    %c0_103 = arith.constant 0 : index
    %137 = vector.load %arg5[%c0_102, %c0_103] : memref<144x256xbf16, #tpu.memory_space<vmem>>, vector<8x256xbf16>
    tpu.vector_store %arg5[%c0_102, %c0_103], %136 {strides = array<i32>} : memref<144x256xbf16, #tpu.memory_space<vmem>>, vector<8x256xbf16>,
    %c0_104 = arith.constant 0 : index
    %c112_105 = arith.constant 112 : index
    %138 = vector.load %arg4[%c0_104, %c112_105] : memref<48x512xf32, #tpu.memory_space<vmem>>, vector<8x256xf32>
    %139 = arith.truncf %138 : vector<8x256xf32> to vector<8x256xbf16>
    %c8_106 = arith.constant 8 : index
    %c0_107 = arith.constant 0 : index
    %140 = vector.load %arg5[%c8_106, %c0_107] : memref<144x256xbf16, #tpu.memory_space<vmem>>, vector<8x256xbf16>
    tpu.vector_store %arg5[%c8_106, %c0_107], %139 {strides = array<i32>} : memref<144x256xbf16, #tpu.memory_space<vmem>>, vector<8x256xbf16>,
    %c32_108 = arith.constant 32 : index
    %c113_109 = arith.constant 113 : index
    %141 = vector.load %arg4[%c32_108, %c113_109] : memref<48x512xf32, #tpu.memory_space<vmem>>, vector<8x256xf32>
    %142 = arith.truncf %141 : vector<8x256xf32> to vector<8x256xbf16>
    %c16_110 = arith.constant 16 : index
    %c0_111 = arith.constant 0 : index
    %143 = vector.load %arg5[%c16_110, %c0_111] : memref<144x256xbf16, #tpu.memory_space<vmem>>, vector<8x256xbf16>
    tpu.vector_store %arg5[%c16_110, %c0_111], %142 {strides = array<i32>} : memref<144x256xbf16, #tpu.memory_space<vmem>>, vector<8x256xbf16>,
    %c16_112 = arith.constant 16 : index
    %c127_113 = arith.constant 127 : index
    %144 = vector.load %arg4[%c16_112, %c127_113] : memref<48x512xf32, #tpu.memory_space<vmem>>, vector<8x256xf32>
    %145 = arith.truncf %144 : vector<8x256xf32> to vector<8x256xbf16>
    %c24_114 = arith.constant 24 : index
    %c0_115 = arith.constant 0 : index
    %146 = vector.load %arg5[%c24_114, %c0_115] : memref<144x256xbf16, #tpu.memory_space<vmem>>, vector<8x256xbf16>
    tpu.vector_store %arg5[%c24_114, %c0_115], %145 {strides = array<i32>} : memref<144x256xbf16, #tpu.memory_space<vmem>>, vector<8x256xbf16>,
    %c0_116 = arith.constant 0 : index
    %c128_117 = arith.constant 128 : index
    %147 = vector.load %arg4[%c0_116, %c128_117] : memref<48x512xf32, #tpu.memory_space<vmem>>, vector<8x256xf32>
    %148 = arith.truncf %147 : vector<8x256xf32> to vector<8x256xbf16>
    %c32_118 = arith.constant 32 : index
    %c0_119 = arith.constant 0 : index
    %149 = vector.load %arg5[%c32_118, %c0_119] : memref<144x256xbf16, #tpu.memory_space<vmem>>, vector<8x256xbf16>
    tpu.vector_store %arg5[%c32_118, %c0_119], %148 {strides = array<i32>} : memref<144x256xbf16, #tpu.memory_space<vmem>>, vector<8x256xbf16>,
    %c32_120 = arith.constant 32 : index
    %c129_121 = arith.constant 129 : index
    %150 = vector.load %arg4[%c32_120, %c129_121] : memref<48x512xf32, #tpu.memory_space<vmem>>, vector<8x256xf32>
    %151 = arith.truncf %150 : vector<8x256xf32> to vector<8x256xbf16>
    %c40_122 = arith.constant 40 : index
    %c0_123 = arith.constant 0 : index
    %152 = vector.load %arg5[%c40_122, %c0_123] : memref<144x256xbf16, #tpu.memory_space<vmem>>, vector<8x256xbf16>
    tpu.vector_store %arg5[%c40_122, %c0_123], %151 {strides = array<i32>} : memref<144x256xbf16, #tpu.memory_space<vmem>>, vector<8x256xbf16>,
    %c16_124 = arith.constant 16 : index
    %c143_125 = arith.constant 143 : index
    %153 = vector.load %arg4[%c16_124, %c143_125] : memref<48x512xf32, #tpu.memory_space<vmem>>, vector<8x256xf32>
    %154 = arith.truncf %153 : vector<8x256xf32> to vector<8x256xbf16>
    %c48_126 = arith.constant 48 : index
    %c0_127 = arith.constant 0 : index
    %155 = vector.load %arg5[%c48_126, %c0_127] : memref<144x256xbf16, #tpu.memory_space<vmem>>, vector<8x256xbf16>
    tpu.vector_store %arg5[%c48_126, %c0_127], %154 {strides = array<i32>} : memref<144x256xbf16, #tpu.memory_space<vmem>>, vector<8x256xbf16>,
    %c0_128 = arith.constant 0 : index
    %c144_129 = arith.constant 144 : index
    %156 = vector.load %arg4[%c0_128, %c144_129] : memref<48x512xf32, #tpu.memory_space<vmem>>, vector<8x256xf32>
    %157 = arith.truncf %156 : vector<8x256xf32> to vector<8x256xbf16>
    %c56_130 = arith.constant 56 : index
    %c0_131 = arith.constant 0 : index
    %158 = vector.load %arg5[%c56_130, %c0_131] : memref<144x256xbf16, #tpu.memory_space<vmem>>, vector<8x256xbf16>
    tpu.vector_store %arg5[%c56_130, %c0_131], %157 {strides = array<i32>} : memref<144x256xbf16, #tpu.memory_space<vmem>>, vector<8x256xbf16>,
    %c32_132 = arith.constant 32 : index
    %c145_133 = arith.constant 145 : index
    %159 = vector.load %arg4[%c32_132, %c145_133] : memref<48x512xf32, #tpu.memory_space<vmem>>, vector<8x256xf32>
    %160 = arith.truncf %159 : vector<8x256xf32> to vector<8x256xbf16>
    %c64_134 = arith.constant 64 : index
    %c0_135 = arith.constant 0 : index
    %161 = vector.load %arg5[%c64_134, %c0_135] : memref<144x256xbf16, #tpu.memory_space<vmem>>, vector<8x256xbf16>
    tpu.vector_store %arg5[%c64_134, %c0_135], %160 {strides = array<i32>} : memref<144x256xbf16, #tpu.memory_space<vmem>>, vector<8x256xbf16>,
    %c16_136 = arith.constant 16 : index
    %c0_137 = arith.constant 0 : index
    %162 = vector.load %arg2[%c16_136, %c0_137] : memref<128x144xbf16, #tpu.memory_space<vmem>>, vector<16x72xbf16>
    %c0_138 = arith.constant 0 : index
    %c0_139 = arith.constant 0 : index
    %163 = vector.load %arg5[%c0_138, %c0_139] : memref<144x256xbf16, #tpu.memory_space<vmem>>, vector<72x256xbf16>
    %cst_140 = arith.constant dense<0.000000e+00> : vector<16x256xf32>
    %164 = tpu.matmul %162, %163, %cst_140 {dimension_numbers = #tpu.dot_dimension_numbers<[1], [0], [0], [1], [0, 0, 1, 1], [], []>} : vector<16x72xbf16>, vector<72x256xbf16>, vector<16x256xf32> -> vector<16x256xf32>
    %165 = arith.subf %91, %164 : vector<16x256xf32>
    %166 = arith.addf %165, %89 : vector<16x256xf32>
    %cst_141 = arith.constant 0.000000e+00 : f32
    %167 = vector.broadcast %cst_141 : f32 to vector<16x256xf32>
    %168 = arith.maximumf %166, %167 : vector<16x256xf32>
    %c0_142 = arith.constant 0 : index
    %c128_143 = arith.constant 128 : index
    %169 = vector.load %arg4[%c0_142, %c128_143] : memref<48x512xf32, #tpu.memory_space<vmem>>, vector<16x256xf32>
    tpu.vector_store %arg4[%c0_142, %c128_143], %168 {strides = array<i32>} : memref<48x512xf32, #tpu.memory_space<vmem>>, vector<16x256xf32>,
    %170 = arith.mulf %168, %20 : vector<16x256xf32>
    %c16_144 = arith.constant 16 : index
    %c128_145 = arith.constant 128 : index
    %171 = vector.load %arg4[%c16_144, %c128_145] : memref<48x512xf32, #tpu.memory_space<vmem>>, vector<16x256xf32>
    tpu.vector_store %arg4[%c16_144, %c128_145], %170 {strides = array<i32>} : memref<48x512xf32, #tpu.memory_space<vmem>>, vector<16x256xf32>,
    %172 = arith.mulf %168, %24 : vector<16x256xf32>
    %c32_146 = arith.constant 32 : index
    %c128_147 = arith.constant 128 : index
    %173 = vector.load %arg4[%c32_146, %c128_147] : memref<48x512xf32, #tpu.memory_space<vmem>>, vector<16x256xf32>
    tpu.vector_store %arg4[%c32_146, %c128_147], %172 {strides = array<i32>} : memref<48x512xf32, #tpu.memory_space<vmem>>, vector<16x256xf32>,
    %c16_148 = arith.constant 16 : index
    %c111_149 = arith.constant 111 : index
    %174 = vector.load %arg4[%c16_148, %c111_149] : memref<48x512xf32, #tpu.memory_space<vmem>>, vector<16x256xf32>
    %175 = arith.truncf %174 : vector<16x256xf32> to vector<16x256xbf16>
    %c0_150 = arith.constant 0 : index
    %c0_151 = arith.constant 0 : index
    %176 = vector.load %arg5[%c0_150, %c0_151] : memref<144x256xbf16, #tpu.memory_space<vmem>>, vector<16x256xbf16>
    tpu.vector_store %arg5[%c0_150, %c0_151], %175 {strides = array<i32>} : memref<144x256xbf16, #tpu.memory_space<vmem>>, vector<16x256xbf16>,
    %c0_152 = arith.constant 0 : index
    %c112_153 = arith.constant 112 : index
    %177 = vector.load %arg4[%c0_152, %c112_153] : memref<48x512xf32, #tpu.memory_space<vmem>>, vector<16x256xf32>
    %178 = arith.truncf %177 : vector<16x256xf32> to vector<16x256xbf16>
    %c16_154 = arith.constant 16 : index
    %c0_155 = arith.constant 0 : index
    %179 = vector.load %arg5[%c16_154, %c0_155] : memref<144x256xbf16, #tpu.memory_space<vmem>>, vector<16x256xbf16>
    tpu.vector_store %arg5[%c16_154, %c0_155], %178 {strides = array<i32>} : memref<144x256xbf16, #tpu.memory_space<vmem>>, vector<16x256xbf16>,
    %c32_156 = arith.constant 32 : index
    %c113_157 = arith.constant 113 : index
    %180 = vector.load %arg4[%c32_156, %c113_157] : memref<48x512xf32, #tpu.memory_space<vmem>>, vector<16x256xf32>
    %181 = arith.truncf %180 : vector<16x256xf32> to vector<16x256xbf16>
    %c32_158 = arith.constant 32 : index
    %c0_159 = arith.constant 0 : index
    %182 = vector.load %arg5[%c32_158, %c0_159] : memref<144x256xbf16, #tpu.memory_space<vmem>>, vector<16x256xbf16>
    tpu.vector_store %arg5[%c32_158, %c0_159], %181 {strides = array<i32>} : memref<144x256xbf16, #tpu.memory_space<vmem>>, vector<16x256xbf16>,
    %c16_160 = arith.constant 16 : index
    %c127_161 = arith.constant 127 : index
    %183 = vector.load %arg4[%c16_160, %c127_161] : memref<48x512xf32, #tpu.memory_space<vmem>>, vector<16x256xf32>
    %184 = arith.truncf %183 : vector<16x256xf32> to vector<16x256xbf16>
    %c48_162 = arith.constant 48 : index
    %c0_163 = arith.constant 0 : index
    %185 = vector.load %arg5[%c48_162, %c0_163] : memref<144x256xbf16, #tpu.memory_space<vmem>>, vector<16x256xbf16>
    tpu.vector_store %arg5[%c48_162, %c0_163], %184 {strides = array<i32>} : memref<144x256xbf16, #tpu.memory_space<vmem>>, vector<16x256xbf16>,
    %c0_164 = arith.constant 0 : index
    %c128_165 = arith.constant 128 : index
    %186 = vector.load %arg4[%c0_164, %c128_165] : memref<48x512xf32, #tpu.memory_space<vmem>>, vector<16x256xf32>
    %187 = arith.truncf %186 : vector<16x256xf32> to vector<16x256xbf16>
    %c64_166 = arith.constant 64 : index
    %c0_167 = arith.constant 0 : index
    %188 = vector.load %arg5[%c64_166, %c0_167] : memref<144x256xbf16, #tpu.memory_space<vmem>>, vector<16x256xbf16>
    tpu.vector_store %arg5[%c64_166, %c0_167], %187 {strides = array<i32>} : memref<144x256xbf16, #tpu.memory_space<vmem>>, vector<16x256xbf16>,
    %c32_168 = arith.constant 32 : index
    %c129_169 = arith.constant 129 : index
    %189 = vector.load %arg4[%c32_168, %c129_169] : memref<48x512xf32, #tpu.memory_space<vmem>>, vector<16x256xf32>
    %190 = arith.truncf %189 : vector<16x256xf32> to vector<16x256xbf16>
    %c80_170 = arith.constant 80 : index
    %c0_171 = arith.constant 0 : index
    %191 = vector.load %arg5[%c80_170, %c0_171] : memref<144x256xbf16, #tpu.memory_space<vmem>>, vector<16x256xbf16>
    tpu.vector_store %arg5[%c80_170, %c0_171], %190 {strides = array<i32>} : memref<144x256xbf16, #tpu.memory_space<vmem>>, vector<16x256xbf16>,
    %c16_172 = arith.constant 16 : index
    %c143_173 = arith.constant 143 : index
    %192 = vector.load %arg4[%c16_172, %c143_173] : memref<48x512xf32, #tpu.memory_space<vmem>>, vector<16x256xf32>
    %193 = arith.truncf %192 : vector<16x256xf32> to vector<16x256xbf16>
    %c96_174 = arith.constant 96 : index
    %c0_175 = arith.constant 0 : index
    %194 = vector.load %arg5[%c96_174, %c0_175] : memref<144x256xbf16, #tpu.memory_space<vmem>>, vector<16x256xbf16>
    tpu.vector_store %arg5[%c96_174, %c0_175], %193 {strides = array<i32>} : memref<144x256xbf16, #tpu.memory_space<vmem>>, vector<16x256xbf16>,
    %c0_176 = arith.constant 0 : index
    %c144_177 = arith.constant 144 : index
    %195 = vector.load %arg4[%c0_176, %c144_177] : memref<48x512xf32, #tpu.memory_space<vmem>>, vector<16x256xf32>
    %196 = arith.truncf %195 : vector<16x256xf32> to vector<16x256xbf16>
    %c112_178 = arith.constant 112 : index
    %c0_179 = arith.constant 0 : index
    %197 = vector.load %arg5[%c112_178, %c0_179] : memref<144x256xbf16, #tpu.memory_space<vmem>>, vector<16x256xbf16>
    tpu.vector_store %arg5[%c112_178, %c0_179], %196 {strides = array<i32>} : memref<144x256xbf16, #tpu.memory_space<vmem>>, vector<16x256xbf16>,
    %c32_180 = arith.constant 32 : index
    %c145_181 = arith.constant 145 : index
    %198 = vector.load %arg4[%c32_180, %c145_181] : memref<48x512xf32, #tpu.memory_space<vmem>>, vector<16x256xf32>
    %199 = arith.truncf %198 : vector<16x256xf32> to vector<16x256xbf16>
    %c128_182 = arith.constant 128 : index
    %c0_183 = arith.constant 0 : index
    %200 = vector.load %arg5[%c128_182, %c0_183] : memref<144x256xbf16, #tpu.memory_space<vmem>>, vector<16x256xbf16>
    tpu.vector_store %arg5[%c128_182, %c0_183], %199 {strides = array<i32>} : memref<144x256xbf16, #tpu.memory_space<vmem>>, vector<16x256xbf16>,
    %c80_184 = arith.constant 80 : index
    %c0_185 = arith.constant 0 : index
    %201 = vector.load %arg2[%c80_184, %c0_185] : memref<128x144xbf16, #tpu.memory_space<vmem>>, vector<8x144xbf16>
    %c0_186 = arith.constant 0 : index
    %c0_187 = arith.constant 0 : index
    %202 = vector.load %arg5[%c0_186, %c0_187] : memref<144x256xbf16, #tpu.memory_space<vmem>>, vector<144x256xbf16>
    %cst_188 = arith.constant dense<0.000000e+00> : vector<8x256xf32>
    %203 = tpu.matmul %201, %202, %cst_188 {dimension_numbers = #tpu.dot_dimension_numbers<[1], [0], [0], [1], [0, 0, 1, 1], [], []>} : vector<8x144xbf16>, vector<144x256xbf16>, vector<8x256xf32> -> vector<8x256xf32>
    %204 = arith.mulf %203, %51 : vector<8x256xf32>
    %c0_189 = arith.constant 0 : index
    %c128_190 = arith.constant 128 : index
    %205 = vector.load %arg4[%c0_189, %c128_190] : memref<48x512xf32, #tpu.memory_space<vmem>>, vector<8x256xf32>
    tpu.vector_store %arg4[%c0_189, %c128_190], %204 {strides = array<i32>} : memref<48x512xf32, #tpu.memory_space<vmem>>, vector<8x256xf32>,
    %206 = vector.extract_strided_slice %20 {offsets = [0, 0], sizes = [8, 256], strides = [1, 1]} : vector<16x256xf32> to vector<8x256xf32>
    %207 = arith.mulf %204, %206 : vector<8x256xf32>
    %c16_191 = arith.constant 16 : index
    %c128_192 = arith.constant 128 : index
    %208 = vector.load %arg4[%c16_191, %c128_192] : memref<48x512xf32, #tpu.memory_space<vmem>>, vector<8x256xf32>
    tpu.vector_store %arg4[%c16_191, %c128_192], %207 {strides = array<i32>} : memref<48x512xf32, #tpu.memory_space<vmem>>, vector<8x256xf32>,
    %209 = vector.extract_strided_slice %24 {offsets = [0, 0], sizes = [8, 256], strides = [1, 1]} : vector<16x256xf32> to vector<8x256xf32>
    %210 = arith.mulf %204, %209 : vector<8x256xf32>
    %c32_193 = arith.constant 32 : index
    %c128_194 = arith.constant 128 : index
    %211 = vector.load %arg4[%c32_193, %c128_194] : memref<48x512xf32, #tpu.memory_space<vmem>>, vector<8x256xf32>
    tpu.vector_store %arg4[%c32_193, %c128_194], %210 {strides = array<i32>} : memref<48x512xf32, #tpu.memory_space<vmem>>, vector<8x256xf32>,
    %c16_195 = arith.constant 16 : index
    %c111_196 = arith.constant 111 : index
    %212 = vector.load %arg4[%c16_195, %c111_196] : memref<48x512xf32, #tpu.memory_space<vmem>>, vector<8x256xf32>
    %213 = arith.truncf %212 : vector<8x256xf32> to vector<8x256xbf16>
    %c0_197 = arith.constant 0 : index
    %c0_198 = arith.constant 0 : index
    %214 = vector.load %arg5[%c0_197, %c0_198] : memref<144x256xbf16, #tpu.memory_space<vmem>>, vector<8x256xbf16>
    tpu.vector_store %arg5[%c0_197, %c0_198], %213 {strides = array<i32>} : memref<144x256xbf16, #tpu.memory_space<vmem>>, vector<8x256xbf16>,
    %c0_199 = arith.constant 0 : index
    %c112_200 = arith.constant 112 : index
    %215 = vector.load %arg4[%c0_199, %c112_200] : memref<48x512xf32, #tpu.memory_space<vmem>>, vector<8x256xf32>
    %216 = arith.truncf %215 : vector<8x256xf32> to vector<8x256xbf16>
    %c8_201 = arith.constant 8 : index
    %c0_202 = arith.constant 0 : index
    %217 = vector.load %arg5[%c8_201, %c0_202] : memref<144x256xbf16, #tpu.memory_space<vmem>>, vector<8x256xbf16>
    tpu.vector_store %arg5[%c8_201, %c0_202], %216 {strides = array<i32>} : memref<144x256xbf16, #tpu.memory_space<vmem>>, vector<8x256xbf16>,
    %c32_203 = arith.constant 32 : index
    %c113_204 = arith.constant 113 : index
    %218 = vector.load %arg4[%c32_203, %c113_204] : memref<48x512xf32, #tpu.memory_space<vmem>>, vector<8x256xf32>
    %219 = arith.truncf %218 : vector<8x256xf32> to vector<8x256xbf16>
    %c16_205 = arith.constant 16 : index
    %c0_206 = arith.constant 0 : index
    %220 = vector.load %arg5[%c16_205, %c0_206] : memref<144x256xbf16, #tpu.memory_space<vmem>>, vector<8x256xbf16>
    tpu.vector_store %arg5[%c16_205, %c0_206], %219 {strides = array<i32>} : memref<144x256xbf16, #tpu.memory_space<vmem>>, vector<8x256xbf16>,
    %c16_207 = arith.constant 16 : index
    %c127_208 = arith.constant 127 : index
    %221 = vector.load %arg4[%c16_207, %c127_208] : memref<48x512xf32, #tpu.memory_space<vmem>>, vector<8x256xf32>
    %222 = arith.truncf %221 : vector<8x256xf32> to vector<8x256xbf16>
    %c24_209 = arith.constant 24 : index
    %c0_210 = arith.constant 0 : index
    %223 = vector.load %arg5[%c24_209, %c0_210] : memref<144x256xbf16, #tpu.memory_space<vmem>>, vector<8x256xbf16>
    tpu.vector_store %arg5[%c24_209, %c0_210], %222 {strides = array<i32>} : memref<144x256xbf16, #tpu.memory_space<vmem>>, vector<8x256xbf16>,
    %c0_211 = arith.constant 0 : index
    %c128_212 = arith.constant 128 : index
    %224 = vector.load %arg4[%c0_211, %c128_212] : memref<48x512xf32, #tpu.memory_space<vmem>>, vector<8x256xf32>
    %225 = arith.truncf %224 : vector<8x256xf32> to vector<8x256xbf16>
    %c32_213 = arith.constant 32 : index
    %c0_214 = arith.constant 0 : index
    %226 = vector.load %arg5[%c32_213, %c0_214] : memref<144x256xbf16, #tpu.memory_space<vmem>>, vector<8x256xbf16>
    tpu.vector_store %arg5[%c32_213, %c0_214], %225 {strides = array<i32>} : memref<144x256xbf16, #tpu.memory_space<vmem>>, vector<8x256xbf16>,
    %c32_215 = arith.constant 32 : index
    %c129_216 = arith.constant 129 : index
    %227 = vector.load %arg4[%c32_215, %c129_216] : memref<48x512xf32, #tpu.memory_space<vmem>>, vector<8x256xf32>
    %228 = arith.truncf %227 : vector<8x256xf32> to vector<8x256xbf16>
    %c40_217 = arith.constant 40 : index
    %c0_218 = arith.constant 0 : index
    %229 = vector.load %arg5[%c40_217, %c0_218] : memref<144x256xbf16, #tpu.memory_space<vmem>>, vector<8x256xbf16>
    tpu.vector_store %arg5[%c40_217, %c0_218], %228 {strides = array<i32>} : memref<144x256xbf16, #tpu.memory_space<vmem>>, vector<8x256xbf16>,
    %c16_219 = arith.constant 16 : index
    %c143_220 = arith.constant 143 : index
    %230 = vector.load %arg4[%c16_219, %c143_220] : memref<48x512xf32, #tpu.memory_space<vmem>>, vector<8x256xf32>
    %231 = arith.truncf %230 : vector<8x256xf32> to vector<8x256xbf16>
    %c48_221 = arith.constant 48 : index
    %c0_222 = arith.constant 0 : index
    %232 = vector.load %arg5[%c48_221, %c0_222] : memref<144x256xbf16, #tpu.memory_space<vmem>>, vector<8x256xbf16>
    tpu.vector_store %arg5[%c48_221, %c0_222], %231 {strides = array<i32>} : memref<144x256xbf16, #tpu.memory_space<vmem>>, vector<8x256xbf16>,
    %c0_223 = arith.constant 0 : index
    %c144_224 = arith.constant 144 : index
    %233 = vector.load %arg4[%c0_223, %c144_224] : memref<48x512xf32, #tpu.memory_space<vmem>>, vector<8x256xf32>
    %234 = arith.truncf %233 : vector<8x256xf32> to vector<8x256xbf16>
    %c56_225 = arith.constant 56 : index
    %c0_226 = arith.constant 0 : index
    %235 = vector.load %arg5[%c56_225, %c0_226] : memref<144x256xbf16, #tpu.memory_space<vmem>>, vector<8x256xbf16>
    tpu.vector_store %arg5[%c56_225, %c0_226], %234 {strides = array<i32>} : memref<144x256xbf16, #tpu.memory_space<vmem>>, vector<8x256xbf16>,
    %c32_227 = arith.constant 32 : index
    %c145_228 = arith.constant 145 : index
    %236 = vector.load %arg4[%c32_227, %c145_228] : memref<48x512xf32, #tpu.memory_space<vmem>>, vector<8x256xf32>
    %237 = arith.truncf %236 : vector<8x256xf32> to vector<8x256xbf16>
    %c64_229 = arith.constant 64 : index
    %c0_230 = arith.constant 0 : index
    %238 = vector.load %arg5[%c64_229, %c0_230] : memref<144x256xbf16, #tpu.memory_space<vmem>>, vector<8x256xbf16>
    tpu.vector_store %arg5[%c64_229, %c0_230], %237 {strides = array<i32>} : memref<144x256xbf16, #tpu.memory_space<vmem>>, vector<8x256xbf16>,
    %c16_231 = arith.constant 16 : index
    %c0_232 = arith.constant 0 : index
    %239 = vector.load %arg2[%c16_231, %c0_232] : memref<128x144xbf16, #tpu.memory_space<vmem>>, vector<16x72xbf16>
    %c0_233 = arith.constant 0 : index
    %c0_234 = arith.constant 0 : index
    %240 = vector.load %arg5[%c0_233, %c0_234] : memref<144x256xbf16, #tpu.memory_space<vmem>>, vector<72x256xbf16>
    %cst_235 = arith.constant dense<0.000000e+00> : vector<16x256xf32>
    %241 = tpu.matmul %239, %240, %cst_235 {dimension_numbers = #tpu.dot_dimension_numbers<[1], [0], [0], [1], [0, 0, 1, 1], [], []>} : vector<16x72xbf16>, vector<72x256xbf16>, vector<16x256xf32> -> vector<16x256xf32>
    %242 = arith.subf %168, %241 : vector<16x256xf32>
    %243 = arith.addf %242, %89 : vector<16x256xf32>
    %cst_236 = arith.constant 0.000000e+00 : f32
    %244 = vector.broadcast %cst_236 : f32 to vector<16x256xf32>
    %245 = arith.maximumf %243, %244 : vector<16x256xf32>
    %c96_237 = arith.constant 96 : index
    %c0_238 = arith.constant 0 : index
    %246 = vector.load %arg2[%c96_237, %c0_238] : memref<128x144xbf16, #tpu.memory_space<vmem>>, vector<8x16xbf16>
    %247 = arith.truncf %245 : vector<16x256xf32> to vector<16x256xbf16>
    %cst_239 = arith.constant dense<0.000000e+00> : vector<8x256xf32>
    %248 = tpu.matmul %246, %247, %cst_239 {dimension_numbers = #tpu.dot_dimension_numbers<[1], [0], [0], [1], [0, 0, 1, 1], [], []>} : vector<8x16xbf16>, vector<16x256xbf16>, vector<8x256xf32> -> vector<8x256xf32>
    %249 = arith.mulf %248, %50 : vector<8x256xf32>
    %c0_240 = arith.constant 0 : index
    %c128_241 = arith.constant 128 : index
    %250 = vector.load %arg4[%c0_240, %c128_241] : memref<48x512xf32, #tpu.memory_space<vmem>>, vector<8x256xf32>
    tpu.vector_store %arg4[%c0_240, %c128_241], %249 {strides = array<i32>} : memref<48x512xf32, #tpu.memory_space<vmem>>, vector<8x256xf32>,
    %251 = vector.extract_strided_slice %20 {offsets = [0, 0], sizes = [8, 256], strides = [1, 1]} : vector<16x256xf32> to vector<8x256xf32>
    %252 = arith.mulf %249, %251 : vector<8x256xf32>
    %c16_242 = arith.constant 16 : index
    %c128_243 = arith.constant 128 : index
    %253 = vector.load %arg4[%c16_242, %c128_243] : memref<48x512xf32, #tpu.memory_space<vmem>>, vector<8x256xf32>
    tpu.vector_store %arg4[%c16_242, %c128_243], %252 {strides = array<i32>} : memref<48x512xf32, #tpu.memory_space<vmem>>, vector<8x256xf32>,
    %254 = vector.extract_strided_slice %24 {offsets = [0, 0], sizes = [8, 256], strides = [1, 1]} : vector<16x256xf32> to vector<8x256xf32>
    %255 = arith.mulf %249, %254 : vector<8x256xf32>
    %c32_244 = arith.constant 32 : index
    %c128_245 = arith.constant 128 : index
    %256 = vector.load %arg4[%c32_244, %c128_245] : memref<48x512xf32, #tpu.memory_space<vmem>>, vector<8x256xf32>
    tpu.vector_store %arg4[%c32_244, %c128_245], %255 {strides = array<i32>} : memref<48x512xf32, #tpu.memory_space<vmem>>, vector<8x256xf32>,
    %c16_246 = arith.constant 16 : index
    %c111_247 = arith.constant 111 : index
    %257 = vector.load %arg4[%c16_246, %c111_247] : memref<48x512xf32, #tpu.memory_space<vmem>>, vector<8x256xf32>
    %258 = arith.truncf %257 : vector<8x256xf32> to vector<8x256xbf16>
    %c0_248 = arith.constant 0 : index
    %c0_249 = arith.constant 0 : index
    %259 = vector.load %arg5[%c0_248, %c0_249] : memref<144x256xbf16, #tpu.memory_space<vmem>>, vector<8x256xbf16>
    tpu.vector_store %arg5[%c0_248, %c0_249], %258 {strides = array<i32>} : memref<144x256xbf16, #tpu.memory_space<vmem>>, vector<8x256xbf16>,
    %c0_250 = arith.constant 0 : index
    %c112_251 = arith.constant 112 : index
    %260 = vector.load %arg4[%c0_250, %c112_251] : memref<48x512xf32, #tpu.memory_space<vmem>>, vector<8x256xf32>
    %261 = arith.truncf %260 : vector<8x256xf32> to vector<8x256xbf16>
    %c8_252 = arith.constant 8 : index
    %c0_253 = arith.constant 0 : index
    %262 = vector.load %arg5[%c8_252, %c0_253] : memref<144x256xbf16, #tpu.memory_space<vmem>>, vector<8x256xbf16>
    tpu.vector_store %arg5[%c8_252, %c0_253], %261 {strides = array<i32>} : memref<144x256xbf16, #tpu.memory_space<vmem>>, vector<8x256xbf16>,
    %c32_254 = arith.constant 32 : index
    %c113_255 = arith.constant 113 : index
    %263 = vector.load %arg4[%c32_254, %c113_255] : memref<48x512xf32, #tpu.memory_space<vmem>>, vector<8x256xf32>
    %264 = arith.truncf %263 : vector<8x256xf32> to vector<8x256xbf16>
    %c16_256 = arith.constant 16 : index
    %c0_257 = arith.constant 0 : index
    %265 = vector.load %arg5[%c16_256, %c0_257] : memref<144x256xbf16, #tpu.memory_space<vmem>>, vector<8x256xbf16>
    tpu.vector_store %arg5[%c16_256, %c0_257], %264 {strides = array<i32>} : memref<144x256xbf16, #tpu.memory_space<vmem>>, vector<8x256xbf16>,
    %c16_258 = arith.constant 16 : index
    %c127_259 = arith.constant 127 : index
    %266 = vector.load %arg4[%c16_258, %c127_259] : memref<48x512xf32, #tpu.memory_space<vmem>>, vector<8x256xf32>
    %267 = arith.truncf %266 : vector<8x256xf32> to vector<8x256xbf16>
    %c24_260 = arith.constant 24 : index
    %c0_261 = arith.constant 0 : index
    %268 = vector.load %arg5[%c24_260, %c0_261] : memref<144x256xbf16, #tpu.memory_space<vmem>>, vector<8x256xbf16>
    tpu.vector_store %arg5[%c24_260, %c0_261], %267 {strides = array<i32>} : memref<144x256xbf16, #tpu.memory_space<vmem>>, vector<8x256xbf16>,
    %c0_262 = arith.constant 0 : index
    %c128_263 = arith.constant 128 : index
    %269 = vector.load %arg4[%c0_262, %c128_263] : memref<48x512xf32, #tpu.memory_space<vmem>>, vector<8x256xf32>
    %270 = arith.truncf %269 : vector<8x256xf32> to vector<8x256xbf16>
    %c32_264 = arith.constant 32 : index
    %c0_265 = arith.constant 0 : index
    %271 = vector.load %arg5[%c32_264, %c0_265] : memref<144x256xbf16, #tpu.memory_space<vmem>>, vector<8x256xbf16>
    tpu.vector_store %arg5[%c32_264, %c0_265], %270 {strides = array<i32>} : memref<144x256xbf16, #tpu.memory_space<vmem>>, vector<8x256xbf16>,
    %c32_266 = arith.constant 32 : index
    %c129_267 = arith.constant 129 : index
    %272 = vector.load %arg4[%c32_266, %c129_267] : memref<48x512xf32, #tpu.memory_space<vmem>>, vector<8x256xf32>
    %273 = arith.truncf %272 : vector<8x256xf32> to vector<8x256xbf16>
    %c40_268 = arith.constant 40 : index
    %c0_269 = arith.constant 0 : index
    %274 = vector.load %arg5[%c40_268, %c0_269] : memref<144x256xbf16, #tpu.memory_space<vmem>>, vector<8x256xbf16>
    tpu.vector_store %arg5[%c40_268, %c0_269], %273 {strides = array<i32>} : memref<144x256xbf16, #tpu.memory_space<vmem>>, vector<8x256xbf16>,
    %c16_270 = arith.constant 16 : index
    %c143_271 = arith.constant 143 : index
    %275 = vector.load %arg4[%c16_270, %c143_271] : memref<48x512xf32, #tpu.memory_space<vmem>>, vector<8x256xf32>
    %276 = arith.truncf %275 : vector<8x256xf32> to vector<8x256xbf16>
    %c48_272 = arith.constant 48 : index
    %c0_273 = arith.constant 0 : index
    %277 = vector.load %arg5[%c48_272, %c0_273] : memref<144x256xbf16, #tpu.memory_space<vmem>>, vector<8x256xbf16>
    tpu.vector_store %arg5[%c48_272, %c0_273], %276 {strides = array<i32>} : memref<144x256xbf16, #tpu.memory_space<vmem>>, vector<8x256xbf16>,
    %c0_274 = arith.constant 0 : index
    %c144_275 = arith.constant 144 : index
    %278 = vector.load %arg4[%c0_274, %c144_275] : memref<48x512xf32, #tpu.memory_space<vmem>>, vector<8x256xf32>
    %279 = arith.truncf %278 : vector<8x256xf32> to vector<8x256xbf16>
    %c56_276 = arith.constant 56 : index
    %c0_277 = arith.constant 0 : index
    %280 = vector.load %arg5[%c56_276, %c0_277] : memref<144x256xbf16, #tpu.memory_space<vmem>>, vector<8x256xbf16>
    tpu.vector_store %arg5[%c56_276, %c0_277], %279 {strides = array<i32>} : memref<144x256xbf16, #tpu.memory_space<vmem>>, vector<8x256xbf16>,
    %c32_278 = arith.constant 32 : index
    %c145_279 = arith.constant 145 : index
    %281 = vector.load %arg4[%c32_278, %c145_279] : memref<48x512xf32, #tpu.memory_space<vmem>>, vector<8x256xf32>
    %282 = arith.truncf %281 : vector<8x256xf32> to vector<8x256xbf16>
    %c64_280 = arith.constant 64 : index
    %c0_281 = arith.constant 0 : index
    %283 = vector.load %arg5[%c64_280, %c0_281] : memref<144x256xbf16, #tpu.memory_space<vmem>>, vector<8x256xbf16>
    tpu.vector_store %arg5[%c64_280, %c0_281], %282 {strides = array<i32>} : memref<144x256xbf16, #tpu.memory_space<vmem>>, vector<8x256xbf16>,
    %c32_282 = arith.constant 32 : index
    %c0_283 = arith.constant 0 : index
    %284 = vector.load %arg2[%c32_282, %c0_283] : memref<128x144xbf16, #tpu.memory_space<vmem>>, vector<16x72xbf16>
    %c0_284 = arith.constant 0 : index
    %c0_285 = arith.constant 0 : index
    %285 = vector.load %arg5[%c0_284, %c0_285] : memref<144x256xbf16, #tpu.memory_space<vmem>>, vector<72x256xbf16>
    %cst_286 = arith.constant dense<0.000000e+00> : vector<16x256xf32>
    %286 = tpu.matmul %284, %285, %cst_286 {dimension_numbers = #tpu.dot_dimension_numbers<[1], [0], [0], [1], [0, 0, 1, 1], [], []>} : vector<16x72xbf16>, vector<72x256xbf16>, vector<16x256xf32> -> vector<16x256xf32>
    %cst_287 = arith.constant 0.000000e+00 : f32
    %287 = vector.broadcast %cst_287 : f32 to vector<16x256xf32>
    %288 = arith.maximumf %286, %287 : vector<16x256xf32>
    %c0_288 = arith.constant 0 : index
    %c128_289 = arith.constant 128 : index
    %289 = vector.load %arg4[%c0_288, %c128_289] : memref<48x512xf32, #tpu.memory_space<vmem>>, vector<16x256xf32>
    tpu.vector_store %arg4[%c0_288, %c128_289], %288 {strides = array<i32>} : memref<48x512xf32, #tpu.memory_space<vmem>>, vector<16x256xf32>,
    %290 = arith.mulf %288, %20 : vector<16x256xf32>
    %c16_290 = arith.constant 16 : index
    %c128_291 = arith.constant 128 : index
    %291 = vector.load %arg4[%c16_290, %c128_291] : memref<48x512xf32, #tpu.memory_space<vmem>>, vector<16x256xf32>
    tpu.vector_store %arg4[%c16_290, %c128_291], %290 {strides = array<i32>} : memref<48x512xf32, #tpu.memory_space<vmem>>, vector<16x256xf32>,
    %292 = arith.mulf %288, %24 : vector<16x256xf32>
    %c32_292 = arith.constant 32 : index
    %c128_293 = arith.constant 128 : index
    %293 = vector.load %arg4[%c32_292, %c128_293] : memref<48x512xf32, #tpu.memory_space<vmem>>, vector<16x256xf32>
    tpu.vector_store %arg4[%c32_292, %c128_293], %292 {strides = array<i32>} : memref<48x512xf32, #tpu.memory_space<vmem>>, vector<16x256xf32>,
    %c16_294 = arith.constant 16 : index
    %c111_295 = arith.constant 111 : index
    %294 = vector.load %arg4[%c16_294, %c111_295] : memref<48x512xf32, #tpu.memory_space<vmem>>, vector<16x256xf32>
    %295 = arith.truncf %294 : vector<16x256xf32> to vector<16x256xbf16>
    %c0_296 = arith.constant 0 : index
    %c0_297 = arith.constant 0 : index
    %296 = vector.load %arg5[%c0_296, %c0_297] : memref<144x256xbf16, #tpu.memory_space<vmem>>, vector<16x256xbf16>
    tpu.vector_store %arg5[%c0_296, %c0_297], %295 {strides = array<i32>} : memref<144x256xbf16, #tpu.memory_space<vmem>>, vector<16x256xbf16>,
    %c0_298 = arith.constant 0 : index
    %c112_299 = arith.constant 112 : index
    %297 = vector.load %arg4[%c0_298, %c112_299] : memref<48x512xf32, #tpu.memory_space<vmem>>, vector<16x256xf32>
    %298 = arith.truncf %297 : vector<16x256xf32> to vector<16x256xbf16>
    %c16_300 = arith.constant 16 : index
    %c0_301 = arith.constant 0 : index
    %299 = vector.load %arg5[%c16_300, %c0_301] : memref<144x256xbf16, #tpu.memory_space<vmem>>, vector<16x256xbf16>
    tpu.vector_store %arg5[%c16_300, %c0_301], %298 {strides = array<i32>} : memref<144x256xbf16, #tpu.memory_space<vmem>>, vector<16x256xbf16>,
    %c32_302 = arith.constant 32 : index
    %c113_303 = arith.constant 113 : index
    %300 = vector.load %arg4[%c32_302, %c113_303] : memref<48x512xf32, #tpu.memory_space<vmem>>, vector<16x256xf32>
    %301 = arith.truncf %300 : vector<16x256xf32> to vector<16x256xbf16>
    %c32_304 = arith.constant 32 : index
    %c0_305 = arith.constant 0 : index
    %302 = vector.load %arg5[%c32_304, %c0_305] : memref<144x256xbf16, #tpu.memory_space<vmem>>, vector<16x256xbf16>
    tpu.vector_store %arg5[%c32_304, %c0_305], %301 {strides = array<i32>} : memref<144x256xbf16, #tpu.memory_space<vmem>>, vector<16x256xbf16>,
    %c16_306 = arith.constant 16 : index
    %c127_307 = arith.constant 127 : index
    %303 = vector.load %arg4[%c16_306, %c127_307] : memref<48x512xf32, #tpu.memory_space<vmem>>, vector<16x256xf32>
    %304 = arith.truncf %303 : vector<16x256xf32> to vector<16x256xbf16>
    %c48_308 = arith.constant 48 : index
    %c0_309 = arith.constant 0 : index
    %305 = vector.load %arg5[%c48_308, %c0_309] : memref<144x256xbf16, #tpu.memory_space<vmem>>, vector<16x256xbf16>
    tpu.vector_store %arg5[%c48_308, %c0_309], %304 {strides = array<i32>} : memref<144x256xbf16, #tpu.memory_space<vmem>>, vector<16x256xbf16>,
    %c0_310 = arith.constant 0 : index
    %c128_311 = arith.constant 128 : index
    %306 = vector.load %arg4[%c0_310, %c128_311] : memref<48x512xf32, #tpu.memory_space<vmem>>, vector<16x256xf32>
    %307 = arith.truncf %306 : vector<16x256xf32> to vector<16x256xbf16>
    %c64_312 = arith.constant 64 : index
    %c0_313 = arith.constant 0 : index
    %308 = vector.load %arg5[%c64_312, %c0_313] : memref<144x256xbf16, #tpu.memory_space<vmem>>, vector<16x256xbf16>
    tpu.vector_store %arg5[%c64_312, %c0_313], %307 {strides = array<i32>} : memref<144x256xbf16, #tpu.memory_space<vmem>>, vector<16x256xbf16>,
    %c32_314 = arith.constant 32 : index
    %c129_315 = arith.constant 129 : index
    %309 = vector.load %arg4[%c32_314, %c129_315] : memref<48x512xf32, #tpu.memory_space<vmem>>, vector<16x256xf32>
    %310 = arith.truncf %309 : vector<16x256xf32> to vector<16x256xbf16>
    %c80_316 = arith.constant 80 : index
    %c0_317 = arith.constant 0 : index
    %311 = vector.load %arg5[%c80_316, %c0_317] : memref<144x256xbf16, #tpu.memory_space<vmem>>, vector<16x256xbf16>
    tpu.vector_store %arg5[%c80_316, %c0_317], %310 {strides = array<i32>} : memref<144x256xbf16, #tpu.memory_space<vmem>>, vector<16x256xbf16>,
    %c16_318 = arith.constant 16 : index
    %c143_319 = arith.constant 143 : index
    %312 = vector.load %arg4[%c16_318, %c143_319] : memref<48x512xf32, #tpu.memory_space<vmem>>, vector<16x256xf32>
    %313 = arith.truncf %312 : vector<16x256xf32> to vector<16x256xbf16>
    %c96_320 = arith.constant 96 : index
    %c0_321 = arith.constant 0 : index
    %314 = vector.load %arg5[%c96_320, %c0_321] : memref<144x256xbf16, #tpu.memory_space<vmem>>, vector<16x256xbf16>
    tpu.vector_store %arg5[%c96_320, %c0_321], %313 {strides = array<i32>} : memref<144x256xbf16, #tpu.memory_space<vmem>>, vector<16x256xbf16>,
    %c0_322 = arith.constant 0 : index
    %c144_323 = arith.constant 144 : index
    %315 = vector.load %arg4[%c0_322, %c144_323] : memref<48x512xf32, #tpu.memory_space<vmem>>, vector<16x256xf32>
    %316 = arith.truncf %315 : vector<16x256xf32> to vector<16x256xbf16>
    %c112_324 = arith.constant 112 : index
    %c0_325 = arith.constant 0 : index
    %317 = vector.load %arg5[%c112_324, %c0_325] : memref<144x256xbf16, #tpu.memory_space<vmem>>, vector<16x256xbf16>
    tpu.vector_store %arg5[%c112_324, %c0_325], %316 {strides = array<i32>} : memref<144x256xbf16, #tpu.memory_space<vmem>>, vector<16x256xbf16>,
    %c32_326 = arith.constant 32 : index
    %c145_327 = arith.constant 145 : index
    %318 = vector.load %arg4[%c32_326, %c145_327] : memref<48x512xf32, #tpu.memory_space<vmem>>, vector<16x256xf32>
    %319 = arith.truncf %318 : vector<16x256xf32> to vector<16x256xbf16>
    %c128_328 = arith.constant 128 : index
    %c0_329 = arith.constant 0 : index
    %320 = vector.load %arg5[%c128_328, %c0_329] : memref<144x256xbf16, #tpu.memory_space<vmem>>, vector<16x256xbf16>
    tpu.vector_store %arg5[%c128_328, %c0_329], %319 {strides = array<i32>} : memref<144x256xbf16, #tpu.memory_space<vmem>>, vector<16x256xbf16>,
    %c88 = arith.constant 88 : index
    %c0_330 = arith.constant 0 : index
    %321 = vector.load %arg2[%c88, %c0_330] : memref<128x144xbf16, #tpu.memory_space<vmem>>, vector<8x144xbf16>
    %c0_331 = arith.constant 0 : index
    %c0_332 = arith.constant 0 : index
    %322 = vector.load %arg5[%c0_331, %c0_332] : memref<144x256xbf16, #tpu.memory_space<vmem>>, vector<144x256xbf16>
    %cst_333 = arith.constant dense<0.000000e+00> : vector<8x256xf32>
    %323 = tpu.matmul %321, %322, %cst_333 {dimension_numbers = #tpu.dot_dimension_numbers<[1], [0], [0], [1], [0, 0, 1, 1], [], []>} : vector<8x144xbf16>, vector<144x256xbf16>, vector<8x256xf32> -> vector<8x256xf32>
    %324 = arith.mulf %323, %51 : vector<8x256xf32>
    %c0_334 = arith.constant 0 : index
    %c128_335 = arith.constant 128 : index
    %325 = vector.load %arg4[%c0_334, %c128_335] : memref<48x512xf32, #tpu.memory_space<vmem>>, vector<8x256xf32>
    tpu.vector_store %arg4[%c0_334, %c128_335], %324 {strides = array<i32>} : memref<48x512xf32, #tpu.memory_space<vmem>>, vector<8x256xf32>,
    %326 = vector.extract_strided_slice %20 {offsets = [0, 0], sizes = [8, 256], strides = [1, 1]} : vector<16x256xf32> to vector<8x256xf32>
    %327 = arith.mulf %324, %326 : vector<8x256xf32>
    %c16_336 = arith.constant 16 : index
    %c128_337 = arith.constant 128 : index
    %328 = vector.load %arg4[%c16_336, %c128_337] : memref<48x512xf32, #tpu.memory_space<vmem>>, vector<8x256xf32>
    tpu.vector_store %arg4[%c16_336, %c128_337], %327 {strides = array<i32>} : memref<48x512xf32, #tpu.memory_space<vmem>>, vector<8x256xf32>,
    %329 = vector.extract_strided_slice %24 {offsets = [0, 0], sizes = [8, 256], strides = [1, 1]} : vector<16x256xf32> to vector<8x256xf32>
    %330 = arith.mulf %324, %329 : vector<8x256xf32>
    %c32_338 = arith.constant 32 : index
    %c128_339 = arith.constant 128 : index
    %331 = vector.load %arg4[%c32_338, %c128_339] : memref<48x512xf32, #tpu.memory_space<vmem>>, vector<8x256xf32>
    tpu.vector_store %arg4[%c32_338, %c128_339], %330 {strides = array<i32>} : memref<48x512xf32, #tpu.memory_space<vmem>>, vector<8x256xf32>,
    %c16_340 = arith.constant 16 : index
    %c111_341 = arith.constant 111 : index
    %332 = vector.load %arg4[%c16_340, %c111_341] : memref<48x512xf32, #tpu.memory_space<vmem>>, vector<8x256xf32>
    %333 = arith.truncf %332 : vector<8x256xf32> to vector<8x256xbf16>
    %c0_342 = arith.constant 0 : index
    %c0_343 = arith.constant 0 : index
    %334 = vector.load %arg5[%c0_342, %c0_343] : memref<144x256xbf16, #tpu.memory_space<vmem>>, vector<8x256xbf16>
    tpu.vector_store %arg5[%c0_342, %c0_343], %333 {strides = array<i32>} : memref<144x256xbf16, #tpu.memory_space<vmem>>, vector<8x256xbf16>,
    %c0_344 = arith.constant 0 : index
    %c112_345 = arith.constant 112 : index
    %335 = vector.load %arg4[%c0_344, %c112_345] : memref<48x512xf32, #tpu.memory_space<vmem>>, vector<8x256xf32>
    %336 = arith.truncf %335 : vector<8x256xf32> to vector<8x256xbf16>
    %c8_346 = arith.constant 8 : index
    %c0_347 = arith.constant 0 : index
    %337 = vector.load %arg5[%c8_346, %c0_347] : memref<144x256xbf16, #tpu.memory_space<vmem>>, vector<8x256xbf16>
    tpu.vector_store %arg5[%c8_346, %c0_347], %336 {strides = array<i32>} : memref<144x256xbf16, #tpu.memory_space<vmem>>, vector<8x256xbf16>,
    %c32_348 = arith.constant 32 : index
    %c113_349 = arith.constant 113 : index
    %338 = vector.load %arg4[%c32_348, %c113_349] : memref<48x512xf32, #tpu.memory_space<vmem>>, vector<8x256xf32>
    %339 = arith.truncf %338 : vector<8x256xf32> to vector<8x256xbf16>
    %c16_350 = arith.constant 16 : index
    %c0_351 = arith.constant 0 : index
    %340 = vector.load %arg5[%c16_350, %c0_351] : memref<144x256xbf16, #tpu.memory_space<vmem>>, vector<8x256xbf16>
    tpu.vector_store %arg5[%c16_350, %c0_351], %339 {strides = array<i32>} : memref<144x256xbf16, #tpu.memory_space<vmem>>, vector<8x256xbf16>,
    %c16_352 = arith.constant 16 : index
    %c127_353 = arith.constant 127 : index
    %341 = vector.load %arg4[%c16_352, %c127_353] : memref<48x512xf32, #tpu.memory_space<vmem>>, vector<8x256xf32>
    %342 = arith.truncf %341 : vector<8x256xf32> to vector<8x256xbf16>
    %c24_354 = arith.constant 24 : index
    %c0_355 = arith.constant 0 : index
    %343 = vector.load %arg5[%c24_354, %c0_355] : memref<144x256xbf16, #tpu.memory_space<vmem>>, vector<8x256xbf16>
    tpu.vector_store %arg5[%c24_354, %c0_355], %342 {strides = array<i32>} : memref<144x256xbf16, #tpu.memory_space<vmem>>, vector<8x256xbf16>,
    %c0_356 = arith.constant 0 : index
    %c128_357 = arith.constant 128 : index
    %344 = vector.load %arg4[%c0_356, %c128_357] : memref<48x512xf32, #tpu.memory_space<vmem>>, vector<8x256xf32>
    %345 = arith.truncf %344 : vector<8x256xf32> to vector<8x256xbf16>
    %c32_358 = arith.constant 32 : index
    %c0_359 = arith.constant 0 : index
    %346 = vector.load %arg5[%c32_358, %c0_359] : memref<144x256xbf16, #tpu.memory_space<vmem>>, vector<8x256xbf16>
    tpu.vector_store %arg5[%c32_358, %c0_359], %345 {strides = array<i32>} : memref<144x256xbf16, #tpu.memory_space<vmem>>, vector<8x256xbf16>,
    %c32_360 = arith.constant 32 : index
    %c129_361 = arith.constant 129 : index
    %347 = vector.load %arg4[%c32_360, %c129_361] : memref<48x512xf32, #tpu.memory_space<vmem>>, vector<8x256xf32>
    %348 = arith.truncf %347 : vector<8x256xf32> to vector<8x256xbf16>
    %c40_362 = arith.constant 40 : index
    %c0_363 = arith.constant 0 : index
    %349 = vector.load %arg5[%c40_362, %c0_363] : memref<144x256xbf16, #tpu.memory_space<vmem>>, vector<8x256xbf16>
    tpu.vector_store %arg5[%c40_362, %c0_363], %348 {strides = array<i32>} : memref<144x256xbf16, #tpu.memory_space<vmem>>, vector<8x256xbf16>,
    %c16_364 = arith.constant 16 : index
    %c143_365 = arith.constant 143 : index
    %350 = vector.load %arg4[%c16_364, %c143_365] : memref<48x512xf32, #tpu.memory_space<vmem>>, vector<8x256xf32>
    %351 = arith.truncf %350 : vector<8x256xf32> to vector<8x256xbf16>
    %c48_366 = arith.constant 48 : index
    %c0_367 = arith.constant 0 : index
    %352 = vector.load %arg5[%c48_366, %c0_367] : memref<144x256xbf16, #tpu.memory_space<vmem>>, vector<8x256xbf16>
    tpu.vector_store %arg5[%c48_366, %c0_367], %351 {strides = array<i32>} : memref<144x256xbf16, #tpu.memory_space<vmem>>, vector<8x256xbf16>,
    %c0_368 = arith.constant 0 : index
    %c144_369 = arith.constant 144 : index
    %353 = vector.load %arg4[%c0_368, %c144_369] : memref<48x512xf32, #tpu.memory_space<vmem>>, vector<8x256xf32>
    %354 = arith.truncf %353 : vector<8x256xf32> to vector<8x256xbf16>
    %c56_370 = arith.constant 56 : index
    %c0_371 = arith.constant 0 : index
    %355 = vector.load %arg5[%c56_370, %c0_371] : memref<144x256xbf16, #tpu.memory_space<vmem>>, vector<8x256xbf16>
    tpu.vector_store %arg5[%c56_370, %c0_371], %354 {strides = array<i32>} : memref<144x256xbf16, #tpu.memory_space<vmem>>, vector<8x256xbf16>,
    %c32_372 = arith.constant 32 : index
    %c145_373 = arith.constant 145 : index
    %356 = vector.load %arg4[%c32_372, %c145_373] : memref<48x512xf32, #tpu.memory_space<vmem>>, vector<8x256xf32>
    %357 = arith.truncf %356 : vector<8x256xf32> to vector<8x256xbf16>
    %c64_374 = arith.constant 64 : index
    %c0_375 = arith.constant 0 : index
    %358 = vector.load %arg5[%c64_374, %c0_375] : memref<144x256xbf16, #tpu.memory_space<vmem>>, vector<8x256xbf16>
    tpu.vector_store %arg5[%c64_374, %c0_375], %357 {strides = array<i32>} : memref<144x256xbf16, #tpu.memory_space<vmem>>, vector<8x256xbf16>,
    %c48_376 = arith.constant 48 : index
    %c0_377 = arith.constant 0 : index
    %359 = vector.load %arg2[%c48_376, %c0_377] : memref<128x144xbf16, #tpu.memory_space<vmem>>, vector<16x72xbf16>
    %c0_378 = arith.constant 0 : index
    %c0_379 = arith.constant 0 : index
    %360 = vector.load %arg5[%c0_378, %c0_379] : memref<144x256xbf16, #tpu.memory_space<vmem>>, vector<72x256xbf16>
    %cst_380 = arith.constant dense<0.000000e+00> : vector<16x256xf32>
    %361 = tpu.matmul %359, %360, %cst_380 {dimension_numbers = #tpu.dot_dimension_numbers<[1], [0], [0], [1], [0, 0, 1, 1], [], []>} : vector<16x72xbf16>, vector<72x256xbf16>, vector<16x256xf32> -> vector<16x256xf32>
    %362 = arith.subf %288, %361 : vector<16x256xf32>
    %363 = arith.addf %362, %286 : vector<16x256xf32>
    %cst_381 = arith.constant 0.000000e+00 : f32
    %364 = vector.broadcast %cst_381 : f32 to vector<16x256xf32>
    %365 = arith.maximumf %363, %364 : vector<16x256xf32>
    %c0_382 = arith.constant 0 : index
    %c128_383 = arith.constant 128 : index
    %366 = vector.load %arg4[%c0_382, %c128_383] : memref<48x512xf32, #tpu.memory_space<vmem>>, vector<16x256xf32>
    tpu.vector_store %arg4[%c0_382, %c128_383], %365 {strides = array<i32>} : memref<48x512xf32, #tpu.memory_space<vmem>>, vector<16x256xf32>,
    %367 = arith.mulf %365, %20 : vector<16x256xf32>
    %c16_384 = arith.constant 16 : index
    %c128_385 = arith.constant 128 : index
    %368 = vector.load %arg4[%c16_384, %c128_385] : memref<48x512xf32, #tpu.memory_space<vmem>>, vector<16x256xf32>
    tpu.vector_store %arg4[%c16_384, %c128_385], %367 {strides = array<i32>} : memref<48x512xf32, #tpu.memory_space<vmem>>, vector<16x256xf32>,
    %369 = arith.mulf %365, %24 : vector<16x256xf32>
    %c32_386 = arith.constant 32 : index
    %c128_387 = arith.constant 128 : index
    %370 = vector.load %arg4[%c32_386, %c128_387] : memref<48x512xf32, #tpu.memory_space<vmem>>, vector<16x256xf32>
    tpu.vector_store %arg4[%c32_386, %c128_387], %369 {strides = array<i32>} : memref<48x512xf32, #tpu.memory_space<vmem>>, vector<16x256xf32>,
    %c16_388 = arith.constant 16 : index
    %c111_389 = arith.constant 111 : index
    %371 = vector.load %arg4[%c16_388, %c111_389] : memref<48x512xf32, #tpu.memory_space<vmem>>, vector<16x256xf32>
    %372 = arith.truncf %371 : vector<16x256xf32> to vector<16x256xbf16>
    %c0_390 = arith.constant 0 : index
    %c0_391 = arith.constant 0 : index
    %373 = vector.load %arg5[%c0_390, %c0_391] : memref<144x256xbf16, #tpu.memory_space<vmem>>, vector<16x256xbf16>
    tpu.vector_store %arg5[%c0_390, %c0_391], %372 {strides = array<i32>} : memref<144x256xbf16, #tpu.memory_space<vmem>>, vector<16x256xbf16>,
    %c0_392 = arith.constant 0 : index
    %c112_393 = arith.constant 112 : index
    %374 = vector.load %arg4[%c0_392, %c112_393] : memref<48x512xf32, #tpu.memory_space<vmem>>, vector<16x256xf32>
    %375 = arith.truncf %374 : vector<16x256xf32> to vector<16x256xbf16>
    %c16_394 = arith.constant 16 : index
    %c0_395 = arith.constant 0 : index
    %376 = vector.load %arg5[%c16_394, %c0_395] : memref<144x256xbf16, #tpu.memory_space<vmem>>, vector<16x256xbf16>
    tpu.vector_store %arg5[%c16_394, %c0_395], %375 {strides = array<i32>} : memref<144x256xbf16, #tpu.memory_space<vmem>>, vector<16x256xbf16>,
    %c32_396 = arith.constant 32 : index
    %c113_397 = arith.constant 113 : index
    %377 = vector.load %arg4[%c32_396, %c113_397] : memref<48x512xf32, #tpu.memory_space<vmem>>, vector<16x256xf32>
    %378 = arith.truncf %377 : vector<16x256xf32> to vector<16x256xbf16>
    %c32_398 = arith.constant 32 : index
    %c0_399 = arith.constant 0 : index
    %379 = vector.load %arg5[%c32_398, %c0_399] : memref<144x256xbf16, #tpu.memory_space<vmem>>, vector<16x256xbf16>
    tpu.vector_store %arg5[%c32_398, %c0_399], %378 {strides = array<i32>} : memref<144x256xbf16, #tpu.memory_space<vmem>>, vector<16x256xbf16>,
    %c16_400 = arith.constant 16 : index
    %c127_401 = arith.constant 127 : index
    %380 = vector.load %arg4[%c16_400, %c127_401] : memref<48x512xf32, #tpu.memory_space<vmem>>, vector<16x256xf32>
    %381 = arith.truncf %380 : vector<16x256xf32> to vector<16x256xbf16>
    %c48_402 = arith.constant 48 : index
    %c0_403 = arith.constant 0 : index
    %382 = vector.load %arg5[%c48_402, %c0_403] : memref<144x256xbf16, #tpu.memory_space<vmem>>, vector<16x256xbf16>
    tpu.vector_store %arg5[%c48_402, %c0_403], %381 {strides = array<i32>} : memref<144x256xbf16, #tpu.memory_space<vmem>>, vector<16x256xbf16>,
    %c0_404 = arith.constant 0 : index
    %c128_405 = arith.constant 128 : index
    %383 = vector.load %arg4[%c0_404, %c128_405] : memref<48x512xf32, #tpu.memory_space<vmem>>, vector<16x256xf32>
    %384 = arith.truncf %383 : vector<16x256xf32> to vector<16x256xbf16>
    %c64_406 = arith.constant 64 : index
    %c0_407 = arith.constant 0 : index
    %385 = vector.load %arg5[%c64_406, %c0_407] : memref<144x256xbf16, #tpu.memory_space<vmem>>, vector<16x256xbf16>
    tpu.vector_store %arg5[%c64_406, %c0_407], %384 {strides = array<i32>} : memref<144x256xbf16, #tpu.memory_space<vmem>>, vector<16x256xbf16>,
    %c32_408 = arith.constant 32 : index
    %c129_409 = arith.constant 129 : index
    %386 = vector.load %arg4[%c32_408, %c129_409] : memref<48x512xf32, #tpu.memory_space<vmem>>, vector<16x256xf32>
    %387 = arith.truncf %386 : vector<16x256xf32> to vector<16x256xbf16>
    %c80_410 = arith.constant 80 : index
    %c0_411 = arith.constant 0 : index
    %388 = vector.load %arg5[%c80_410, %c0_411] : memref<144x256xbf16, #tpu.memory_space<vmem>>, vector<16x256xbf16>
    tpu.vector_store %arg5[%c80_410, %c0_411], %387 {strides = array<i32>} : memref<144x256xbf16, #tpu.memory_space<vmem>>, vector<16x256xbf16>,
    %c16_412 = arith.constant 16 : index
    %c143_413 = arith.constant 143 : index
    %389 = vector.load %arg4[%c16_412, %c143_413] : memref<48x512xf32, #tpu.memory_space<vmem>>, vector<16x256xf32>
    %390 = arith.truncf %389 : vector<16x256xf32> to vector<16x256xbf16>
    %c96_414 = arith.constant 96 : index
    %c0_415 = arith.constant 0 : index
    %391 = vector.load %arg5[%c96_414, %c0_415] : memref<144x256xbf16, #tpu.memory_space<vmem>>, vector<16x256xbf16>
    tpu.vector_store %arg5[%c96_414, %c0_415], %390 {strides = array<i32>} : memref<144x256xbf16, #tpu.memory_space<vmem>>, vector<16x256xbf16>,
    %c0_416 = arith.constant 0 : index
    %c144_417 = arith.constant 144 : index
    %392 = vector.load %arg4[%c0_416, %c144_417] : memref<48x512xf32, #tpu.memory_space<vmem>>, vector<16x256xf32>
    %393 = arith.truncf %392 : vector<16x256xf32> to vector<16x256xbf16>
    %c112_418 = arith.constant 112 : index
    %c0_419 = arith.constant 0 : index
    %394 = vector.load %arg5[%c112_418, %c0_419] : memref<144x256xbf16, #tpu.memory_space<vmem>>, vector<16x256xbf16>
    tpu.vector_store %arg5[%c112_418, %c0_419], %393 {strides = array<i32>} : memref<144x256xbf16, #tpu.memory_space<vmem>>, vector<16x256xbf16>,
    %c32_420 = arith.constant 32 : index
    %c145_421 = arith.constant 145 : index
    %395 = vector.load %arg4[%c32_420, %c145_421] : memref<48x512xf32, #tpu.memory_space<vmem>>, vector<16x256xf32>
    %396 = arith.truncf %395 : vector<16x256xf32> to vector<16x256xbf16>
    %c128_422 = arith.constant 128 : index
    %c0_423 = arith.constant 0 : index
    %397 = vector.load %arg5[%c128_422, %c0_423] : memref<144x256xbf16, #tpu.memory_space<vmem>>, vector<16x256xbf16>
    tpu.vector_store %arg5[%c128_422, %c0_423], %396 {strides = array<i32>} : memref<144x256xbf16, #tpu.memory_space<vmem>>, vector<16x256xbf16>,
    %c88_424 = arith.constant 88 : index
    %c0_425 = arith.constant 0 : index
    %398 = vector.load %arg2[%c88_424, %c0_425] : memref<128x144xbf16, #tpu.memory_space<vmem>>, vector<8x144xbf16>
    %c0_426 = arith.constant 0 : index
    %c0_427 = arith.constant 0 : index
    %399 = vector.load %arg5[%c0_426, %c0_427] : memref<144x256xbf16, #tpu.memory_space<vmem>>, vector<144x256xbf16>
    %cst_428 = arith.constant dense<0.000000e+00> : vector<8x256xf32>
    %400 = tpu.matmul %398, %399, %cst_428 {dimension_numbers = #tpu.dot_dimension_numbers<[1], [0], [0], [1], [0, 0, 1, 1], [], []>} : vector<8x144xbf16>, vector<144x256xbf16>, vector<8x256xf32> -> vector<8x256xf32>
    %401 = arith.mulf %400, %51 : vector<8x256xf32>
    %c0_429 = arith.constant 0 : index
    %c128_430 = arith.constant 128 : index
    %402 = vector.load %arg4[%c0_429, %c128_430] : memref<48x512xf32, #tpu.memory_space<vmem>>, vector<8x256xf32>
    tpu.vector_store %arg4[%c0_429, %c128_430], %401 {strides = array<i32>} : memref<48x512xf32, #tpu.memory_space<vmem>>, vector<8x256xf32>,
    %403 = vector.extract_strided_slice %20 {offsets = [0, 0], sizes = [8, 256], strides = [1, 1]} : vector<16x256xf32> to vector<8x256xf32>
    %404 = arith.mulf %401, %403 : vector<8x256xf32>
    %c16_431 = arith.constant 16 : index
    %c128_432 = arith.constant 128 : index
    %405 = vector.load %arg4[%c16_431, %c128_432] : memref<48x512xf32, #tpu.memory_space<vmem>>, vector<8x256xf32>
    tpu.vector_store %arg4[%c16_431, %c128_432], %404 {strides = array<i32>} : memref<48x512xf32, #tpu.memory_space<vmem>>, vector<8x256xf32>,
    %406 = vector.extract_strided_slice %24 {offsets = [0, 0], sizes = [8, 256], strides = [1, 1]} : vector<16x256xf32> to vector<8x256xf32>
    %407 = arith.mulf %401, %406 : vector<8x256xf32>
    %c32_433 = arith.constant 32 : index
    %c128_434 = arith.constant 128 : index
    %408 = vector.load %arg4[%c32_433, %c128_434] : memref<48x512xf32, #tpu.memory_space<vmem>>, vector<8x256xf32>
    tpu.vector_store %arg4[%c32_433, %c128_434], %407 {strides = array<i32>} : memref<48x512xf32, #tpu.memory_space<vmem>>, vector<8x256xf32>,
    %c16_435 = arith.constant 16 : index
    %c111_436 = arith.constant 111 : index
    %409 = vector.load %arg4[%c16_435, %c111_436] : memref<48x512xf32, #tpu.memory_space<vmem>>, vector<8x256xf32>
    %410 = arith.truncf %409 : vector<8x256xf32> to vector<8x256xbf16>
    %c0_437 = arith.constant 0 : index
    %c0_438 = arith.constant 0 : index
    %411 = vector.load %arg5[%c0_437, %c0_438] : memref<144x256xbf16, #tpu.memory_space<vmem>>, vector<8x256xbf16>
    tpu.vector_store %arg5[%c0_437, %c0_438], %410 {strides = array<i32>} : memref<144x256xbf16, #tpu.memory_space<vmem>>, vector<8x256xbf16>,
    %c0_439 = arith.constant 0 : index
    %c112_440 = arith.constant 112 : index
    %412 = vector.load %arg4[%c0_439, %c112_440] : memref<48x512xf32, #tpu.memory_space<vmem>>, vector<8x256xf32>
    %413 = arith.truncf %412 : vector<8x256xf32> to vector<8x256xbf16>
    %c8_441 = arith.constant 8 : index
    %c0_442 = arith.constant 0 : index
    %414 = vector.load %arg5[%c8_441, %c0_442] : memref<144x256xbf16, #tpu.memory_space<vmem>>, vector<8x256xbf16>
    tpu.vector_store %arg5[%c8_441, %c0_442], %413 {strides = array<i32>} : memref<144x256xbf16, #tpu.memory_space<vmem>>, vector<8x256xbf16>,
    %c32_443 = arith.constant 32 : index
    %c113_444 = arith.constant 113 : index
    %415 = vector.load %arg4[%c32_443, %c113_444] : memref<48x512xf32, #tpu.memory_space<vmem>>, vector<8x256xf32>
    %416 = arith.truncf %415 : vector<8x256xf32> to vector<8x256xbf16>
    %c16_445 = arith.constant 16 : index
    %c0_446 = arith.constant 0 : index
    %417 = vector.load %arg5[%c16_445, %c0_446] : memref<144x256xbf16, #tpu.memory_space<vmem>>, vector<8x256xbf16>
    tpu.vector_store %arg5[%c16_445, %c0_446], %416 {strides = array<i32>} : memref<144x256xbf16, #tpu.memory_space<vmem>>, vector<8x256xbf16>,
    %c16_447 = arith.constant 16 : index
    %c127_448 = arith.constant 127 : index
    %418 = vector.load %arg4[%c16_447, %c127_448] : memref<48x512xf32, #tpu.memory_space<vmem>>, vector<8x256xf32>
    %419 = arith.truncf %418 : vector<8x256xf32> to vector<8x256xbf16>
    %c24_449 = arith.constant 24 : index
    %c0_450 = arith.constant 0 : index
    %420 = vector.load %arg5[%c24_449, %c0_450] : memref<144x256xbf16, #tpu.memory_space<vmem>>, vector<8x256xbf16>
    tpu.vector_store %arg5[%c24_449, %c0_450], %419 {strides = array<i32>} : memref<144x256xbf16, #tpu.memory_space<vmem>>, vector<8x256xbf16>,
    %c0_451 = arith.constant 0 : index
    %c128_452 = arith.constant 128 : index
    %421 = vector.load %arg4[%c0_451, %c128_452] : memref<48x512xf32, #tpu.memory_space<vmem>>, vector<8x256xf32>
    %422 = arith.truncf %421 : vector<8x256xf32> to vector<8x256xbf16>
    %c32_453 = arith.constant 32 : index
    %c0_454 = arith.constant 0 : index
    %423 = vector.load %arg5[%c32_453, %c0_454] : memref<144x256xbf16, #tpu.memory_space<vmem>>, vector<8x256xbf16>
    tpu.vector_store %arg5[%c32_453, %c0_454], %422 {strides = array<i32>} : memref<144x256xbf16, #tpu.memory_space<vmem>>, vector<8x256xbf16>,
    %c32_455 = arith.constant 32 : index
    %c129_456 = arith.constant 129 : index
    %424 = vector.load %arg4[%c32_455, %c129_456] : memref<48x512xf32, #tpu.memory_space<vmem>>, vector<8x256xf32>
    %425 = arith.truncf %424 : vector<8x256xf32> to vector<8x256xbf16>
    %c40_457 = arith.constant 40 : index
    %c0_458 = arith.constant 0 : index
    %426 = vector.load %arg5[%c40_457, %c0_458] : memref<144x256xbf16, #tpu.memory_space<vmem>>, vector<8x256xbf16>
    tpu.vector_store %arg5[%c40_457, %c0_458], %425 {strides = array<i32>} : memref<144x256xbf16, #tpu.memory_space<vmem>>, vector<8x256xbf16>,
    %c16_459 = arith.constant 16 : index
    %c143_460 = arith.constant 143 : index
    %427 = vector.load %arg4[%c16_459, %c143_460] : memref<48x512xf32, #tpu.memory_space<vmem>>, vector<8x256xf32>
    %428 = arith.truncf %427 : vector<8x256xf32> to vector<8x256xbf16>
    %c48_461 = arith.constant 48 : index
    %c0_462 = arith.constant 0 : index
    %429 = vector.load %arg5[%c48_461, %c0_462] : memref<144x256xbf16, #tpu.memory_space<vmem>>, vector<8x256xbf16>
    tpu.vector_store %arg5[%c48_461, %c0_462], %428 {strides = array<i32>} : memref<144x256xbf16, #tpu.memory_space<vmem>>, vector<8x256xbf16>,
    %c0_463 = arith.constant 0 : index
    %c144_464 = arith.constant 144 : index
    %430 = vector.load %arg4[%c0_463, %c144_464] : memref<48x512xf32, #tpu.memory_space<vmem>>, vector<8x256xf32>
    %431 = arith.truncf %430 : vector<8x256xf32> to vector<8x256xbf16>
    %c56_465 = arith.constant 56 : index
    %c0_466 = arith.constant 0 : index
    %432 = vector.load %arg5[%c56_465, %c0_466] : memref<144x256xbf16, #tpu.memory_space<vmem>>, vector<8x256xbf16>
    tpu.vector_store %arg5[%c56_465, %c0_466], %431 {strides = array<i32>} : memref<144x256xbf16, #tpu.memory_space<vmem>>, vector<8x256xbf16>,
    %c32_467 = arith.constant 32 : index
    %c145_468 = arith.constant 145 : index
    %433 = vector.load %arg4[%c32_467, %c145_468] : memref<48x512xf32, #tpu.memory_space<vmem>>, vector<8x256xf32>
    %434 = arith.truncf %433 : vector<8x256xf32> to vector<8x256xbf16>
    %c64_469 = arith.constant 64 : index
    %c0_470 = arith.constant 0 : index
    %435 = vector.load %arg5[%c64_469, %c0_470] : memref<144x256xbf16, #tpu.memory_space<vmem>>, vector<8x256xbf16>
    tpu.vector_store %arg5[%c64_469, %c0_470], %434 {strides = array<i32>} : memref<144x256xbf16, #tpu.memory_space<vmem>>, vector<8x256xbf16>,
    %c48_471 = arith.constant 48 : index
    %c0_472 = arith.constant 0 : index
    %436 = vector.load %arg2[%c48_471, %c0_472] : memref<128x144xbf16, #tpu.memory_space<vmem>>, vector<16x72xbf16>
    %c0_473 = arith.constant 0 : index
    %c0_474 = arith.constant 0 : index
    %437 = vector.load %arg5[%c0_473, %c0_474] : memref<144x256xbf16, #tpu.memory_space<vmem>>, vector<72x256xbf16>
    %cst_475 = arith.constant dense<0.000000e+00> : vector<16x256xf32>
    %438 = tpu.matmul %436, %437, %cst_475 {dimension_numbers = #tpu.dot_dimension_numbers<[1], [0], [0], [1], [0, 0, 1, 1], [], []>} : vector<16x72xbf16>, vector<72x256xbf16>, vector<16x256xf32> -> vector<16x256xf32>
    %439 = arith.subf %365, %438 : vector<16x256xf32>
    %440 = arith.addf %439, %286 : vector<16x256xf32>
    %cst_476 = arith.constant 0.000000e+00 : f32
    %441 = vector.broadcast %cst_476 : f32 to vector<16x256xf32>
    %442 = arith.maximumf %440, %441 : vector<16x256xf32>
    %c0_477 = arith.constant 0 : index
    %c128_478 = arith.constant 128 : index
    %443 = vector.load %arg4[%c0_477, %c128_478] : memref<48x512xf32, #tpu.memory_space<vmem>>, vector<16x256xf32>
    tpu.vector_store %arg4[%c0_477, %c128_478], %442 {strides = array<i32>} : memref<48x512xf32, #tpu.memory_space<vmem>>, vector<16x256xf32>,
    %444 = arith.mulf %442, %20 : vector<16x256xf32>
    %c16_479 = arith.constant 16 : index
    %c128_480 = arith.constant 128 : index
    %445 = vector.load %arg4[%c16_479, %c128_480] : memref<48x512xf32, #tpu.memory_space<vmem>>, vector<16x256xf32>
    tpu.vector_store %arg4[%c16_479, %c128_480], %444 {strides = array<i32>} : memref<48x512xf32, #tpu.memory_space<vmem>>, vector<16x256xf32>,
    %446 = arith.mulf %442, %24 : vector<16x256xf32>
    %c32_481 = arith.constant 32 : index
    %c128_482 = arith.constant 128 : index
    %447 = vector.load %arg4[%c32_481, %c128_482] : memref<48x512xf32, #tpu.memory_space<vmem>>, vector<16x256xf32>
    tpu.vector_store %arg4[%c32_481, %c128_482], %446 {strides = array<i32>} : memref<48x512xf32, #tpu.memory_space<vmem>>, vector<16x256xf32>,
    %c16_483 = arith.constant 16 : index
    %c111_484 = arith.constant 111 : index
    %448 = vector.load %arg4[%c16_483, %c111_484] : memref<48x512xf32, #tpu.memory_space<vmem>>, vector<16x256xf32>
    %449 = arith.truncf %448 : vector<16x256xf32> to vector<16x256xbf16>
    %c0_485 = arith.constant 0 : index
    %c0_486 = arith.constant 0 : index
    %450 = vector.load %arg5[%c0_485, %c0_486] : memref<144x256xbf16, #tpu.memory_space<vmem>>, vector<16x256xbf16>
    tpu.vector_store %arg5[%c0_485, %c0_486], %449 {strides = array<i32>} : memref<144x256xbf16, #tpu.memory_space<vmem>>, vector<16x256xbf16>,
    %c0_487 = arith.constant 0 : index
    %c112_488 = arith.constant 112 : index
    %451 = vector.load %arg4[%c0_487, %c112_488] : memref<48x512xf32, #tpu.memory_space<vmem>>, vector<16x256xf32>
    %452 = arith.truncf %451 : vector<16x256xf32> to vector<16x256xbf16>
    %c16_489 = arith.constant 16 : index
    %c0_490 = arith.constant 0 : index
    %453 = vector.load %arg5[%c16_489, %c0_490] : memref<144x256xbf16, #tpu.memory_space<vmem>>, vector<16x256xbf16>
    tpu.vector_store %arg5[%c16_489, %c0_490], %452 {strides = array<i32>} : memref<144x256xbf16, #tpu.memory_space<vmem>>, vector<16x256xbf16>,
    %c32_491 = arith.constant 32 : index
    %c113_492 = arith.constant 113 : index
    %454 = vector.load %arg4[%c32_491, %c113_492] : memref<48x512xf32, #tpu.memory_space<vmem>>, vector<16x256xf32>
    %455 = arith.truncf %454 : vector<16x256xf32> to vector<16x256xbf16>
    %c32_493 = arith.constant 32 : index
    %c0_494 = arith.constant 0 : index
    %456 = vector.load %arg5[%c32_493, %c0_494] : memref<144x256xbf16, #tpu.memory_space<vmem>>, vector<16x256xbf16>
    tpu.vector_store %arg5[%c32_493, %c0_494], %455 {strides = array<i32>} : memref<144x256xbf16, #tpu.memory_space<vmem>>, vector<16x256xbf16>,
    %c16_495 = arith.constant 16 : index
    %c127_496 = arith.constant 127 : index
    %457 = vector.load %arg4[%c16_495, %c127_496] : memref<48x512xf32, #tpu.memory_space<vmem>>, vector<16x256xf32>
    %458 = arith.truncf %457 : vector<16x256xf32> to vector<16x256xbf16>
    %c48_497 = arith.constant 48 : index
    %c0_498 = arith.constant 0 : index
    %459 = vector.load %arg5[%c48_497, %c0_498] : memref<144x256xbf16, #tpu.memory_space<vmem>>, vector<16x256xbf16>
    tpu.vector_store %arg5[%c48_497, %c0_498], %458 {strides = array<i32>} : memref<144x256xbf16, #tpu.memory_space<vmem>>, vector<16x256xbf16>,
    %c0_499 = arith.constant 0 : index
    %c128_500 = arith.constant 128 : index
    %460 = vector.load %arg4[%c0_499, %c128_500] : memref<48x512xf32, #tpu.memory_space<vmem>>, vector<16x256xf32>
    %461 = arith.truncf %460 : vector<16x256xf32> to vector<16x256xbf16>
    %c64_501 = arith.constant 64 : index
    %c0_502 = arith.constant 0 : index
    %462 = vector.load %arg5[%c64_501, %c0_502] : memref<144x256xbf16, #tpu.memory_space<vmem>>, vector<16x256xbf16>
    tpu.vector_store %arg5[%c64_501, %c0_502], %461 {strides = array<i32>} : memref<144x256xbf16, #tpu.memory_space<vmem>>, vector<16x256xbf16>,
    %c32_503 = arith.constant 32 : index
    %c129_504 = arith.constant 129 : index
    %463 = vector.load %arg4[%c32_503, %c129_504] : memref<48x512xf32, #tpu.memory_space<vmem>>, vector<16x256xf32>
    %464 = arith.truncf %463 : vector<16x256xf32> to vector<16x256xbf16>
    %c80_505 = arith.constant 80 : index
    %c0_506 = arith.constant 0 : index
    %465 = vector.load %arg5[%c80_505, %c0_506] : memref<144x256xbf16, #tpu.memory_space<vmem>>, vector<16x256xbf16>
    tpu.vector_store %arg5[%c80_505, %c0_506], %464 {strides = array<i32>} : memref<144x256xbf16, #tpu.memory_space<vmem>>, vector<16x256xbf16>,
    %c16_507 = arith.constant 16 : index
    %c143_508 = arith.constant 143 : index
    %466 = vector.load %arg4[%c16_507, %c143_508] : memref<48x512xf32, #tpu.memory_space<vmem>>, vector<16x256xf32>
    %467 = arith.truncf %466 : vector<16x256xf32> to vector<16x256xbf16>
    %c96_509 = arith.constant 96 : index
    %c0_510 = arith.constant 0 : index
    %468 = vector.load %arg5[%c96_509, %c0_510] : memref<144x256xbf16, #tpu.memory_space<vmem>>, vector<16x256xbf16>
    tpu.vector_store %arg5[%c96_509, %c0_510], %467 {strides = array<i32>} : memref<144x256xbf16, #tpu.memory_space<vmem>>, vector<16x256xbf16>,
    %c0_511 = arith.constant 0 : index
    %c144_512 = arith.constant 144 : index
    %469 = vector.load %arg4[%c0_511, %c144_512] : memref<48x512xf32, #tpu.memory_space<vmem>>, vector<16x256xf32>
    %470 = arith.truncf %469 : vector<16x256xf32> to vector<16x256xbf16>
    %c112_513 = arith.constant 112 : index
    %c0_514 = arith.constant 0 : index
    %471 = vector.load %arg5[%c112_513, %c0_514] : memref<144x256xbf16, #tpu.memory_space<vmem>>, vector<16x256xbf16>
    tpu.vector_store %arg5[%c112_513, %c0_514], %470 {strides = array<i32>} : memref<144x256xbf16, #tpu.memory_space<vmem>>, vector<16x256xbf16>,
    %c32_515 = arith.constant 32 : index
    %c145_516 = arith.constant 145 : index
    %472 = vector.load %arg4[%c32_515, %c145_516] : memref<48x512xf32, #tpu.memory_space<vmem>>, vector<16x256xf32>
    %473 = arith.truncf %472 : vector<16x256xf32> to vector<16x256xbf16>
    %c128_517 = arith.constant 128 : index
    %c0_518 = arith.constant 0 : index
    %474 = vector.load %arg5[%c128_517, %c0_518] : memref<144x256xbf16, #tpu.memory_space<vmem>>, vector<16x256xbf16>
    tpu.vector_store %arg5[%c128_517, %c0_518], %473 {strides = array<i32>} : memref<144x256xbf16, #tpu.memory_space<vmem>>, vector<16x256xbf16>,
    %c64_519 = arith.constant 64 : index
    %c0_520 = arith.constant 0 : index
    %475 = vector.load %arg2[%c64_519, %c0_520] : memref<128x144xbf16, #tpu.memory_space<vmem>>, vector<16x144xbf16>
    %c0_521 = arith.constant 0 : index
    %c0_522 = arith.constant 0 : index
    %476 = vector.load %arg5[%c0_521, %c0_522] : memref<144x256xbf16, #tpu.memory_space<vmem>>, vector<144x256xbf16>
    %cst_523 = arith.constant dense<0.000000e+00> : vector<16x256xf32>
    %477 = tpu.matmul %475, %476, %cst_523 {dimension_numbers = #tpu.dot_dimension_numbers<[1], [0], [0], [1], [0, 0, 1, 1], [], []>} : vector<16x144xbf16>, vector<144x256xbf16>, vector<16x256xf32> -> vector<16x256xf32>
    %c0_524 = arith.constant 0 : index
    %c0_525 = arith.constant 0 : index
    %c0_526 = arith.constant 0 : index
    %478 = vector.load %arg3[%c0_524, %c0_525, %c0_526] : memref<1x16x256xf32, #tpu.memory_space<vmem>>, vector<1x16x256xf32>
    %479 = vector.shape_cast %478 : vector<1x16x256xf32> to vector<16x256xf32>
    %480 = vector.shape_cast %477 : vector<16x256xf32> to vector<1x16x256xf32>
    tpu.vector_store %arg3[%c0_524, %c0_525, %c0_526], %480 {strides = array<i32>} : memref<1x16x256xf32, #tpu.memory_space<vmem>>, vector<1x16x256xf32>,
    return
  }
  func.func @transform_0(%arg0: i32) -> (i32, i32, i32) {
    %c0_i32 = arith.constant 0 : i32
    %c0_i32_0 = arith.constant 0 : i32
    %c0_i32_1 = arith.constant 0 : i32
    return %arg0, %c0_i32, %c0_i32_0 : i32, i32, i32
  }
  func.func @transform_1(%arg0: i32) -> (i32, i32) {
    %c0_i32 = arith.constant 0 : i32
    %c0_i32_0 = arith.constant 0 : i32
    %c0_i32_1 = arith.constant 0 : i32
    return %c0_i32, %c0_i32_0 : i32, i32
  }
  func.func @transform_2(%arg0: i32) -> (i32, i32, i32) {
    %c0_i32 = arith.constant 0 : i32
    %c0_i32_0 = arith.constant 0 : i32
    %c0_i32_1 = arith.constant 0 : i32
    return %arg0, %c0_i32, %c0_i32_0 : i32, i32, i32
  }
}

</mosaic_0001>

<llo_original>
// kernel: esl_backbone_forward.1
$region0: #{esl_backbone_forward.1}
  #allocation0 [shape = 'u32[]', space=smem, size = 0x4, offset = 0x4, fixed_abs, tag = 'smem constant byte address 0x4 - core index']
  #allocation1 [shape = 'u32[72,128]{1,0:T(1,128)}', space=vmem, size = 0x9000, scoped, tag = 'internal scratch']
  #allocation2 [shape = 'f32[48,512]{1,0:T(8,128)}', space=vmem, size = 0x18000, scoped, tag = 'scratch operand']
  #allocation3 [shape = 'bf16[144,256]{1,0:T(8,128)(2,1)}', space=vmem, size = 0x12000, scoped, tag = 'scratch operand']
  %s0 = inlined_call_operand.vmem [shape: f32[2,6,256], index: 0, kind: input, shape index: {}]
  %s1 = inlined_call_operand.vmem [shape: bf16[128,144], index: 1, kind: input, shape index: {}]
  %s2 = inlined_call_operand.vmem [shape: f32[2,16,256], index: 2, kind: output, shape index: {}]
  %s3 = sld [smem:[#allocation0]]
  $region41: #{esl_backbone_forward.1} parent=0
    _
  %s5 = ssub.s32 1, %s3
  %s6 = scalar_select 0, %s5, %s3
  loop: start=0, step=1, limit=4
  $region2: #{esl_backbone_forward.1} parent=0 // loop_pre_header
    _
  $region3: #{esl_backbone_forward.1} parent=0 // loop_header
    %s8 = sphi 0, %s12
    %p9 = scmp.ge.s32.totalorder %s8, 4
    %s18 = sphi 0, %s20
    %s21 = sphi 0, %s18
    %s22 = sphi 0, %s21
    %s38 = sphi 0, %s22
    %s42 = sphi 0, %s42
    %s44 = sphi 0, %s42
    %s45 = sphi 0, %s44
    %s59 = sphi 0, %s45
    %s65 = sphi 0, %s67
    %s68 = sphi 0, %s65
    %s69 = sphi 0, %s68
    %s85 = sphi 0, %s69
  $region4: #{esl_backbone_forward.1} parent=0 // loop_header_branch
    %11 = sbr.rel (%p9) target = $region8
  $region5: #{esl_backbone_forward.1} parent=0 // loop_body
    %s13 = ssub.s32 %s8, 1
    %s14 = ssub.s32 %s8, 2
    %s15 = sadd.s32 %s8, 1
    %s16 = ssub.s32 %s8, %s15
    %p17 = scmp.eq.s32.totalorder %s16, 0
    %s19 = sadd.s32 %s18, 1
    %s20 = scalar_select %p17, %s18, %s19
    %p23 = pneg %p17
    %p24 = scmp.eq.s32.totalorder %s8, 1
    %p25 = por %p23, %p24
    %p26 = scmp.ne.s32.totalorder %s18, %s21
    %p27 = scmp.eq.s32.totalorder %s8, 0
    %p28 = por %p26, %p27
    %p29 = scmp.ne.s32.totalorder %s18, %s21
    %p30 = scmp.eq.s32.totalorder %s13, 1
    %p31 = por %p29, %p30
    %p32 = scmp.ne.s32.totalorder %s21, %s22
    %p33 = scmp.eq.s32.totalorder %s13, 0
    %p34 = por %p32, %p33
    %p35 = scmp.ne.s32.totalorder %s21, %s22
    %p36 = scmp.eq.s32.totalorder %s14, 1
    %p37 = por %p35, %p36
    %p39 = scmp.ne.s32.totalorder %s22, %s38
    %p40 = scmp.eq.s32.totalorder %s14, 0
    %p41 = por %p39, %p40
    %s43 = sadd.s32 %s42, 1
    %p46 = scmp.eq.s32.totalorder %s8, 1
    %p47 = scmp.ne.s32.totalorder %s42, %s44
    %p48 = scmp.eq.s32.totalorder %s8, 0
    %p49 = por %p47, %p48
    %p50 = scmp.ne.s32.totalorder %s42, %s44
    %p51 = scmp.eq.s32.totalorder %s13, 1
    %p52 = por %p50, %p51
    %p53 = scmp.ne.s32.totalorder %s44, %s45
    %p54 = scmp.eq.s32.totalorder %s13, 0
    %p55 = por %p53, %p54
    %p56 = scmp.ne.s32.totalorder %s44, %s45
    %p57 = scmp.eq.s32.totalorder %s14, 1
    %p58 = por %p56, %p57
    %p60 = scmp.ne.s32.totalorder %s45, %s59
    %p61 = scmp.eq.s32.totalorder %s14, 0
    %p62 = por %p60, %p61
    %s63 = ssub.s32 %s8, %s15
    %p64 = scmp.eq.s32.totalorder %s63, 0
    %s66 = sadd.s32 %s65, 1
    %s67 = scalar_select %p64, %s65, %s66
    %p70 = pneg %p64
    %p71 = scmp.eq.s32.totalorder %s8, 1
    %p72 = por %p70, %p71
    %p73 = scmp.ne.s32.totalorder %s65, %s68
    %p74 = scmp.eq.s32.totalorder %s8, 0
    %p75 = por %p73, %p74
    %p76 = scmp.ne.s32.totalorder %s65, %s68
    %p77 = scmp.eq.s32.totalorder %s13, 1
    %p78 = por %p76, %p77
    %p79 = scmp.ne.s32.totalorder %s68, %s69
    %p80 = scmp.eq.s32.totalorder %s13, 0
    %p81 = por %p79, %p80
    %p82 = scmp.ne.s32.totalorder %s68, %s69
    %p83 = scmp.eq.s32.totalorder %s14, 1
    %p84 = por %p82, %p83
    %p86 = scmp.ne.s32.totalorder %s69, %s85
    %p87 = scmp.eq.s32.totalorder %s14, 0
    %p88 = por %p86, %p87
    %p89 = scmp.le.s32.totalorder 1, %s8
    %p90 = scmp.lt.s32.totalorder %s8, 3
    %p91 = pnand %p89, %p90
    %p92 = pneg %p91
    // Predicated region
    $region9: #{esl_backbone_forward.1} parent=5 // pred_check
      _
    $region10: #{esl_backbone_forward.1} parent=5 // pred_check_branch
      %94 = sbr.rel (%p91) target = $region12
    $region11: #{esl_backbone_forward.1} parent=5 // pred_region
      %s95 = ssub.s32 %s8, 1
      // Predicated region
      $region13: #{esl_backbone_forward.1} parent=11 // pred_check
        %p96 = pneg %p55
      $region14: #{esl_backbone_forward.1} parent=11 // pred_check_branch
        %98 = sbr.rel (%p96) target = $region16
      $region15: #{esl_backbone_forward.1} parent=11 // pred_region
        _
      $region16: #{esl_backbone_forward.1} parent=11 // pred_fallthru
        _
    $region12: #{esl_backbone_forward.1} parent=5 // pred_fallthru
      _
    %p99 = scmp.lt.s32.totalorder %s8, 2
    // Predicated region
    $region17: #{esl_backbone_forward.1} parent=5 // pred_check
      %p100 = pneg %p99
    $region18: #{esl_backbone_forward.1} parent=5 // pred_check_branch
      %102 = sbr.rel (%p100) target = $region20
    $region19: #{esl_backbone_forward.1} parent=5 // pred_region
      // Predicated region
      $region21: #{esl_backbone_forward.1} parent=19 // pred_check
        %p103 = pneg %p28
      $region22: #{esl_backbone_forward.1} parent=19 // pred_check_branch
        %105 = sbr.rel (%p103) target = $region24
      $region23: #{esl_backbone_forward.1} parent=19 // pred_region
        %p106 = scmp.lt.s32.totalorder %s8, 1
        %s107 = scalar_select %p106, %s8, 1
        %s108 = smul.addr %s107, 2
        %s109 = smul.addr %s108, 8
        %s110 = scalar_lea.vmem %s0, %s109
      $region24: #{esl_backbone_forward.1} parent=19 // pred_fallthru
        _
    $region20: #{esl_backbone_forward.1} parent=5 // pred_fallthru
      _
    %p111 = scmp.le.s32.totalorder 1, %s8
    %p112 = scmp.lt.s32.totalorder %s8, 3
    %p113 = pnand %p111, %p112
    %p114 = pneg %p113
    // Predicated region
    $region25: #{esl_backbone_forward.1} parent=5 // pred_check
      _
    $region26: #{esl_backbone_forward.1} parent=5 // pred_check_branch
      %116 = sbr.rel (%p113) target = $region28
    $region27: #{esl_backbone_forward.1} parent=5 // pred_region
      %s117 = ssub.s32 %s8, 1
      %p118 = scmp.lt.s32.totalorder %s13, 1
      %s119 = scalar_select %p118, %s13, 1
      %s120 = smul.addr %s119, 2
      %s121 = smul.addr %s120, 8
      %s122 = scalar_lea.vmem %s0, %s121
      %p123 = pneg %p34
      %p124 = pneg %p31
      %p125 = pneg %p55
      %p126 = pneg %p52
      %p127 = pneg %p81
      %p128 = pneg %p78
      %p129 = scmp.lt.s32.totalorder %s13, 1
      %s130 = scalar_select %p129, %s13, 1
      %s131 = smul.addr %s130, 4
      %s132 = smul.addr %s131, 8
      %s133 = scalar_lea.vmem %s2, %s132
      %p134 = scmp.lt.s32.totalorder %s13, 1
      %s135 = scalar_select %p134, %s13, 1
      %s136 = smul.addr %s135, 2
      %s137 = smul.addr %s136, 8
      %s138 = scalar_lea.vmem %s0, %s137
      %p139 = scmp.lt.s32.totalorder %s13, 1
      %s140 = scalar_select %p139, %s13, 1
      %s141 = smul.addr %s140, 4
      %s142 = smul.addr %s141, 8
      %s143 = scalar_lea.vmem %s2, %s142
      %v145 = vlaneseq
      %v146 = vand.u32 %v145, 127
      %v147 = vadd.s32 %v146, 128
      %vm148 = vcmp.lt.s32.totalorder %v146, 0
      %v149 = vsub.s32 0, %v146
      %v150 = vsel %vm148, %v149, %v146
      %v151 = vshrl.u32 %v150, 4
      %v152 = vand.u32 %v150, 15
      %v153 = vsub.s32 0, %v152
      %v154 = vsel %vm148, %v153, %v152
      %vm155 = vcmp.lt.s32.totalorder %v147, 0
      %v156 = vsub.s32 0, %v147
      %v157 = vsel %vm155, %v156, %v147
      %v158 = vshrl.u32 %v157, 4
      %v159 = vand.u32 %v157, 15
      %v160 = vsub.s32 0, %v159
      %v161 = vsel %vm155, %v160, %v159
      %vm162 = vcmp.ne.s32.totalorder %v154, 0
      %vm163 = vcmp.ne.s32.totalorder %v161, 0
      %vm164 = vcmp.lt.s32.totalorder %v154, 0
      %vm165 = vcmp.lt.s32.totalorder %v161, 0
      %vm166 = vmand %vm164, %vm162
      %vm167 = vmand %vm165, %vm163
      %v168 = vadd.s32 %v154, 16
      %v169 = vadd.s32 %v161, 16
      %v170 = vsel %vm166, %v168, %v154
      %v171 = vsel %vm167, %v169, %v161
      %vm172 = vcmp.ne.s32.totalorder %v170, 15
      %vm173 = vcmp.ne.s32.totalorder %v171, 15
      %v174 = vsel %vm172, 1, 0
      %v175 = vsel %vm173, 1, 0
      %v176 = vcvt.s32.f32 %v174
      %v177 = vcvt.s32.f32 %v175
      %vm178 = vcmp.ne.s32.totalorder %v170, 0
      %vm179 = vcmp.ne.s32.totalorder %v171, 0
      %v180 = vsel %vm178, 1, 0
      %v181 = vsel %vm179, 1, 0
      %v182 = vcvt.s32.f32 %v180
      %v183 = vcvt.s32.f32 %v181
      %vm184 = vcmask 1048320
      %185 = vst.msk [vmem:[#allocation2] sm:$0xff] %vm184, 0.0
      %186 = vst.msk [vmem:[#allocation2 + $0x20] sm:$0xff] %vm184, 0.0
      %187 = vst.msk [vmem:[#allocation2 + $0x40] sm:$0xff] %vm184, 0.0
      %188 = vst.msk [vmem:[#allocation2 + $0x60] sm:$0xff] %vm184, 0.0
      %189 = vst.msk [vmem:[#allocation2 + $0x80] sm:$0xff] %vm184, 0.0
      %190 = vst.msk [vmem:[#allocation2 + $0xa0] sm:$0xff] %vm184, 0.0
      %vm191 = vcmask 261120
      %192 = vst.msk [vmem:[#allocation2 + $0x18] sm:$0xff] %vm191, 0.0
      %193 = vst.msk [vmem:[#allocation2 + $0x38] sm:$0xff] %vm191, 0.0
      %194 = vst.msk [vmem:[#allocation2 + $0x58] sm:$0xff] %vm191, 0.0
      %195 = vst.msk [vmem:[#allocation2 + $0x78] sm:$0xff] %vm191, 0.0
      %196 = vst.msk [vmem:[#allocation2 + $0x98] sm:$0xff] %vm191, 0.0
      %197 = vst.msk [vmem:[#allocation2 + $0xb8] sm:$0xff] %vm191, 0.0
      %v198 = vld [vmem:[%s138] sm:$0x3f]
      %v199 = vld [vmem:[%s138 + $0x8] sm:$0x3f]
      %v200 = vld [vmem:[%s1 + $0x68] sm:$0xf]
      %v201 = vpack.c.bf16 %v198, %v198
      %v202 = vpack.c.bf16 %v199, %v199
      %vm203 = vcmask 15360
      %v205 = vsel %vm203, %v200, 0
      %vm207 = vcmask 1040384
      %v209 = vsel %vm207, %v201, 0
      %v212 = vsel %vm207, %v202, 0
      %214 = vmatpush.bf16.msra.mxu0 0
      %215 = vmatpush.bf16.msra.mxu0 0
      %216 = vmatpush.bf16.msra.mxu0 0
      %217 = vmatpush.bf16.msra.mxu0 0
      %218 = vmatpush.bf16.msra.mxu0 0
      %219 = vmatpush.bf16.msra.mxu0 0
      %220 = vmatpush.bf16.msra.mxu0 0
      %221 = vmatpush.bf16.msra.mxu0 %v209
      %222 = vmatmul.bf16.gmra.mxu0 %v205
      %v223 = vpop.f32.mrf.mxu0
      %v224 = vadd.f32 0.0, %v223
      %v225 = vpop.f32.mrf.mxu0
      %226 = vdwg.mxu0
      %227 = vmatpush.bf16.msra.mxu0 0
      %228 = vmatpush.bf16.msra.mxu0 0
      %229 = vmatpush.bf16.msra.mxu0 0
      %230 = vmatpush.bf16.msra.mxu0 0
      %231 = vmatpush.bf16.msra.mxu0 0
      %232 = vmatpush.bf16.msra.mxu0 0
      %233 = vmatpush.bf16.msra.mxu0 0
      %234 = vmatpush.bf16.msra.mxu0 %v212
      %235 = vmatmul.bf16.gmra.mxu0 %v205
      %v236 = vpop.f32.mrf.mxu0
      %v237 = vadd.f32 0.0, %v236
      %v238 = vpop.f32.mrf.mxu0
      %239 = vdwg.mxu0
      %v240 = vld [vmem:[%s1 + $0x70] sm:$0xf]
      %v243 = vrot.slane %v201, 1
      %v244 = vrot.slane %v202, 1
      %vm245 = vcmask 31744
      %v247 = vsel %vm245, %v240, 0
      %vm249 = vcmask 1041408
      %v251 = vsel %vm249, %v243, 0
      %v254 = vsel %vm249, %v244, 0
      %256 = vmatpush.bf16.msra.mxu0 0
      %257 = vmatpush.bf16.msra.mxu0 0
      %258 = vmatpush.bf16.msra.mxu0 0
      %259 = vmatpush.bf16.msra.mxu0 0
      %260 = vmatpush.bf16.msra.mxu0 0
      %261 = vmatpush.bf16.msra.mxu0 0
      %262 = vmatpush.bf16.msra.mxu0 0
      %263 = vmatpush.bf16.msra.mxu0 %v251
      %264 = vmatmul.bf16.gmra.mxu0 %v247
      %v265 = vpop.f32.mrf.mxu0
      %v266 = vadd.f32 0.0, %v265
      %v267 = vpop.f32.mrf.mxu0
      %268 = vdwg.mxu0
      %269 = vmatpush.bf16.msra.mxu0 0
      %270 = vmatpush.bf16.msra.mxu0 0
      %271 = vmatpush.bf16.msra.mxu0 0
      %272 = vmatpush.bf16.msra.mxu0 0
      %273 = vmatpush.bf16.msra.mxu0 0
      %274 = vmatpush.bf16.msra.mxu0 0
      %275 = vmatpush.bf16.msra.mxu0 0
      %276 = vmatpush.bf16.msra.mxu0 %v254
      %277 = vmatmul.bf16.gmra.mxu0 %v247
      %v278 = vpop.f32.mrf.mxu0
      %v279 = vadd.f32 0.0, %v278
      %v280 = vpop.f32.mrf.mxu0
      %281 = vdwg.mxu0
      %v282 = vxor.u32 %v266, 2147483648
      %v283 = vxor.u32 %v279, 2147483648
      %v284 = vmul.f32 %v282, 1.442695
      %v285 = vpow.pop %v284
      %v286 = vmul.f32 %v283, 1.442695
      %v287 = vpow.pop %v286
      %v288 = vadd.f32 %v285, 1.0
      %v289 = vadd.f32 %v287, 1.0
      %v290 = vrcp.pop %v288
      %v291 = vmul.f32 %v288, %v290
      %v292 = vsub.f32 1.0, %v291
      %v293 = vmul.f32 %v290, %v292
      %v294 = vadd.f32 %v290, %v293
      %vm295 = vweird.f32 %v288
      %vm296 = vweird.f32 %v290
      %vm297 = vmor %vm295, %vm296
      %v298 = vsel %vm297, %v290, %v294
      %v299 = vand.u32 2147483647, %v288
      %vm300 = vcmp.eq.f32.partialorder %v299, 8.507059e+37
      %v301 = vand.u32 %v288, 2147483648
      %v302 = vor.u32 1.1754944e-38, %v301
      %v303 = vsel %vm300, %v302, %v298
      %v304 = vmul.f32 1.0, %v303
      %v305 = vrcp.pop %v289
      %v306 = vmul.f32 %v289, %v305
      %v307 = vsub.f32 1.0, %v306
      %v308 = vmul.f32 %v305, %v307
      %v309 = vadd.f32 %v305, %v308
      %vm310 = vweird.f32 %v289
      %vm311 = vweird.f32 %v305
      %vm312 = vmor %vm310, %vm311
      %v313 = vsel %vm312, %v305, %v309
      %v314 = vand.u32 2147483647, %v289
      %vm315 = vcmp.eq.f32.partialorder %v314, 8.507059e+37
      %v316 = vand.u32 %v289, 2147483648
      %v317 = vor.u32 1.1754944e-38, %v316
      %v318 = vsel %vm315, %v317, %v313
      %v319 = vmul.f32 1.0, %v318
      %v320 = vld [vmem:[%s1 + $0x78] sm:$0xf]
      %v321 = vpack.c.bf16 %v304, %v304
      %v322 = vpack.c.bf16 %v319, %v319
      %vm323 = vcmask 64512
      %v325 = vsel %vm323, %v320, 0
      %vm327 = vcmask 1043456
      %v329 = vsel %vm327, %v321, 0
      %v332 = vsel %vm327, %v322, 0
      %334 = vmatpush.bf16.msra.mxu0 0
      %335 = vmatpush.bf16.msra.mxu0 0
      %336 = vmatpush.bf16.msra.mxu0 0
      %337 = vmatpush.bf16.msra.mxu0 0
      %338 = vmatpush.bf16.msra.mxu0 0
      %339 = vmatpush.bf16.msra.mxu0 0
      %340 = vmatpush.bf16.msra.mxu0 0
      %341 = vmatpush.bf16.msra.mxu0 %v329
      %342 = vmatmul.bf16.gmra.mxu0 %v325
      %v343 = vpop.f32.mrf.mxu0
      %v344 = vadd.f32 0.0, %v343
      %v345 = vpop.f32.mrf.mxu0
      %346 = vdwg.mxu0
      %347 = vmatpush.bf16.msra.mxu0 0
      %348 = vmatpush.bf16.msra.mxu0 0
      %349 = vmatpush.bf16.msra.mxu0 0
      %350 = vmatpush.bf16.msra.mxu0 0
      %351 = vmatpush.bf16.msra.mxu0 0
      %352 = vmatpush.bf16.msra.mxu0 0
      %353 = vmatpush.bf16.msra.mxu0 0
      %354 = vmatpush.bf16.msra.mxu0 %v332
      %355 = vmatmul.bf16.gmra.mxu0 %v325
      %v356 = vpop.f32.mrf.mxu0
      %v357 = vadd.f32 0.0, %v356
      %v358 = vpop.f32.mrf.mxu0
      %359 = vdwg.mxu0
      %v360 = vxor.u32 %v344, 2147483648
      %v361 = vxor.u32 %v357, 2147483648
      %v362 = vmul.f32 %v360, 1.442695
      %v363 = vpow.pop %v362
      %v364 = vmul.f32 %v361, 1.442695
      %v365 = vpow.pop %v364
      %v366 = vadd.f32 %v363, 1.0
      %v367 = vadd.f32 %v365, 1.0
      %v368 = vrcp.pop %v366
      %v369 = vmul.f32 %v366, %v368
      %v370 = vsub.f32 1.0, %v369
      %v371 = vmul.f32 %v368, %v370
      %v372 = vadd.f32 %v368, %v371
      %vm373 = vweird.f32 %v366
      %vm374 = vweird.f32 %v368
      %vm375 = vmor %vm373, %vm374
      %v376 = vsel %vm375, %v368, %v372
      %v377 = vand.u32 2147483647, %v366
      %vm378 = vcmp.eq.f32.partialorder %v377, 8.507059e+37
      %v379 = vand.u32 %v366, 2147483648
      %v380 = vor.u32 1.1754944e-38, %v379
      %v381 = vsel %vm378, %v380, %v376
      %v382 = vmul.f32 1.0, %v381
      %v383 = vrcp.pop %v367
      %v384 = vmul.f32 %v367, %v383
      %v385 = vsub.f32 1.0, %v384
      %v386 = vmul.f32 %v383, %v385
      %v387 = vadd.f32 %v383, %v386
      %vm388 = vweird.f32 %v367
      %vm389 = vweird.f32 %v383
      %vm390 = vmor %vm388, %vm389
      %v391 = vsel %vm390, %v383, %v387
      %v392 = vand.u32 2147483647, %v367
      %vm393 = vcmp.eq.f32.partialorder %v392, 8.507059e+37
      %v394 = vand.u32 %v367, 2147483648
      %v395 = vor.u32 1.1754944e-38, %v394
      %v396 = vsel %vm393, %v395, %v391
      %v397 = vmul.f32 1.0, %v396
      %v398 = vmul.f32 %v382, %v382
      %v399 = vmul.f32 %v397, %v397
      %v400 = vmul.f32 %v224, %v382
      %v401 = vmul.f32 %v237, %v397
      %402 = vst [vmem:[#allocation2 + $0x8] sm:$0xff] %v400
      %403 = vst [vmem:[#allocation2 + $0x10] sm:$0xff] %v401
      %v404 = vmul.f32 %v400, %v176
      %v405 = vmul.f32 %v401, %v177
      %406 = vst [vmem:[#allocation2 + $0x48] sm:$0xff] %v404
      %407 = vst [vmem:[#allocation2 + $0x50] sm:$0xff] %v405
      %v408 = vmul.f32 %v400, %v182
      %v409 = vmul.f32 %v401, %v183
      %410 = vst [vmem:[#allocation2 + $0x88] sm:$0xff] %v408
      %411 = vst [vmem:[#allocation2 + $0x90] sm:$0xff] %v409
      %v412 = vld [vmem:[#allocation2 + $0x40] sm:$0xff]
      %v413 = vld [vmem:[#allocation2 + $0x48] sm:$0xff]
      %v414 = vld [vmem:[#allocation2 + $0x50] sm:$0xff]
      %v415 = vpack.c.bf16 %v413, %v412
      %v416 = vpack.c.bf16 %v414, %v414
      %419 = vrot.lane.b32.xlu0 %v415, 17
      %v420 = vpop.permute.xlu0 %419
      %421 = vrot.lane.b32.xlu0 %v416, 17
      %v422 = vpop.permute.xlu0 %421
      %v423 = vrot.slane %v420, 4
      %v424 = vrot.slane %v422, 4
      %vm425 = vcmask 1043456
      %v426 = vsel %vm425, %v423, %v424
      %vm427 = vcmask 138240
      %v428 = vsel %vm427, %v420, %v426
      %430 = vst [vmem:[#allocation3] sm:$0xff] %v428
      %v431 = vld [vmem:[#allocation2] sm:$0xff]
      %v432 = vld [vmem:[#allocation2 + $0x8] sm:$0xff]
      %v433 = vld [vmem:[#allocation2 + $0x10] sm:$0xff]
      %v434 = vpack.c.bf16 %v432, %v431
      %v435 = vpack.c.bf16 %v433, %v433
      %438 = vrot.lane.b32.xlu0 %v434, 16
      %v439 = vpop.permute.xlu0 %438
      %440 = vrot.lane.b32.xlu0 %v435, 16
      %v441 = vpop.permute.xlu0 %440
      %v442 = vrot.slane %v439, 4
      %v443 = vrot.slane %v441, 4
      %v444 = vsel %vm425, %v442, %v443
      %vm445 = vcmask 130048
      %v446 = vsel %vm445, %v439, %v444
      %448 = vst [vmem:[#allocation3 + $0x8] sm:$0xff] %v446
      %v449 = vld [vmem:[#allocation2 + $0x80] sm:$0xff]
      %v450 = vld [vmem:[#allocation2 + $0x88] sm:$0xff]
      %v451 = vld [vmem:[#allocation2 + $0x90] sm:$0xff]
      %v452 = vpack.c.bf16 %v450, %v449
      %v453 = vpack.c.bf16 %v451, %v451
      %456 = vrot.lane.b32.xlu0 %v452, 15
      %v457 = vpop.permute.xlu0 %456
      %458 = vrot.lane.b32.xlu0 %v453, 15
      %v459 = vpop.permute.xlu0 %458
      %v460 = vrot.slane %v457, 4
      %v461 = vrot.slane %v459, 4
      %v462 = vsel %vm425, %v460, %v461
      %vm463 = vcmask 121856
      %v464 = vsel %vm463, %v457, %v462
      %466 = vst [vmem:[#allocation3 + $0x10] sm:$0xff] %v464
      %v467 = vld [vmem:[#allocation2 + $0x40] sm:$0xff]
      %v468 = vld [vmem:[#allocation2 + $0x48] sm:$0xff]
      %v469 = vld [vmem:[#allocation2 + $0x50] sm:$0xff]
      %v470 = vpack.c.bf16 %v468, %v467
      %v471 = vpack.c.bf16 %v469, %v469
      %474 = vrot.lane.b32.xlu0 %v470, 1
      %v475 = vpop.permute.xlu0 %474
      %476 = vrot.lane.b32.xlu0 %v471, 1
      %v477 = vpop.permute.xlu0 %476
      %v478 = vrot.slane %v475, 4
      %v479 = vrot.slane %v477, 4
      %v480 = vsel %vm425, %v478, %v479
      %vm481 = vcmask 7168
      %v482 = vsel %vm481, %v475, %v480
      %484 = vst [vmem:[#allocation3 + $0x18] sm:$0xff] %v482
      %v485 = vld [vmem:[#allocation2 + $0x8] sm:$0xff]
      %v486 = vld [vmem:[#allocation2 + $0x10] sm:$0xff]
      %v487 = vpack.c.bf16 %v486, %v485
      %488 = vst [vmem:[#allocation3 + $0x20] sm:$0xff] %v487
      %v489 = vld [vmem:[#allocation2 + $0x88] sm:$0xff]
      %v490 = vld [vmem:[#allocation2 + $0x90] sm:$0xff]
      %v491 = vld [vmem:[#allocation2 + $0x98] sm:$0xff]
      %v492 = vpack.c.bf16 %v490, %v489
      %v493 = vpack.c.bf16 %v491, %v491
      %496 = vrot.lane.b32.xlu0 %v492, 127
      %v497 = vpop.permute.xlu0 %496
      %498 = vrot.lane.b32.xlu0 %v493, 127
      %v499 = vpop.permute.xlu0 %498
      %v500 = vrot.slane %v497, 4
      %v501 = vrot.slane %v499, 4
      %v502 = vsel %vm425, %v500, %v501
      %vm503 = vcmask 1039360
      %v504 = vsel %vm503, %v497, %v502
      %506 = vst [vmem:[#allocation3 + $0x28] sm:$0xff] %v504
      %v507 = vld [vmem:[#allocation2 + $0x48] sm:$0xff]
      %v508 = vld [vmem:[#allocation2 + $0x50] sm:$0xff]
      %v509 = vld [vmem:[#allocation2 + $0x58] sm:$0xff]
      %v510 = vpack.c.bf16 %v508, %v507
      %v511 = vpack.c.bf16 %v509, %v509
      %514 = vrot.lane.b32.xlu0 %v510, 113
      %v515 = vpop.permute.xlu0 %514
      %516 = vrot.lane.b32.xlu0 %v511, 113
      %v517 = vpop.permute.xlu0 %516
      %v518 = vrot.slane %v515, 4
      %v519 = vrot.slane %v517, 4
      %v520 = vsel %vm425, %v518, %v519
      %vm521 = vcmask 924672
      %v522 = vsel %vm521, %v515, %v520
      %524 = vst [vmem:[#allocation3 + $0x30] sm:$0xff] %v522
      %v525 = vld [vmem:[#allocation2 + $0x8] sm:$0xff]
      %v526 = vld [vmem:[#allocation2 + $0x10] sm:$0xff]
      %v527 = vld [vmem:[#allocation2 + $0x18] sm:$0xff]
      %v528 = vpack.c.bf16 %v526, %v525
      %v529 = vpack.c.bf16 %v527, %v527
      %532 = vrot.lane.b32.xlu0 %v528, 112
      %v533 = vpop.permute.xlu0 %532
      %534 = vrot.lane.b32.xlu0 %v529, 112
      %v535 = vpop.permute.xlu0 %534
      %v536 = vrot.slane %v533, 4
      %v537 = vrot.slane %v535, 4
      %v538 = vsel %vm425, %v536, %v537
      %vm539 = vcmask 916480
      %v540 = vsel %vm539, %v533, %v538
      %542 = vst [vmem:[#allocation3 + $0x38] sm:$0xff] %v540
      %v543 = vld [vmem:[#allocation2 + $0x88] sm:$0xff]
      %v544 = vld [vmem:[#allocation2 + $0x90] sm:$0xff]
      %v545 = vld [vmem:[#allocation2 + $0x98] sm:$0xff]
      %v546 = vpack.c.bf16 %v544, %v543
      %v547 = vpack.c.bf16 %v545, %v545
      %550 = vrot.lane.b32.xlu0 %v546, 111
      %v551 = vpop.permute.xlu0 %550
      %552 = vrot.lane.b32.xlu0 %v547, 111
      %v553 = vpop.permute.xlu0 %552
      %v554 = vrot.slane %v551, 4
      %v555 = vrot.slane %v553, 4
      %v556 = vsel %vm425, %v554, %v555
      %vm557 = vcmask 908288
      %v558 = vsel %vm557, %v551, %v556
      %560 = vst [vmem:[#allocation3 + $0x40] sm:$0xff] %v558
      %v561 = vld [vmem:[%s1] sm:$0xf]
      %v562 = vld [vmem:[%s1 + $0x8] sm:$0xf]
      %v563 = vld [vmem:[#allocation3] sm:$0xff]
      %v564 = vld [vmem:[#allocation3 + $0x8] sm:$0xff]
      %v565 = vld [vmem:[#allocation3 + $0x10] sm:$0xff]
      %v566 = vld [vmem:[#allocation3 + $0x18] sm:$0xff]
      %v567 = vld [vmem:[#allocation3 + $0x20] sm:$0xff]
      %v568 = vld [vmem:[#allocation3 + $0x28] sm:$0xff]
      %v569 = vld [vmem:[#allocation3 + $0x30] sm:$0xff]
      %v570 = vld [vmem:[#allocation3 + $0x38] sm:$0xff]
      %v571 = vld [vmem:[#allocation3 + $0x40] sm:$0xff]
      %v574 = vunpack.c.l.b16 %v561
      %v575 = vunpack.c.l.b16 %v562
      %v576 = vpack.c.b16 %v575, %v574
      %v586 = vunpack.c.l.b16 %v563
      %v587 = vunpack.c.h.b16 %v563
      %v588 = vunpack.c.l.b16 %v564
      %v589 = vunpack.c.h.b16 %v564
      %v590 = vunpack.c.l.b16 %v565
      %v591 = vunpack.c.h.b16 %v565
      %v592 = vunpack.c.l.b16 %v566
      %v593 = vunpack.c.h.b16 %v566
      %v594 = vunpack.c.l.b16 %v567
      %v595 = vunpack.c.h.b16 %v567
      %v596 = vunpack.c.l.b16 %v568
      %v597 = vunpack.c.h.b16 %v568
      %v598 = vunpack.c.l.b16 %v569
      %v599 = vunpack.c.h.b16 %v569
      %v600 = vunpack.c.l.b16 %v570
      %v601 = vunpack.c.h.b16 %v570
      %v602 = vunpack.c.l.b16 %v571
      %v603 = vunpack.c.h.b16 %v571
      %v604 = vpack.c.b16 %v588, %v586
      %v605 = vpack.c.b16 %v589, %v587
      %v606 = vpack.c.b16 %v592, %v590
      %v607 = vpack.c.b16 %v593, %v591
      %v608 = vpack.c.b16 %v596, %v594
      %v609 = vpack.c.b16 %v597, %v595
      %v610 = vpack.c.b16 %v600, %v598
      %v611 = vpack.c.b16 %v601, %v599
      %v612 = vpack.c.b16 %v602, %v602
      %v613 = vpack.c.b16 %v603, %v603
      %vm622 = vcmask 588800
      %v624 = vsel %vm622, %v576, 0
      %v627 = vsel %vm327, %v612, 0
      %v630 = vsel %vm327, %v613, 0
      %632 = vmatpush.bf16.msra.mxu0 0
      %633 = vmatpush.bf16.msra.mxu0 0
      %634 = vmatpush.bf16.msra.mxu0 0
      %635 = vmatpush.bf16.msra.mxu0 %v627
      %636 = vmatpush.bf16.msra.mxu0 %v610
      %637 = vmatpush.bf16.msra.mxu0 %v608
      %638 = vmatpush.bf16.msra.mxu0 %v606
      %639 = vmatpush.bf16.msra.mxu0 %v604
      %640 = vmatmul.bf16.gmra.mxu0 %v624
      %v641 = vpop.f32.mrf.mxu0
      %v642 = vadd.f32 0.0, %v641
      %v643 = vpop.f32.mrf.mxu0
      %v644 = vadd.f32 0.0, %v643
      %645 = vdwg.mxu0
      %646 = vmatpush.bf16.msra.mxu0 0
      %647 = vmatpush.bf16.msra.mxu0 0
      %648 = vmatpush.bf16.msra.mxu0 0
      %649 = vmatpush.bf16.msra.mxu0 %v630
      %650 = vmatpush.bf16.msra.mxu0 %v611
      %651 = vmatpush.bf16.msra.mxu0 %v609
      %652 = vmatpush.bf16.msra.mxu0 %v607
      %653 = vmatpush.bf16.msra.mxu0 %v605
      %654 = vmatmul.bf16.gmra.mxu0 %v624
      %v655 = vpop.f32.mrf.mxu0
      %v656 = vadd.f32 0.0, %v655
      %v657 = vpop.f32.mrf.mxu0
      %v658 = vadd.f32 0.0, %v657
      %659 = vdwg.mxu0
      %v660 = vmax.f32 %v642, 0.0
      %v661 = vmax.f32 %v656, 0.0
      %v662 = vmax.f32 %v644, 0.0
      %v663 = vmax.f32 %v658, 0.0
      %664 = vst [vmem:[#allocation2 + $0x8] sm:$0xff] %v660
      %665 = vst [vmem:[#allocation2 + $0x10] sm:$0xff] %v661
      %666 = vst [vmem:[#allocation2 + $0x28] sm:$0xff] %v662
      %667 = vst [vmem:[#allocation2 + $0x30] sm:$0xff] %v663
      %v668 = vmul.f32 %v660, %v176
      %v669 = vmul.f32 %v661, %v177
      %v670 = vmul.f32 %v662, %v176
      %v671 = vmul.f32 %v663, %v177
      %672 = vst [vmem:[#allocation2 + $0x48] sm:$0xff] %v668
      %673 = vst [vmem:[#allocation2 + $0x50] sm:$0xff] %v669
      %674 = vst [vmem:[#allocation2 + $0x68] sm:$0xff] %v670
      %675 = vst [vmem:[#allocation2 + $0x70] sm:$0xff] %v671
      %v676 = vmul.f32 %v660, %v182
      %v677 = vmul.f32 %v661, %v183
      %v678 = vmul.f32 %v662, %v182
      %v679 = vmul.f32 %v663, %v183
      %680 = vst [vmem:[#allocation2 + $0x88] sm:$0xff] %v676
      %681 = vst [vmem:[#allocation2 + $0x90] sm:$0xff] %v677
      %682 = vst [vmem:[#allocation2 + $0xa8] sm:$0xff] %v678
      %683 = vst [vmem:[#allocation2 + $0xb0] sm:$0xff] %v679
      %v684 = vld [vmem:[#allocation2 + $0x40] sm:$0xff]
      %v685 = vld [vmem:[#allocation2 + $0x48] sm:$0xff]
      %v686 = vld [vmem:[#allocation2 + $0x50] sm:$0xff]
      %v687 = vld [vmem:[#allocation2 + $0x60] sm:$0xff]
      %v688 = vld [vmem:[#allocation2 + $0x68] sm:$0xff]
      %v689 = vld [vmem:[#allocation2 + $0x70] sm:$0xff]
      %v690 = vpack.c.bf16 %v685, %v684
      %v691 = vpack.c.bf16 %v686, %v686
      %v692 = vpack.c.bf16 %v688, %v687
      %v693 = vpack.c.bf16 %v689, %v689
      %698 = vrot.lane.b32.xlu0 %v690, 17
      %v699 = vpop.permute.xlu0 %698
      %700 = vrot.lane.b32.xlu0 %v691, 17
      %v701 = vpop.permute.xlu0 %700
      %702 = vrot.lane.b32.xlu0 %v692, 17
      %v703 = vpop.permute.xlu0 %702
      %704 = vrot.lane.b32.xlu0 %v693, 17
      %v705 = vpop.permute.xlu0 %704
      %v706 = vrot.slane %v699, 4
      %v707 = vrot.slane %v701, 4
      %v708 = vrot.slane %v703, 4
      %v709 = vrot.slane %v705, 4
      %v710 = vsel %vm425, %v706, %v707
      %v711 = vsel %vm427, %v699, %v710
      %v712 = vsel %vm425, %v708, %v709
      %v713 = vsel %vm427, %v703, %v712
      %716 = vst [vmem:[#allocation3] sm:$0xff] %v711
      %717 = vst [vmem:[#allocation3 + $0x8] sm:$0xff] %v713
      %v718 = vld [vmem:[#allocation2] sm:$0xff]
      %v719 = vld [vmem:[#allocation2 + $0x8] sm:$0xff]
      %v720 = vld [vmem:[#allocation2 + $0x10] sm:$0xff]
      %v721 = vld [vmem:[#allocation2 + $0x20] sm:$0xff]
      %v722 = vld [vmem:[#allocation2 + $0x28] sm:$0xff]
      %v723 = vld [vmem:[#allocation2 + $0x30] sm:$0xff]
      %v724 = vpack.c.bf16 %v719, %v718
      %v725 = vpack.c.bf16 %v720, %v720
      %v726 = vpack.c.bf16 %v722, %v721
      %v727 = vpack.c.bf16 %v723, %v723
      %732 = vrot.lane.b32.xlu0 %v724, 16
      %v733 = vpop.permute.xlu0 %732
      %734 = vrot.lane.b32.xlu0 %v725, 16
      %v735 = vpop.permute.xlu0 %734
      %736 = vrot.lane.b32.xlu0 %v726, 16
      %v737 = vpop.permute.xlu0 %736
      %738 = vrot.lane.b32.xlu0 %v727, 16
      %v739 = vpop.permute.xlu0 %738
      %v740 = vrot.slane %v733, 4
      %v741 = vrot.slane %v735, 4
      %v742 = vrot.slane %v737, 4
      %v743 = vrot.slane %v739, 4
      %v744 = vsel %vm425, %v740, %v741
      %v745 = vsel %vm445, %v733, %v744
      %v746 = vsel %vm425, %v742, %v743
      %v747 = vsel %vm445, %v737, %v746
      %750 = vst [vmem:[#allocation3 + $0x10] sm:$0xff] %v745
      %751 = vst [vmem:[#allocation3 + $0x18] sm:$0xff] %v747
      %v752 = vld [vmem:[#allocation2 + $0x80] sm:$0xff]
      %v753 = vld [vmem:[#allocation2 + $0x88] sm:$0xff]
      %v754 = vld [vmem:[#allocation2 + $0x90] sm:$0xff]
      %v755 = vld [vmem:[#allocation2 + $0xa0] sm:$0xff]
      %v756 = vld [vmem:[#allocation2 + $0xa8] sm:$0xff]
      %v757 = vld [vmem:[#allocation2 + $0xb0] sm:$0xff]
      %v758 = vpack.c.bf16 %v753, %v752
      %v759 = vpack.c.bf16 %v754, %v754
      %v760 = vpack.c.bf16 %v756, %v755
      %v761 = vpack.c.bf16 %v757, %v757
      %766 = vrot.lane.b32.xlu0 %v758, 15
      %v767 = vpop.permute.xlu0 %766
      %768 = vrot.lane.b32.xlu0 %v759, 15
      %v769 = vpop.permute.xlu0 %768
      %770 = vrot.lane.b32.xlu0 %v760, 15
      %v771 = vpop.permute.xlu0 %770
      %772 = vrot.lane.b32.xlu0 %v761, 15
      %v773 = vpop.permute.xlu0 %772
      %v774 = vrot.slane %v767, 4
      %v775 = vrot.slane %v769, 4
      %v776 = vrot.slane %v771, 4
      %v777 = vrot.slane %v773, 4
      %v778 = vsel %vm425, %v774, %v775
      %v779 = vsel %vm463, %v767, %v778
      %v780 = vsel %vm425, %v776, %v777
      %v781 = vsel %vm463, %v771, %v780
      %784 = vst [vmem:[#allocation3 + $0x20] sm:$0xff] %v779
      %785 = vst [vmem:[#allocation3 + $0x28] sm:$0xff] %v781
      %v786 = vld [vmem:[#allocation2 + $0x40] sm:$0xff]
      %v787 = vld [vmem:[#allocation2 + $0x48] sm:$0xff]
      %v788 = vld [vmem:[#allocation2 + $0x50] sm:$0xff]
      %v789 = vld [vmem:[#allocation2 + $0x60] sm:$0xff]
      %v790 = vld [vmem:[#allocation2 + $0x68] sm:$0xff]
      %v791 = vld [vmem:[#allocation2 + $0x70] sm:$0xff]
      %v792 = vpack.c.bf16 %v787, %v786
      %v793 = vpack.c.bf16 %v788, %v788
      %v794 = vpack.c.bf16 %v790, %v789
      %v795 = vpack.c.bf16 %v791, %v791
      %800 = vrot.lane.b32.xlu0 %v792, 1
      %v801 = vpop.permute.xlu0 %800
      %802 = vrot.lane.b32.xlu0 %v793, 1
      %v803 = vpop.permute.xlu0 %802
      %804 = vrot.lane.b32.xlu0 %v794, 1
      %v805 = vpop.permute.xlu0 %804
      %806 = vrot.lane.b32.xlu0 %v795, 1
      %v807 = vpop.permute.xlu0 %806
      %v808 = vrot.slane %v801, 4
      %v809 = vrot.slane %v803, 4
      %v810 = vrot.slane %v805, 4
      %v811 = vrot.slane %v807, 4
      %v812 = vsel %vm425, %v808, %v809
      %v813 = vsel %vm481, %v801, %v812
      %v814 = vsel %vm425, %v810, %v811
      %v815 = vsel %vm481, %v805, %v814
      %818 = vst [vmem:[#allocation3 + $0x30] sm:$0xff] %v813
      %819 = vst [vmem:[#allocation3 + $0x38] sm:$0xff] %v815
      %v820 = vld [vmem:[#allocation2 + $0x8] sm:$0xff]
      %v821 = vld [vmem:[#allocation2 + $0x10] sm:$0xff]
      %v822 = vld [vmem:[#allocation2 + $0x28] sm:$0xff]
      %v823 = vld [vmem:[#allocation2 + $0x30] sm:$0xff]
      %v824 = vpack.c.bf16 %v821, %v820
      %v825 = vpack.c.bf16 %v823, %v822
      %826 = vst [vmem:[#allocation3 + $0x40] sm:$0xff] %v824
      %827 = vst [vmem:[#allocation3 + $0x48] sm:$0xff] %v825
      %v828 = vld [vmem:[#allocation2 + $0x88] sm:$0xff]
      %v829 = vld [vmem:[#allocation2 + $0x90] sm:$0xff]
      %v830 = vld [vmem:[#allocation2 + $0x98] sm:$0xff]
      %v831 = vld [vmem:[#allocation2 + $0xa8] sm:$0xff]
      %v832 = vld [vmem:[#allocation2 + $0xb0] sm:$0xff]
      %v833 = vld [vmem:[#allocation2 + $0xb8] sm:$0xff]
      %v834 = vpack.c.bf16 %v829, %v828
      %v835 = vpack.c.bf16 %v830, %v830
      %v836 = vpack.c.bf16 %v832, %v831
      %v837 = vpack.c.bf16 %v833, %v833
      %842 = vrot.lane.b32.xlu0 %v834, 127
      %v843 = vpop.permute.xlu0 %842
      %844 = vrot.lane.b32.xlu0 %v835, 127
      %v845 = vpop.permute.xlu0 %844
      %846 = vrot.lane.b32.xlu0 %v836, 127
      %v847 = vpop.permute.xlu0 %846
      %848 = vrot.lane.b32.xlu0 %v837, 127
      %v849 = vpop.permute.xlu0 %848
      %v850 = vrot.slane %v843, 4
      %v851 = vrot.slane %v845, 4
      %v852 = vrot.slane %v847, 4
      %v853 = vrot.slane %v849, 4
      %v854 = vsel %vm425, %v850, %v851
      %v855 = vsel %vm503, %v843, %v854
      %v856 = vsel %vm425, %v852, %v853
      %v857 = vsel %vm503, %v847, %v856
      %860 = vst [vmem:[#allocation3 + $0x50] sm:$0xff] %v855
      %861 = vst [vmem:[#allocation3 + $0x58] sm:$0xff] %v857
      %v862 = vld [vmem:[#allocation2 + $0x48] sm:$0xff]
      %v863 = vld [vmem:[#allocation2 + $0x50] sm:$0xff]
      %v864 = vld [vmem:[#allocation2 + $0x58] sm:$0xff]
      %v865 = vld [vmem:[#allocation2 + $0x68] sm:$0xff]
      %v866 = vld [vmem:[#allocation2 + $0x70] sm:$0xff]
      %v867 = vld [vmem:[#allocation2 + $0x78] sm:$0xff]
      %v868 = vpack.c.bf16 %v863, %v862
      %v869 = vpack.c.bf16 %v864, %v864
      %v870 = vpack.c.bf16 %v866, %v865
      %v871 = vpack.c.bf16 %v867, %v867
      %876 = vrot.lane.b32.xlu0 %v868, 113
      %v877 = vpop.permute.xlu0 %876
      %878 = vrot.lane.b32.xlu0 %v869, 113
      %v879 = vpop.permute.xlu0 %878
      %880 = vrot.lane.b32.xlu0 %v870, 113
      %v881 = vpop.permute.xlu0 %880
      %882 = vrot.lane.b32.xlu0 %v871, 113
      %v883 = vpop.permute.xlu0 %882
      %v884 = vrot.slane %v877, 4
      %v885 = vrot.slane %v879, 4
      %v886 = vrot.slane %v881, 4
      %v887 = vrot.slane %v883, 4
      %v888 = vsel %vm425, %v884, %v885
      %v889 = vsel %vm521, %v877, %v888
      %v890 = vsel %vm425, %v886, %v887
      %v891 = vsel %vm521, %v881, %v890
      %894 = vst [vmem:[#allocation3 + $0x60] sm:$0xff] %v889
      %895 = vst [vmem:[#allocation3 + $0x68] sm:$0xff] %v891
      %v896 = vld [vmem:[#allocation2 + $0x8] sm:$0xff]
      %v897 = vld [vmem:[#allocation2 + $0x10] sm:$0xff]
      %v898 = vld [vmem:[#allocation2 + $0x18] sm:$0xff]
      %v899 = vld [vmem:[#allocation2 + $0x28] sm:$0xff]
      %v900 = vld [vmem:[#allocation2 + $0x30] sm:$0xff]
      %v901 = vld [vmem:[#allocation2 + $0x38] sm:$0xff]
      %v902 = vpack.c.bf16 %v897, %v896
      %v903 = vpack.c.bf16 %v898, %v898
      %v904 = vpack.c.bf16 %v900, %v899
      %v905 = vpack.c.bf16 %v901, %v901
      %910 = vrot.lane.b32.xlu0 %v902, 112
      %v911 = vpop.permute.xlu0 %910
      %912 = vrot.lane.b32.xlu0 %v903, 112
      %v913 = vpop.permute.xlu0 %912
      %914 = vrot.lane.b32.xlu0 %v904, 112
      %v915 = vpop.permute.xlu0 %914
      %916 = vrot.lane.b32.xlu0 %v905, 112
      %v917 = vpop.permute.xlu0 %916
      %v918 = vrot.slane %v911, 4
      %v919 = vrot.slane %v913, 4
      %v920 = vrot.slane %v915, 4
      %v921 = vrot.slane %v917, 4
      %v922 = vsel %vm425, %v918, %v919
      %v923 = vsel %vm539, %v911, %v922
      %v924 = vsel %vm425, %v920, %v921
      %v925 = vsel %vm539, %v915, %v924
      %928 = vst [vmem:[#allocation3 + $0x70] sm:$0xff] %v923
      %929 = vst [vmem:[#allocation3 + $0x78] sm:$0xff] %v925
      %v930 = vld [vmem:[#allocation2 + $0x88] sm:$0xff]
      %v931 = vld [vmem:[#allocation2 + $0x90] sm:$0xff]
      %v932 = vld [vmem:[#allocation2 + $0x98] sm:$0xff]
      %v933 = vld [vmem:[#allocation2 + $0xa8] sm:$0xff]
      %v934 = vld [vmem:[#allocation2 + $0xb0] sm:$0xff]
      %v935 = vld [vmem:[#allocation2 + $0xb8] sm:$0xff]
      %v936 = vpack.c.bf16 %v931, %v930
      %v937 = vpack.c.bf16 %v932, %v932
      %v938 = vpack.c.bf16 %v934, %v933
      %v939 = vpack.c.bf16 %v935, %v935
      %944 = vrot.lane.b32.xlu0 %v936, 111
      %v945 = vpop.permute.xlu0 %944
      %946 = vrot.lane.b32.xlu0 %v937, 111
      %v947 = vpop.permute.xlu0 %946
      %948 = vrot.lane.b32.xlu0 %v938, 111
      %v949 = vpop.permute.xlu0 %948
      %950 = vrot.lane.b32.xlu0 %v939, 111
      %v951 = vpop.permute.xlu0 %950
      %v952 = vrot.slane %v945, 4
      %v953 = vrot.slane %v947, 4
      %v954 = vrot.slane %v949, 4
      %v955 = vrot.slane %v951, 4
      %v956 = vsel %vm425, %v952, %v953
      %v957 = vsel %vm557, %v945, %v956
      %v958 = vsel %vm425, %v954, %v955
      %v959 = vsel %vm557, %v949, %v958
      %962 = vst [vmem:[#allocation3 + $0x80] sm:$0xff] %v957
      %963 = vst [vmem:[#allocation3 + $0x88] sm:$0xff] %v959
      %v964 = vld [vmem:[%s1 + $0x50] sm:$0xff]
      %v965 = vld [vmem:[#allocation3] sm:$0xff]
      %v966 = vld [vmem:[#allocation3 + $0x8] sm:$0xff]
      %v967 = vld [vmem:[#allocation3 + $0x10] sm:$0xff]
      %v968 = vld [vmem:[#allocation3 + $0x18] sm:$0xff]
      %v969 = vld [vmem:[#allocation3 + $0x20] sm:$0xff]
      %v970 = vld [vmem:[#allocation3 + $0x28] sm:$0xff]
      %v971 = vld [vmem:[#allocation3 + $0x30] sm:$0xff]
      %v972 = vld [vmem:[#allocation3 + $0x38] sm:$0xff]
      %v973 = vld [vmem:[#allocation3 + $0x40] sm:$0xff]
      %v974 = vld [vmem:[#allocation3 + $0x48] sm:$0xff]
      %v975 = vld [vmem:[#allocation3 + $0x50] sm:$0xff]
      %v976 = vld [vmem:[#allocation3 + $0x58] sm:$0xff]
      %v977 = vld [vmem:[#allocation3 + $0x60] sm:$0xff]
      %v978 = vld [vmem:[#allocation3 + $0x68] sm:$0xff]
      %v979 = vld [vmem:[#allocation3 + $0x70] sm:$0xff]
      %v980 = vld [vmem:[#allocation3 + $0x78] sm:$0xff]
      %v981 = vld [vmem:[#allocation3 + $0x80] sm:$0xff]
      %v982 = vld [vmem:[#allocation3 + $0x88] sm:$0xff]
      %v984 = vunpack.c.l.b16 %v964
      %v985 = vunpack.c.h.b16 %v964
      %v986 = vpack.c.b16 %v984, %v984
      %v987 = vpack.c.b16 %v985, %v985
      %v1007 = vunpack.c.l.b16 %v965
      %v1008 = vunpack.c.h.b16 %v965
      %v1009 = vunpack.c.l.b16 %v966
      %v1010 = vunpack.c.h.b16 %v966
      %v1011 = vunpack.c.l.b16 %v967
      %v1012 = vunpack.c.h.b16 %v967
      %v1013 = vunpack.c.l.b16 %v968
      %v1014 = vunpack.c.h.b16 %v968
      %v1015 = vunpack.c.l.b16 %v969
      %v1016 = vunpack.c.h.b16 %v969
      %v1017 = vunpack.c.l.b16 %v970
      %v1018 = vunpack.c.h.b16 %v970
      %v1019 = vunpack.c.l.b16 %v971
      %v1020 = vunpack.c.h.b16 %v971
      %v1021 = vunpack.c.l.b16 %v972
      %v1022 = vunpack.c.h.b16 %v972
      %v1023 = vunpack.c.l.b16 %v973
      %v1024 = vunpack.c.h.b16 %v973
      %v1025 = vunpack.c.l.b16 %v974
      %v1026 = vunpack.c.h.b16 %v974
      %v1027 = vunpack.c.l.b16 %v975
      %v1028 = vunpack.c.h.b16 %v975
      %v1029 = vunpack.c.l.b16 %v976
      %v1030 = vunpack.c.h.b16 %v976
      %v1031 = vunpack.c.l.b16 %v977
      %v1032 = vunpack.c.h.b16 %v977
      %v1033 = vunpack.c.l.b16 %v978
      %v1034 = vunpack.c.h.b16 %v978
      %v1035 = vunpack.c.l.b16 %v979
      %v1036 = vunpack.c.h.b16 %v979
      %v1037 = vunpack.c.l.b16 %v980
      %v1038 = vunpack.c.h.b16 %v980
      %v1039 = vunpack.c.l.b16 %v981
      %v1040 = vunpack.c.h.b16 %v981
      %v1041 = vunpack.c.l.b16 %v982
      %v1042 = vunpack.c.h.b16 %v982
      %v1043 = vpack.c.b16 %v1009, %v1007
      %v1044 = vpack.c.b16 %v1010, %v1008
      %v1045 = vpack.c.b16 %v1013, %v1011
      %v1046 = vpack.c.b16 %v1014, %v1012
      %v1047 = vpack.c.b16 %v1017, %v1015
      %v1048 = vpack.c.b16 %v1018, %v1016
      %v1049 = vpack.c.b16 %v1021, %v1019
      %v1050 = vpack.c.b16 %v1022, %v1020
      %v1051 = vpack.c.b16 %v1025, %v1023
      %v1052 = vpack.c.b16 %v1026, %v1024
      %v1053 = vpack.c.b16 %v1029, %v1027
      %v1054 = vpack.c.b16 %v1030, %v1028
      %v1055 = vpack.c.b16 %v1033, %v1031
      %v1056 = vpack.c.b16 %v1034, %v1032
      %v1057 = vpack.c.b16 %v1037, %v1035
      %v1058 = vpack.c.b16 %v1038, %v1036
      %v1059 = vpack.c.b16 %v1041, %v1039
      %v1060 = vpack.c.b16 %v1042, %v1040
      %vm1079 = vcmask 130048
      %v1081 = vsel %vm1079, %v987, 0
      %1083 = vmatpush.bf16.msra.mxu0 %v1057
      %1084 = vmatpush.bf16.msra.mxu0 %v1055
      %1085 = vmatpush.bf16.msra.mxu0 %v1053
      %1086 = vmatpush.bf16.msra.mxu0 %v1051
      %1087 = vmatpush.bf16.msra.mxu0 %v1049
      %1088 = vmatpush.bf16.msra.mxu0 %v1047
      %1089 = vmatpush.bf16.msra.mxu0 %v1045
      %1090 = vmatpush.bf16.msra.mxu0 %v1043
      %1091 = vmatmul.bf16.gmra.mxu0 %v986
      %v1092 = vpop.f32.mrf.mxu0
      %v1093 = vadd.f32 0.0, %v1092
      %v1094 = vpop.f32.mrf.mxu0
      %1095 = vdwg.mxu0
      %1096 = vmatpush.bf16.msra.mxu0 0
      %1097 = vmatpush.bf16.msra.mxu0 0
      %1098 = vmatpush.bf16.msra.mxu0 0
      %1099 = vmatpush.bf16.msra.mxu0 0
      %1100 = vmatpush.bf16.msra.mxu0 0
      %1101 = vmatpush.bf16.msra.mxu0 0
      %1102 = vmatpush.bf16.msra.mxu0 0
      %1103 = vmatpush.bf16.msra.mxu0 %v1059
      %1104 = vmatmul.bf16.gmra.mxu0 %v1081
      %v1105 = vpop.f32.mrf.mxu0
      %v1106 = vadd.f32 %v1093, %v1105
      %v1107 = vpop.f32.mrf.mxu0
      %1108 = vdwg.mxu0
      %1109 = vmatpush.bf16.msra.mxu0 %v1058
      %1110 = vmatpush.bf16.msra.mxu0 %v1056
      %1111 = vmatpush.bf16.msra.mxu0 %v1054
      %1112 = vmatpush.bf16.msra.mxu0 %v1052
      %1113 = vmatpush.bf16.msra.mxu0 %v1050
      %1114 = vmatpush.bf16.msra.mxu0 %v1048
      %1115 = vmatpush.bf16.msra.mxu0 %v1046
      %1116 = vmatpush.bf16.msra.mxu0 %v1044
      %1117 = vmatmul.bf16.gmra.mxu0 %v986
      %v1118 = vpop.f32.mrf.mxu0
      %v1119 = vadd.f32 0.0, %v1118
      %v1120 = vpop.f32.mrf.mxu0
      %1121 = vdwg.mxu0
      %1122 = vmatpush.bf16.msra.mxu0 0
      %1123 = vmatpush.bf16.msra.mxu0 0
      %1124 = vmatpush.bf16.msra.mxu0 0
      %1125 = vmatpush.bf16.msra.mxu0 0
      %1126 = vmatpush.bf16.msra.mxu0 0
      %1127 = vmatpush.bf16.msra.mxu0 0
      %1128 = vmatpush.bf16.msra.mxu0 0
      %1129 = vmatpush.bf16.msra.mxu0 %v1060
      %1130 = vmatmul.bf16.gmra.mxu0 %v1081
      %v1131 = vpop.f32.mrf.mxu0
      %v1132 = vadd.f32 %v1119, %v1131
      %v1133 = vpop.f32.mrf.mxu0
      %1134 = vdwg.mxu0
      %v1135 = vmul.f32 %v1106, %v398
      %v1136 = vmul.f32 %v1132, %v399
      %1137 = vst [vmem:[#allocation2 + $0x8] sm:$0xff] %v1135
      %1138 = vst [vmem:[#allocation2 + $0x10] sm:$0xff] %v1136
      %v1139 = vmul.f32 %v1135, %v176
      %v1140 = vmul.f32 %v1136, %v177
      %1141 = vst [vmem:[#allocation2 + $0x48] sm:$0xff] %v1139
      %1142 = vst [vmem:[#allocation2 + $0x50] sm:$0xff] %v1140
      %v1143 = vmul.f32 %v1135, %v182
      %v1144 = vmul.f32 %v1136, %v183
      %1145 = vst [vmem:[#allocation2 + $0x88] sm:$0xff] %v1143
      %1146 = vst [vmem:[#allocation2 + $0x90] sm:$0xff] %v1144
      %v1147 = vld [vmem:[#allocation2 + $0x40] sm:$0xff]
      %v1148 = vld [vmem:[#allocation2 + $0x48] sm:$0xff]
      %v1149 = vld [vmem:[#allocation2 + $0x50] sm:$0xff]
      %v1150 = vpack.c.bf16 %v1148, %v1147
      %v1151 = vpack.c.bf16 %v1149, %v1149
      %1154 = vrot.lane.b32.xlu0 %v1150, 17
      %v1155 = vpop.permute.xlu0 %1154
      %1156 = vrot.lane.b32.xlu0 %v1151, 17
      %v1157 = vpop.permute.xlu0 %1156
      %v1158 = vrot.slane %v1155, 4
      %v1159 = vrot.slane %v1157, 4
      %v1160 = vsel %vm425, %v1158, %v1159
      %v1161 = vsel %vm427, %v1155, %v1160
      %1163 = vst [vmem:[#allocation3] sm:$0xff] %v1161
      %v1164 = vld [vmem:[#allocation2] sm:$0xff]
      %v1165 = vld [vmem:[#allocation2 + $0x8] sm:$0xff]
      %v1166 = vld [vmem:[#allocation2 + $0x10] sm:$0xff]
      %v1167 = vpack.c.bf16 %v1165, %v1164
      %v1168 = vpack.c.bf16 %v1166, %v1166
      %1171 = vrot.lane.b32.xlu0 %v1167, 16
      %v1172 = vpop.permute.xlu0 %1171
      %1173 = vrot.lane.b32.xlu0 %v1168, 16
      %v1174 = vpop.permute.xlu0 %1173
      %v1175 = vrot.slane %v1172, 4
      %v1176 = vrot.slane %v1174, 4
      %v1177 = vsel %vm425, %v1175, %v1176
      %v1178 = vsel %vm445, %v1172, %v1177
      %1180 = vst [vmem:[#allocation3 + $0x8] sm:$0xff] %v1178
      %v1181 = vld [vmem:[#allocation2 + $0x80] sm:$0xff]
      %v1182 = vld [vmem:[#allocation2 + $0x88] sm:$0xff]
      %v1183 = vld [vmem:[#allocation2 + $0x90] sm:$0xff]
      %v1184 = vpack.c.bf16 %v1182, %v1181
      %v1185 = vpack.c.bf16 %v1183, %v1183
      %1188 = vrot.lane.b32.xlu0 %v1184, 15
      %v1189 = vpop.permute.xlu0 %1188
      %1190 = vrot.lane.b32.xlu0 %v1185, 15
      %v1191 = vpop.permute.xlu0 %1190
      %v1192 = vrot.slane %v1189, 4
      %v1193 = vrot.slane %v1191, 4
      %v1194 = vsel %vm425, %v1192, %v1193
      %v1195 = vsel %vm463, %v1189, %v1194
      %1197 = vst [vmem:[#allocation3 + $0x10] sm:$0xff] %v1195
      %v1198 = vld [vmem:[#allocation2 + $0x40] sm:$0xff]
      %v1199 = vld [vmem:[#allocation2 + $0x48] sm:$0xff]
      %v1200 = vld [vmem:[#allocation2 + $0x50] sm:$0xff]
      %v1201 = vpack.c.bf16 %v1199, %v1198
      %v1202 = vpack.c.bf16 %v1200, %v1200
      %1205 = vrot.lane.b32.xlu0 %v1201, 1
      %v1206 = vpop.permute.xlu0 %1205
      %1207 = vrot.lane.b32.xlu0 %v1202, 1
      %v1208 = vpop.permute.xlu0 %1207
      %v1209 = vrot.slane %v1206, 4
      %v1210 = vrot.slane %v1208, 4
      %v1211 = vsel %vm425, %v1209, %v1210
      %v1212 = vsel %vm481, %v1206, %v1211
      %1214 = vst [vmem:[#allocation3 + $0x18] sm:$0xff] %v1212
      %v1215 = vld [vmem:[#allocation2 + $0x8] sm:$0xff]
      %v1216 = vld [vmem:[#allocation2 + $0x10] sm:$0xff]
      %v1217 = vpack.c.bf16 %v1216, %v1215
      %1218 = vst [vmem:[#allocation3 + $0x20] sm:$0xff] %v1217
      %v1219 = vld [vmem:[#allocation2 + $0x88] sm:$0xff]
      %v1220 = vld [vmem:[#allocation2 + $0x90] sm:$0xff]
      %v1221 = vld [vmem:[#allocation2 + $0x98] sm:$0xff]
      %v1222 = vpack.c.bf16 %v1220, %v1219
      %v1223 = vpack.c.bf16 %v1221, %v1221
      %1226 = vrot.lane.b32.xlu0 %v1222, 127
      %v1227 = vpop.permute.xlu0 %1226
      %1228 = vrot.lane.b32.xlu0 %v1223, 127
      %v1229 = vpop.permute.xlu0 %1228
      %v1230 = vrot.slane %v1227, 4
      %v1231 = vrot.slane %v1229, 4
      %v1232 = vsel %vm425, %v1230, %v1231
      %v1233 = vsel %vm503, %v1227, %v1232
      %1235 = vst [vmem:[#allocation3 + $0x28] sm:$0xff] %v1233
      %v1236 = vld [vmem:[#allocation2 + $0x48] sm:$0xff]
      %v1237 = vld [vmem:[#allocation2 + $0x50] sm:$0xff]
      %v1238 = vld [vmem:[#allocation2 + $0x58] sm:$0xff]
      %v1239 = vpack.c.bf16 %v1237, %v1236
      %v1240 = vpack.c.bf16 %v1238, %v1238
      %1243 = vrot.lane.b32.xlu0 %v1239, 113
      %v1244 = vpop.permute.xlu0 %1243
      %1245 = vrot.lane.b32.xlu0 %v1240, 113
      %v1246 = vpop.permute.xlu0 %1245
      %v1247 = vrot.slane %v1244, 4
      %v1248 = vrot.slane %v1246, 4
      %v1249 = vsel %vm425, %v1247, %v1248
      %v1250 = vsel %vm521, %v1244, %v1249
      %1252 = vst [vmem:[#allocation3 + $0x30] sm:$0xff] %v1250
      %v1253 = vld [vmem:[#allocation2 + $0x8] sm:$0xff]
      %v1254 = vld [vmem:[#allocation2 + $0x10] sm:$0xff]
      %v1255 = vld [vmem:[#allocation2 + $0x18] sm:$0xff]
      %v1256 = vpack.c.bf16 %v1254, %v1253
      %v1257 = vpack.c.bf16 %v1255, %v1255
      %1260 = vrot.lane.b32.xlu0 %v1256, 112
      %v1261 = vpop.permute.xlu0 %1260
      %1262 = vrot.lane.b32.xlu0 %v1257, 112
      %v1263 = vpop.permute.xlu0 %1262
      %v1264 = vrot.slane %v1261, 4
      %v1265 = vrot.slane %v1263, 4
      %v1266 = vsel %vm425, %v1264, %v1265
      %v1267 = vsel %vm539, %v1261, %v1266
      %1269 = vst [vmem:[#allocation3 + $0x38] sm:$0xff] %v1267
      %v1270 = vld [vmem:[#allocation2 + $0x88] sm:$0xff]
      %v1271 = vld [vmem:[#allocation2 + $0x90] sm:$0xff]
      %v1272 = vld [vmem:[#allocation2 + $0x98] sm:$0xff]
      %v1273 = vpack.c.bf16 %v1271, %v1270
      %v1274 = vpack.c.bf16 %v1272, %v1272
      %1277 = vrot.lane.b32.xlu0 %v1273, 111
      %v1278 = vpop.permute.xlu0 %1277
      %1279 = vrot.lane.b32.xlu0 %v1274, 111
      %v1280 = vpop.permute.xlu0 %1279
      %v1281 = vrot.slane %v1278, 4
      %v1282 = vrot.slane %v1280, 4
      %v1283 = vsel %vm425, %v1281, %v1282
      %v1284 = vsel %vm557, %v1278, %v1283
      %1286 = vst [vmem:[#allocation3 + $0x40] sm:$0xff] %v1284
      %v1287 = vld [vmem:[%s1 + $0x10] sm:$0xf]
      %v1288 = vld [vmem:[%s1 + $0x18] sm:$0xf]
      %v1289 = vld [vmem:[#allocation3] sm:$0xff]
      %v1290 = vld [vmem:[#allocation3 + $0x8] sm:$0xff]
      %v1291 = vld [vmem:[#allocation3 + $0x10] sm:$0xff]
      %v1292 = vld [vmem:[#allocation3 + $0x18] sm:$0xff]
      %v1293 = vld [vmem:[#allocation3 + $0x20] sm:$0xff]
      %v1294 = vld [vmem:[#allocation3 + $0x28] sm:$0xff]
      %v1295 = vld [vmem:[#allocation3 + $0x30] sm:$0xff]
      %v1296 = vld [vmem:[#allocation3 + $0x38] sm:$0xff]
      %v1297 = vld [vmem:[#allocation3 + $0x40] sm:$0xff]
      %v1300 = vunpack.c.l.b16 %v1287
      %v1301 = vunpack.c.l.b16 %v1288
      %v1302 = vpack.c.b16 %v1301, %v1300
      %v1312 = vunpack.c.l.b16 %v1289
      %v1313 = vunpack.c.h.b16 %v1289
      %v1314 = vunpack.c.l.b16 %v1290
      %v1315 = vunpack.c.h.b16 %v1290
      %v1316 = vunpack.c.l.b16 %v1291
      %v1317 = vunpack.c.h.b16 %v1291
      %v1318 = vunpack.c.l.b16 %v1292
      %v1319 = vunpack.c.h.b16 %v1292
      %v1320 = vunpack.c.l.b16 %v1293
      %v1321 = vunpack.c.h.b16 %v1293
      %v1322 = vunpack.c.l.b16 %v1294
      %v1323 = vunpack.c.h.b16 %v1294
      %v1324 = vunpack.c.l.b16 %v1295
      %v1325 = vunpack.c.h.b16 %v1295
      %v1326 = vunpack.c.l.b16 %v1296
      %v1327 = vunpack.c.h.b16 %v1296
      %v1328 = vunpack.c.l.b16 %v1297
      %v1329 = vunpack.c.h.b16 %v1297
      %v1330 = vpack.c.b16 %v1314, %v1312
      %v1331 = vpack.c.b16 %v1315, %v1313
      %v1332 = vpack.c.b16 %v1318, %v1316
      %v1333 = vpack.c.b16 %v1319, %v1317
      %v1334 = vpack.c.b16 %v1322, %v1320
      %v1335 = vpack.c.b16 %v1323, %v1321
      %v1336 = vpack.c.b16 %v1326, %v1324
      %v1337 = vpack.c.b16 %v1327, %v1325
      %v1338 = vpack.c.b16 %v1328, %v1328
      %v1339 = vpack.c.b16 %v1329, %v1329
      %v1349 = vsel %vm622, %v1302, 0
      %v1352 = vsel %vm327, %v1338, 0
      %v1355 = vsel %vm327, %v1339, 0
      %1357 = vmatpush.bf16.msra.mxu0 0
      %1358 = vmatpush.bf16.msra.mxu0 0
      %1359 = vmatpush.bf16.msra.mxu0 0
      %1360 = vmatpush.bf16.msra.mxu0 %v1352
      %1361 = vmatpush.bf16.msra.mxu0 %v1336
      %1362 = vmatpush.bf16.msra.mxu0 %v1334
      %1363 = vmatpush.bf16.msra.mxu0 %v1332
      %1364 = vmatpush.bf16.msra.mxu0 %v1330
      %1365 = vmatmul.bf16.gmra.mxu0 %v1349
      %v1366 = vpop.f32.mrf.mxu0
      %v1367 = vadd.f32 0.0, %v1366
      %v1368 = vpop.f32.mrf.mxu0
      %v1369 = vadd.f32 0.0, %v1368
      %1370 = vdwg.mxu0
      %1371 = vmatpush.bf16.msra.mxu0 0
      %1372 = vmatpush.bf16.msra.mxu0 0
      %1373 = vmatpush.bf16.msra.mxu0 0
      %1374 = vmatpush.bf16.msra.mxu0 %v1355
      %1375 = vmatpush.bf16.msra.mxu0 %v1337
      %1376 = vmatpush.bf16.msra.mxu0 %v1335
      %1377 = vmatpush.bf16.msra.mxu0 %v1333
      %1378 = vmatpush.bf16.msra.mxu0 %v1331
      %1379 = vmatmul.bf16.gmra.mxu0 %v1349
      %v1380 = vpop.f32.mrf.mxu0
      %v1381 = vadd.f32 0.0, %v1380
      %v1382 = vpop.f32.mrf.mxu0
      %v1383 = vadd.f32 0.0, %v1382
      %1384 = vdwg.mxu0
      %v1385 = vsub.f32 %v660, %v1367
      %v1386 = vsub.f32 %v661, %v1381
      %v1387 = vsub.f32 %v662, %v1369
      %v1388 = vsub.f32 %v663, %v1383
      %v1389 = vadd.f32 %v1385, %v642
      %v1390 = vadd.f32 %v1386, %v656
      %v1391 = vadd.f32 %v1387, %v644
      %v1392 = vadd.f32 %v1388, %v658
      %v1393 = vmax.f32 %v1389, 0.0
      %v1394 = vmax.f32 %v1390, 0.0
      %v1395 = vmax.f32 %v1391, 0.0
      %v1396 = vmax.f32 %v1392, 0.0
      %1397 = vst [vmem:[#allocation2 + $0x8] sm:$0xff] %v1393
      %1398 = vst [vmem:[#allocation2 + $0x10] sm:$0xff] %v1394
      %1399 = vst [vmem:[#allocation2 + $0x28] sm:$0xff] %v1395
      %1400 = vst [vmem:[#allocation2 + $0x30] sm:$0xff] %v1396
      %v1401 = vmul.f32 %v1393, %v176
      %v1402 = vmul.f32 %v1394, %v177
      %v1403 = vmul.f32 %v1395, %v176
      %v1404 = vmul.f32 %v1396, %v177
      %1405 = vst [vmem:[#allocation2 + $0x48] sm:$0xff] %v1401
      %1406 = vst [vmem:[#allocation2 + $0x50] sm:$0xff] %v1402
      %1407 = vst [vmem:[#allocation2 + $0x68] sm:$0xff] %v1403
      %1408 = vst [vmem:[#allocation2 + $0x70] sm:$0xff] %v1404
      %v1409 = vmul.f32 %v1393, %v182
      %v1410 = vmul.f32 %v1394, %v183
      %v1411 = vmul.f32 %v1395, %v182
      %v1412 = vmul.f32 %v1396, %v183
      %1413 = vst [vmem:[#allocation2 + $0x88] sm:$0xff] %v1409
      %1414 = vst [vmem:[#allocation2 + $0x90] sm:$0xff] %v1410
      %1415 = vst [vmem:[#allocation2 + $0xa8] sm:$0xff] %v1411
      %1416 = vst [vmem:[#allocation2 + $0xb0] sm:$0xff] %v1412
      %v1417 = vld [vmem:[#allocation2 + $0x40] sm:$0xff]
      %v1418 = vld [vmem:[#allocation2 + $0x48] sm:$0xff]
      %v1419 = vld [vmem:[#allocation2 + $0x50] sm:$0xff]
      %v1420 = vld [vmem:[#allocation2 + $0x60] sm:$0xff]
      %v1421 = vld [vmem:[#allocation2 + $0x68] sm:$0xff]
      %v1422 = vld [vmem:[#allocation2 + $0x70] sm:$0xff]
      %v1423 = vpack.c.bf16 %v1418, %v1417
      %v1424 = vpack.c.bf16 %v1419, %v1419
      %v1425 = vpack.c.bf16 %v1421, %v1420
      %v1426 = vpack.c.bf16 %v1422, %v1422
      %1431 = vrot.lane.b32.xlu0 %v1423, 17
      %v1432 = vpop.permute.xlu0 %1431
      %1433 = vrot.lane.b32.xlu0 %v1424, 17
      %v1434 = vpop.permute.xlu0 %1433
      %1435 = vrot.lane.b32.xlu0 %v1425, 17
      %v1436 = vpop.permute.xlu0 %1435
      %1437 = vrot.lane.b32.xlu0 %v1426, 17
      %v1438 = vpop.permute.xlu0 %1437
      %v1439 = vrot.slane %v1432, 4
      %v1440 = vrot.slane %v1434, 4
      %v1441 = vrot.slane %v1436, 4
      %v1442 = vrot.slane %v1438, 4
      %v1443 = vsel %vm425, %v1439, %v1440
      %v1444 = vsel %vm427, %v1432, %v1443
      %v1445 = vsel %vm425, %v1441, %v1442
      %v1446 = vsel %vm427, %v1436, %v1445
      %1449 = vst [vmem:[#allocation3] sm:$0xff] %v1444
      %1450 = vst [vmem:[#allocation3 + $0x8] sm:$0xff] %v1446
      %v1451 = vld [vmem:[#allocation2] sm:$0xff]
      %v1452 = vld [vmem:[#allocation2 + $0x8] sm:$0xff]
      %v1453 = vld [vmem:[#allocation2 + $0x10] sm:$0xff]
      %v1454 = vld [vmem:[#allocation2 + $0x20] sm:$0xff]
      %v1455 = vld [vmem:[#allocation2 + $0x28] sm:$0xff]
      %v1456 = vld [vmem:[#allocation2 + $0x30] sm:$0xff]
      %v1457 = vpack.c.bf16 %v1452, %v1451
      %v1458 = vpack.c.bf16 %v1453, %v1453
      %v1459 = vpack.c.bf16 %v1455, %v1454
      %v1460 = vpack.c.bf16 %v1456, %v1456
      %1465 = vrot.lane.b32.xlu0 %v1457, 16
      %v1466 = vpop.permute.xlu0 %1465
      %1467 = vrot.lane.b32.xlu0 %v1458, 16
      %v1468 = vpop.permute.xlu0 %1467
      %1469 = vrot.lane.b32.xlu0 %v1459, 16
      %v1470 = vpop.permute.xlu0 %1469
      %1471 = vrot.lane.b32.xlu0 %v1460, 16
      %v1472 = vpop.permute.xlu0 %1471
      %v1473 = vrot.slane %v1466, 4
      %v1474 = vrot.slane %v1468, 4
      %v1475 = vrot.slane %v1470, 4
      %v1476 = vrot.slane %v1472, 4
      %v1477 = vsel %vm425, %v1473, %v1474
      %v1478 = vsel %vm445, %v1466, %v1477
      %v1479 = vsel %vm425, %v1475, %v1476
      %v1480 = vsel %vm445, %v1470, %v1479
      %1483 = vst [vmem:[#allocation3 + $0x10] sm:$0xff] %v1478
      %1484 = vst [vmem:[#allocation3 + $0x18] sm:$0xff] %v1480
      %v1485 = vld [vmem:[#allocation2 + $0x80] sm:$0xff]
      %v1486 = vld [vmem:[#allocation2 + $0x88] sm:$0xff]
      %v1487 = vld [vmem:[#allocation2 + $0x90] sm:$0xff]
      %v1488 = vld [vmem:[#allocation2 + $0xa0] sm:$0xff]
      %v1489 = vld [vmem:[#allocation2 + $0xa8] sm:$0xff]
      %v1490 = vld [vmem:[#allocation2 + $0xb0] sm:$0xff]
      %v1491 = vpack.c.bf16 %v1486, %v1485
      %v1492 = vpack.c.bf16 %v1487, %v1487
      %v1493 = vpack.c.bf16 %v1489, %v1488
      %v1494 = vpack.c.bf16 %v1490, %v1490
      %1499 = vrot.lane.b32.xlu0 %v1491, 15
      %v1500 = vpop.permute.xlu0 %1499
      %1501 = vrot.lane.b32.xlu0 %v1492, 15
      %v1502 = vpop.permute.xlu0 %1501
      %1503 = vrot.lane.b32.xlu0 %v1493, 15
      %v1504 = vpop.permute.xlu0 %1503
      %1505 = vrot.lane.b32.xlu0 %v1494, 15
      %v1506 = vpop.permute.xlu0 %1505
      %v1507 = vrot.slane %v1500, 4
      %v1508 = vrot.slane %v1502, 4
      %v1509 = vrot.slane %v1504, 4
      %v1510 = vrot.slane %v1506, 4
      %v1511 = vsel %vm425, %v1507, %v1508
      %v1512 = vsel %vm463, %v1500, %v1511
      %v1513 = vsel %vm425, %v1509, %v1510
      %v1514 = vsel %vm463, %v1504, %v1513
      %1517 = vst [vmem:[#allocation3 + $0x20] sm:$0xff] %v1512
      %1518 = vst [vmem:[#allocation3 + $0x28] sm:$0xff] %v1514
      %v1519 = vld [vmem:[#allocation2 + $0x40] sm:$0xff]
      %v1520 = vld [vmem:[#allocation2 + $0x48] sm:$0xff]
      %v1521 = vld [vmem:[#allocation2 + $0x50] sm:$0xff]
      %v1522 = vld [vmem:[#allocation2 + $0x60] sm:$0xff]
      %v1523 = vld [vmem:[#allocation2 + $0x68] sm:$0xff]
      %v1524 = vld [vmem:[#allocation2 + $0x70] sm:$0xff]
      %v1525 = vpack.c.bf16 %v1520, %v1519
      %v1526 = vpack.c.bf16 %v1521, %v1521
      %v1527 = vpack.c.bf16 %v1523, %v1522
      %v1528 = vpack.c.bf16 %v1524, %v1524
      %1533 = vrot.lane.b32.xlu0 %v1525, 1
      %v1534 = vpop.permute.xlu0 %1533
      %1535 = vrot.lane.b32.xlu0 %v1526, 1
      %v1536 = vpop.permute.xlu0 %1535
      %1537 = vrot.lane.b32.xlu0 %v1527, 1
      %v1538 = vpop.permute.xlu0 %1537
      %1539 = vrot.lane.b32.xlu0 %v1528, 1
      %v1540 = vpop.permute.xlu0 %1539
      %v1541 = vrot.slane %v1534, 4
      %v1542 = vrot.slane %v1536, 4
      %v1543 = vrot.slane %v1538, 4
      %v1544 = vrot.slane %v1540, 4
      %v1545 = vsel %vm425, %v1541, %v1542
      %v1546 = vsel %vm481, %v1534, %v1545
      %v1547 = vsel %vm425, %v1543, %v1544
      %v1548 = vsel %vm481, %v1538, %v1547
      %1551 = vst [vmem:[#allocation3 + $0x30] sm:$0xff] %v1546
      %1552 = vst [vmem:[#allocation3 + $0x38] sm:$0xff] %v1548
      %v1553 = vld [vmem:[#allocation2 + $0x8] sm:$0xff]
      %v1554 = vld [vmem:[#allocation2 + $0x10] sm:$0xff]
      %v1555 = vld [vmem:[#allocation2 + $0x28] sm:$0xff]
      %v1556 = vld [vmem:[#allocation2 + $0x30] sm:$0xff]
      %v1557 = vpack.c.bf16 %v1554, %v1553
      %v1558 = vpack.c.bf16 %v1556, %v1555
      %1559 = vst [vmem:[#allocation3 + $0x40] sm:$0xff] %v1557
      %1560 = vst [vmem:[#allocation3 + $0x48] sm:$0xff] %v1558
      %v1561 = vld [vmem:[#allocation2 + $0x88] sm:$0xff]
      %v1562 = vld [vmem:[#allocation2 + $0x90] sm:$0xff]
      %v1563 = vld [vmem:[#allocation2 + $0x98] sm:$0xff]
      %v1564 = vld [vmem:[#allocation2 + $0xa8] sm:$0xff]
      %v1565 = vld [vmem:[#allocation2 + $0xb0] sm:$0xff]
      %v1566 = vld [vmem:[#allocation2 + $0xb8] sm:$0xff]
      %v1567 = vpack.c.bf16 %v1562, %v1561
      %v1568 = vpack.c.bf16 %v1563, %v1563
      %v1569 = vpack.c.bf16 %v1565, %v1564
      %v1570 = vpack.c.bf16 %v1566, %v1566
      %1575 = vrot.lane.b32.xlu0 %v1567, 127
      %v1576 = vpop.permute.xlu0 %1575
      %1577 = vrot.lane.b32.xlu0 %v1568, 127
      %v1578 = vpop.permute.xlu0 %1577
      %1579 = vrot.lane.b32.xlu0 %v1569, 127
      %v1580 = vpop.permute.xlu0 %1579
      %1581 = vrot.lane.b32.xlu0 %v1570, 127
      %v1582 = vpop.permute.xlu0 %1581
      %v1583 = vrot.slane %v1576, 4
      %v1584 = vrot.slane %v1578, 4
      %v1585 = vrot.slane %v1580, 4
      %v1586 = vrot.slane %v1582, 4
      %v1587 = vsel %vm425, %v1583, %v1584
      %v1588 = vsel %vm503, %v1576, %v1587
      %v1589 = vsel %vm425, %v1585, %v1586
      %v1590 = vsel %vm503, %v1580, %v1589
      %1593 = vst [vmem:[#allocation3 + $0x50] sm:$0xff] %v1588
      %1594 = vst [vmem:[#allocation3 + $0x58] sm:$0xff] %v1590
      %v1595 = vld [vmem:[#allocation2 + $0x48] sm:$0xff]
      %v1596 = vld [vmem:[#allocation2 + $0x50] sm:$0xff]
      %v1597 = vld [vmem:[#allocation2 + $0x58] sm:$0xff]
      %v1598 = vld [vmem:[#allocation2 + $0x68] sm:$0xff]
      %v1599 = vld [vmem:[#allocation2 + $0x70] sm:$0xff]
      %v1600 = vld [vmem:[#allocation2 + $0x78] sm:$0xff]
      %v1601 = vpack.c.bf16 %v1596, %v1595
      %v1602 = vpack.c.bf16 %v1597, %v1597
      %v1603 = vpack.c.bf16 %v1599, %v1598
      %v1604 = vpack.c.bf16 %v1600, %v1600
      %1609 = vrot.lane.b32.xlu0 %v1601, 113
      %v1610 = vpop.permute.xlu0 %1609
      %1611 = vrot.lane.b32.xlu0 %v1602, 113
      %v1612 = vpop.permute.xlu0 %1611
      %1613 = vrot.lane.b32.xlu0 %v1603, 113
      %v1614 = vpop.permute.xlu0 %1613
      %1615 = vrot.lane.b32.xlu0 %v1604, 113
      %v1616 = vpop.permute.xlu0 %1615
      %v1617 = vrot.slane %v1610, 4
      %v1618 = vrot.slane %v1612, 4
      %v1619 = vrot.slane %v1614, 4
      %v1620 = vrot.slane %v1616, 4
      %v1621 = vsel %vm425, %v1617, %v1618
      %v1622 = vsel %vm521, %v1610, %v1621
      %v1623 = vsel %vm425, %v1619, %v1620
      %v1624 = vsel %vm521, %v1614, %v1623
      %1627 = vst [vmem:[#allocation3 + $0x60] sm:$0xff] %v1622
      %1628 = vst [vmem:[#allocation3 + $0x68] sm:$0xff] %v1624
      %v1629 = vld [vmem:[#allocation2 + $0x8] sm:$0xff]
      %v1630 = vld [vmem:[#allocation2 + $0x10] sm:$0xff]
      %v1631 = vld [vmem:[#allocation2 + $0x18] sm:$0xff]
      %v1632 = vld [vmem:[#allocation2 + $0x28] sm:$0xff]
      %v1633 = vld [vmem:[#allocation2 + $0x30] sm:$0xff]
      %v1634 = vld [vmem:[#allocation2 + $0x38] sm:$0xff]
      %v1635 = vpack.c.bf16 %v1630, %v1629
      %v1636 = vpack.c.bf16 %v1631, %v1631
      %v1637 = vpack.c.bf16 %v1633, %v1632
      %v1638 = vpack.c.bf16 %v1634, %v1634
      %1643 = vrot.lane.b32.xlu0 %v1635, 112
      %v1644 = vpop.permute.xlu0 %1643
      %1645 = vrot.lane.b32.xlu0 %v1636, 112
      %v1646 = vpop.permute.xlu0 %1645
      %1647 = vrot.lane.b32.xlu0 %v1637, 112
      %v1648 = vpop.permute.xlu0 %1647
      %1649 = vrot.lane.b32.xlu0 %v1638, 112
      %v1650 = vpop.permute.xlu0 %1649
      %v1651 = vrot.slane %v1644, 4
      %v1652 = vrot.slane %v1646, 4
      %v1653 = vrot.slane %v1648, 4
      %v1654 = vrot.slane %v1650, 4
      %v1655 = vsel %vm425, %v1651, %v1652
      %v1656 = vsel %vm539, %v1644, %v1655
      %v1657 = vsel %vm425, %v1653, %v1654
      %v1658 = vsel %vm539, %v1648, %v1657
      %1661 = vst [vmem:[#allocation3 + $0x70] sm:$0xff] %v1656
      %1662 = vst [vmem:[#allocation3 + $0x78] sm:$0xff] %v1658
      %v1663 = vld [vmem:[#allocation2 + $0x88] sm:$0xff]
      %v1664 = vld [vmem:[#allocation2 + $0x90] sm:$0xff]
      %v1665 = vld [vmem:[#allocation2 + $0x98] sm:$0xff]
      %v1666 = vld [vmem:[#allocation2 + $0xa8] sm:$0xff]
      %v1667 = vld [vmem:[#allocation2 + $0xb0] sm:$0xff]
      %v1668 = vld [vmem:[#allocation2 + $0xb8] sm:$0xff]
      %v1669 = vpack.c.bf16 %v1664, %v1663
      %v1670 = vpack.c.bf16 %v1665, %v1665
      %v1671 = vpack.c.bf16 %v1667, %v1666
      %v1672 = vpack.c.bf16 %v1668, %v1668
      %1677 = vrot.lane.b32.xlu0 %v1669, 111
      %v1678 = vpop.permute.xlu0 %1677
      %1679 = vrot.lane.b32.xlu0 %v1670, 111
      %v1680 = vpop.permute.xlu0 %1679
      %1681 = vrot.lane.b32.xlu0 %v1671, 111
      %v1682 = vpop.permute.xlu0 %1681
      %1683 = vrot.lane.b32.xlu0 %v1672, 111
      %v1684 = vpop.permute.xlu0 %1683
      %v1685 = vrot.slane %v1678, 4
      %v1686 = vrot.slane %v1680, 4
      %v1687 = vrot.slane %v1682, 4
      %v1688 = vrot.slane %v1684, 4
      %v1689 = vsel %vm425, %v1685, %v1686
      %v1690 = vsel %vm557, %v1678, %v1689
      %v1691 = vsel %vm425, %v1687, %v1688
      %v1692 = vsel %vm557, %v1682, %v1691
      %1695 = vst [vmem:[#allocation3 + $0x80] sm:$0xff] %v1690
      %1696 = vst [vmem:[#allocation3 + $0x88] sm:$0xff] %v1692
      %v1697 = vld [vmem:[%s1 + $0x50] sm:$0xff]
      %v1698 = vld [vmem:[#allocation3] sm:$0xff]
      %v1699 = vld [vmem:[#allocation3 + $0x8] sm:$0xff]
      %v1700 = vld [vmem:[#allocation3 + $0x10] sm:$0xff]
      %v1701 = vld [vmem:[#allocation3 + $0x18] sm:$0xff]
      %v1702 = vld [vmem:[#allocation3 + $0x20] sm:$0xff]
      %v1703 = vld [vmem:[#allocation3 + $0x28] sm:$0xff]
      %v1704 = vld [vmem:[#allocation3 + $0x30] sm:$0xff]
      %v1705 = vld [vmem:[#allocation3 + $0x38] sm:$0xff]
      %v1706 = vld [vmem:[#allocation3 + $0x40] sm:$0xff]
      %v1707 = vld [vmem:[#allocation3 + $0x48] sm:$0xff]
      %v1708 = vld [vmem:[#allocation3 + $0x50] sm:$0xff]
      %v1709 = vld [vmem:[#allocation3 + $0x58] sm:$0xff]
      %v1710 = vld [vmem:[#allocation3 + $0x60] sm:$0xff]
      %v1711 = vld [vmem:[#allocation3 + $0x68] sm:$0xff]
      %v1712 = vld [vmem:[#allocation3 + $0x70] sm:$0xff]
      %v1713 = vld [vmem:[#allocation3 + $0x78] sm:$0xff]
      %v1714 = vld [vmem:[#allocation3 + $0x80] sm:$0xff]
      %v1715 = vld [vmem:[#allocation3 + $0x88] sm:$0xff]
      %v1717 = vunpack.c.l.b16 %v1697
      %v1718 = vunpack.c.h.b16 %v1697
      %v1719 = vpack.c.b16 %v1717, %v1717
      %v1720 = vpack.c.b16 %v1718, %v1718
      %v1740 = vunpack.c.l.b16 %v1698
      %v1741 = vunpack.c.h.b16 %v1698
      %v1742 = vunpack.c.l.b16 %v1699
      %v1743 = vunpack.c.h.b16 %v1699
      %v1744 = vunpack.c.l.b16 %v1700
      %v1745 = vunpack.c.h.b16 %v1700
      %v1746 = vunpack.c.l.b16 %v1701
      %v1747 = vunpack.c.h.b16 %v1701
      %v1748 = vunpack.c.l.b16 %v1702
      %v1749 = vunpack.c.h.b16 %v1702
      %v1750 = vunpack.c.l.b16 %v1703
      %v1751 = vunpack.c.h.b16 %v1703
      %v1752 = vunpack.c.l.b16 %v1704
      %v1753 = vunpack.c.h.b16 %v1704
      %v1754 = vunpack.c.l.b16 %v1705
      %v1755 = vunpack.c.h.b16 %v1705
      %v1756 = vunpack.c.l.b16 %v1706
      %v1757 = vunpack.c.h.b16 %v1706
      %v1758 = vunpack.c.l.b16 %v1707
      %v1759 = vunpack.c.h.b16 %v1707
      %v1760 = vunpack.c.l.b16 %v1708
      %v1761 = vunpack.c.h.b16 %v1708
      %v1762 = vunpack.c.l.b16 %v1709
      %v1763 = vunpack.c.h.b16 %v1709
      %v1764 = vunpack.c.l.b16 %v1710
      %v1765 = vunpack.c.h.b16 %v1710
      %v1766 = vunpack.c.l.b16 %v1711
      %v1767 = vunpack.c.h.b16 %v1711
      %v1768 = vunpack.c.l.b16 %v1712
      %v1769 = vunpack.c.h.b16 %v1712
      %v1770 = vunpack.c.l.b16 %v1713
      %v1771 = vunpack.c.h.b16 %v1713
      %v1772 = vunpack.c.l.b16 %v1714
      %v1773 = vunpack.c.h.b16 %v1714
      %v1774 = vunpack.c.l.b16 %v1715
      %v1775 = vunpack.c.h.b16 %v1715
      %v1776 = vpack.c.b16 %v1742, %v1740
      %v1777 = vpack.c.b16 %v1743, %v1741
      %v1778 = vpack.c.b16 %v1746, %v1744
      %v1779 = vpack.c.b16 %v1747, %v1745
      %v1780 = vpack.c.b16 %v1750, %v1748
      %v1781 = vpack.c.b16 %v1751, %v1749
      %v1782 = vpack.c.b16 %v1754, %v1752
      %v1783 = vpack.c.b16 %v1755, %v1753
      %v1784 = vpack.c.b16 %v1758, %v1756
      %v1785 = vpack.c.b16 %v1759, %v1757
      %v1786 = vpack.c.b16 %v1762, %v1760
      %v1787 = vpack.c.b16 %v1763, %v1761
      %v1788 = vpack.c.b16 %v1766, %v1764
      %v1789 = vpack.c.b16 %v1767, %v1765
      %v1790 = vpack.c.b16 %v1770, %v1768
      %v1791 = vpack.c.b16 %v1771, %v1769
      %v1792 = vpack.c.b16 %v1774, %v1772
      %v1793 = vpack.c.b16 %v1775, %v1773
      %v1813 = vsel %vm1079, %v1720, 0
      %1815 = vmatpush.bf16.msra.mxu0 %v1790
      %1816 = vmatpush.bf16.msra.mxu0 %v1788
      %1817 = vmatpush.bf16.msra.mxu0 %v1786
      %1818 = vmatpush.bf16.msra.mxu0 %v1784
      %1819 = vmatpush.bf16.msra.mxu0 %v1782
      %1820 = vmatpush.bf16.msra.mxu0 %v1780
      %1821 = vmatpush.bf16.msra.mxu0 %v1778
      %1822 = vmatpush.bf16.msra.mxu0 %v1776
      %1823 = vmatmul.bf16.gmra.mxu0 %v1719
      %v1824 = vpop.f32.mrf.mxu0
      %v1825 = vadd.f32 0.0, %v1824
      %v1826 = vpop.f32.mrf.mxu0
      %1827 = vdwg.mxu0
      %1828 = vmatpush.bf16.msra.mxu0 0
      %1829 = vmatpush.bf16.msra.mxu0 0
      %1830 = vmatpush.bf16.msra.mxu0 0
      %1831 = vmatpush.bf16.msra.mxu0 0
      %1832 = vmatpush.bf16.msra.mxu0 0
      %1833 = vmatpush.bf16.msra.mxu0 0
      %1834 = vmatpush.bf16.msra.mxu0 0
      %1835 = vmatpush.bf16.msra.mxu0 %v1792
      %1836 = vmatmul.bf16.gmra.mxu0 %v1813
      %v1837 = vpop.f32.mrf.mxu0
      %v1838 = vadd.f32 %v1825, %v1837
      %v1839 = vpop.f32.mrf.mxu0
      %1840 = vdwg.mxu0
      %1841 = vmatpush.bf16.msra.mxu0 %v1791
      %1842 = vmatpush.bf16.msra.mxu0 %v1789
      %1843 = vmatpush.bf16.msra.mxu0 %v1787
      %1844 = vmatpush.bf16.msra.mxu0 %v1785
      %1845 = vmatpush.bf16.msra.mxu0 %v1783
      %1846 = vmatpush.bf16.msra.mxu0 %v1781
      %1847 = vmatpush.bf16.msra.mxu0 %v1779
      %1848 = vmatpush.bf16.msra.mxu0 %v1777
      %1849 = vmatmul.bf16.gmra.mxu0 %v1719
      %v1850 = vpop.f32.mrf.mxu0
      %v1851 = vadd.f32 0.0, %v1850
      %v1852 = vpop.f32.mrf.mxu0
      %1853 = vdwg.mxu0
      %1854 = vmatpush.bf16.msra.mxu0 0
      %1855 = vmatpush.bf16.msra.mxu0 0
      %1856 = vmatpush.bf16.msra.mxu0 0
      %1857 = vmatpush.bf16.msra.mxu0 0
      %1858 = vmatpush.bf16.msra.mxu0 0
      %1859 = vmatpush.bf16.msra.mxu0 0
      %1860 = vmatpush.bf16.msra.mxu0 0
      %1861 = vmatpush.bf16.msra.mxu0 %v1793
      %1862 = vmatmul.bf16.gmra.mxu0 %v1813
      %v1863 = vpop.f32.mrf.mxu0
      %v1864 = vadd.f32 %v1851, %v1863
      %v1865 = vpop.f32.mrf.mxu0
      %1866 = vdwg.mxu0
      %v1867 = vmul.f32 %v1838, %v398
      %v1868 = vmul.f32 %v1864, %v399
      %1869 = vst [vmem:[#allocation2 + $0x8] sm:$0xff] %v1867
      %1870 = vst [vmem:[#allocation2 + $0x10] sm:$0xff] %v1868
      %v1871 = vmul.f32 %v1867, %v176
      %v1872 = vmul.f32 %v1868, %v177
      %1873 = vst [vmem:[#allocation2 + $0x48] sm:$0xff] %v1871
      %1874 = vst [vmem:[#allocation2 + $0x50] sm:$0xff] %v1872
      %v1875 = vmul.f32 %v1867, %v182
      %v1876 = vmul.f32 %v1868, %v183
      %1877 = vst [vmem:[#allocation2 + $0x88] sm:$0xff] %v1875
      %1878 = vst [vmem:[#allocation2 + $0x90] sm:$0xff] %v1876
      %v1879 = vld [vmem:[#allocation2 + $0x40] sm:$0xff]
      %v1880 = vld [vmem:[#allocation2 + $0x48] sm:$0xff]
      %v1881 = vld [vmem:[#allocation2 + $0x50] sm:$0xff]
      %v1882 = vpack.c.bf16 %v1880, %v1879
      %v1883 = vpack.c.bf16 %v1881, %v1881
      %1886 = vrot.lane.b32.xlu0 %v1882, 17
      %v1887 = vpop.permute.xlu0 %1886
      %1888 = vrot.lane.b32.xlu0 %v1883, 17
      %v1889 = vpop.permute.xlu0 %1888
      %v1890 = vrot.slane %v1887, 4
      %v1891 = vrot.slane %v1889, 4
      %v1892 = vsel %vm425, %v1890, %v1891
      %v1893 = vsel %vm427, %v1887, %v1892
      %1895 = vst [vmem:[#allocation3] sm:$0xff] %v1893
      %v1896 = vld [vmem:[#allocation2] sm:$0xff]
      %v1897 = vld [vmem:[#allocation2 + $0x8] sm:$0xff]
      %v1898 = vld [vmem:[#allocation2 + $0x10] sm:$0xff]
      %v1899 = vpack.c.bf16 %v1897, %v1896
      %v1900 = vpack.c.bf16 %v1898, %v1898
      %1903 = vrot.lane.b32.xlu0 %v1899, 16
      %v1904 = vpop.permute.xlu0 %1903
      %1905 = vrot.lane.b32.xlu0 %v1900, 16
      %v1906 = vpop.permute.xlu0 %1905
      %v1907 = vrot.slane %v1904, 4
      %v1908 = vrot.slane %v1906, 4
      %v1909 = vsel %vm425, %v1907, %v1908
      %v1910 = vsel %vm445, %v1904, %v1909
      %1912 = vst [vmem:[#allocation3 + $0x8] sm:$0xff] %v1910
      %v1913 = vld [vmem:[#allocation2 + $0x80] sm:$0xff]
      %v1914 = vld [vmem:[#allocation2 + $0x88] sm:$0xff]
      %v1915 = vld [vmem:[#allocation2 + $0x90] sm:$0xff]
      %v1916 = vpack.c.bf16 %v1914, %v1913
      %v1917 = vpack.c.bf16 %v1915, %v1915
      %1920 = vrot.lane.b32.xlu0 %v1916, 15
      %v1921 = vpop.permute.xlu0 %1920
      %1922 = vrot.lane.b32.xlu0 %v1917, 15
      %v1923 = vpop.permute.xlu0 %1922
      %v1924 = vrot.slane %v1921, 4
      %v1925 = vrot.slane %v1923, 4
      %v1926 = vsel %vm425, %v1924, %v1925
      %v1927 = vsel %vm463, %v1921, %v1926
      %1929 = vst [vmem:[#allocation3 + $0x10] sm:$0xff] %v1927
      %v1930 = vld [vmem:[#allocation2 + $0x40] sm:$0xff]
      %v1931 = vld [vmem:[#allocation2 + $0x48] sm:$0xff]
      %v1932 = vld [vmem:[#allocation2 + $0x50] sm:$0xff]
      %v1933 = vpack.c.bf16 %v1931, %v1930
      %v1934 = vpack.c.bf16 %v1932, %v1932
      %1937 = vrot.lane.b32.xlu0 %v1933, 1
      %v1938 = vpop.permute.xlu0 %1937
      %1939 = vrot.lane.b32.xlu0 %v1934, 1
      %v1940 = vpop.permute.xlu0 %1939
      %v1941 = vrot.slane %v1938, 4
      %v1942 = vrot.slane %v1940, 4
      %v1943 = vsel %vm425, %v1941, %v1942
      %v1944 = vsel %vm481, %v1938, %v1943
      %1946 = vst [vmem:[#allocation3 + $0x18] sm:$0xff] %v1944
      %v1947 = vld [vmem:[#allocation2 + $0x8] sm:$0xff]
      %v1948 = vld [vmem:[#allocation2 + $0x10] sm:$0xff]
      %v1949 = vpack.c.bf16 %v1948, %v1947
      %1950 = vst [vmem:[#allocation3 + $0x20] sm:$0xff] %v1949
      %v1951 = vld [vmem:[#allocation2 + $0x88] sm:$0xff]
      %v1952 = vld [vmem:[#allocation2 + $0x90] sm:$0xff]
      %v1953 = vld [vmem:[#allocation2 + $0x98] sm:$0xff]
      %v1954 = vpack.c.bf16 %v1952, %v1951
      %v1955 = vpack.c.bf16 %v1953, %v1953
      %1958 = vrot.lane.b32.xlu0 %v1954, 127
      %v1959 = vpop.permute.xlu0 %1958
      %1960 = vrot.lane.b32.xlu0 %v1955, 127
      %v1961 = vpop.permute.xlu0 %1960
      %v1962 = vrot.slane %v1959, 4
      %v1963 = vrot.slane %v1961, 4
      %v1964 = vsel %vm425, %v1962, %v1963
      %v1965 = vsel %vm503, %v1959, %v1964
      %1967 = vst [vmem:[#allocation3 + $0x28] sm:$0xff] %v1965
      %v1968 = vld [vmem:[#allocation2 + $0x48] sm:$0xff]
      %v1969 = vld [vmem:[#allocation2 + $0x50] sm:$0xff]
      %v1970 = vld [vmem:[#allocation2 + $0x58] sm:$0xff]
      %v1971 = vpack.c.bf16 %v1969, %v1968
      %v1972 = vpack.c.bf16 %v1970, %v1970
      %1975 = vrot.lane.b32.xlu0 %v1971, 113
      %v1976 = vpop.permute.xlu0 %1975
      %1977 = vrot.lane.b32.xlu0 %v1972, 113
      %v1978 = vpop.permute.xlu0 %1977
      %v1979 = vrot.slane %v1976, 4
      %v1980 = vrot.slane %v1978, 4
      %v1981 = vsel %vm425, %v1979, %v1980
      %v1982 = vsel %vm521, %v1976, %v1981
      %1984 = vst [vmem:[#allocation3 + $0x30] sm:$0xff] %v1982
      %v1985 = vld [vmem:[#allocation2 + $0x8] sm:$0xff]
      %v1986 = vld [vmem:[#allocation2 + $0x10] sm:$0xff]
      %v1987 = vld [vmem:[#allocation2 + $0x18] sm:$0xff]
      %v1988 = vpack.c.bf16 %v1986, %v1985
      %v1989 = vpack.c.bf16 %v1987, %v1987
      %1992 = vrot.lane.b32.xlu0 %v1988, 112
      %v1993 = vpop.permute.xlu0 %1992
      %1994 = vrot.lane.b32.xlu0 %v1989, 112
      %v1995 = vpop.permute.xlu0 %1994
      %v1996 = vrot.slane %v1993, 4
      %v1997 = vrot.slane %v1995, 4
      %v1998 = vsel %vm425, %v1996, %v1997
      %v1999 = vsel %vm539, %v1993, %v1998
      %2001 = vst [vmem:[#allocation3 + $0x38] sm:$0xff] %v1999
      %v2002 = vld [vmem:[#allocation2 + $0x88] sm:$0xff]
      %v2003 = vld [vmem:[#allocation2 + $0x90] sm:$0xff]
      %v2004 = vld [vmem:[#allocation2 + $0x98] sm:$0xff]
      %v2005 = vpack.c.bf16 %v2003, %v2002
      %v2006 = vpack.c.bf16 %v2004, %v2004
      %2009 = vrot.lane.b32.xlu0 %v2005, 111
      %v2010 = vpop.permute.xlu0 %2009
      %2011 = vrot.lane.b32.xlu0 %v2006, 111
      %v2012 = vpop.permute.xlu0 %2011
      %v2013 = vrot.slane %v2010, 4
      %v2014 = vrot.slane %v2012, 4
      %v2015 = vsel %vm425, %v2013, %v2014
      %v2016 = vsel %vm557, %v2010, %v2015
      %2018 = vst [vmem:[#allocation3 + $0x40] sm:$0xff] %v2016
      %v2019 = vld [vmem:[%s1 + $0x10] sm:$0xf]
      %v2020 = vld [vmem:[%s1 + $0x18] sm:$0xf]
      %v2021 = vld [vmem:[#allocation3] sm:$0xff]
      %v2022 = vld [vmem:[#allocation3 + $0x8] sm:$0xff]
      %v2023 = vld [vmem:[#allocation3 + $0x10] sm:$0xff]
      %v2024 = vld [vmem:[#allocation3 + $0x18] sm:$0xff]
      %v2025 = vld [vmem:[#allocation3 + $0x20] sm:$0xff]
      %v2026 = vld [vmem:[#allocation3 + $0x28] sm:$0xff]
      %v2027 = vld [vmem:[#allocation3 + $0x30] sm:$0xff]
      %v2028 = vld [vmem:[#allocation3 + $0x38] sm:$0xff]
      %v2029 = vld [vmem:[#allocation3 + $0x40] sm:$0xff]
      %v2032 = vunpack.c.l.b16 %v2019
      %v2033 = vunpack.c.l.b16 %v2020
      %v2034 = vpack.c.b16 %v2033, %v2032
      %v2044 = vunpack.c.l.b16 %v2021
      %v2045 = vunpack.c.h.b16 %v2021
      %v2046 = vunpack.c.l.b16 %v2022
      %v2047 = vunpack.c.h.b16 %v2022
      %v2048 = vunpack.c.l.b16 %v2023
      %v2049 = vunpack.c.h.b16 %v2023
      %v2050 = vunpack.c.l.b16 %v2024
      %v2051 = vunpack.c.h.b16 %v2024
      %v2052 = vunpack.c.l.b16 %v2025
      %v2053 = vunpack.c.h.b16 %v2025
      %v2054 = vunpack.c.l.b16 %v2026
      %v2055 = vunpack.c.h.b16 %v2026
      %v2056 = vunpack.c.l.b16 %v2027
      %v2057 = vunpack.c.h.b16 %v2027
      %v2058 = vunpack.c.l.b16 %v2028
      %v2059 = vunpack.c.h.b16 %v2028
      %v2060 = vunpack.c.l.b16 %v2029
      %v2061 = vunpack.c.h.b16 %v2029
      %v2062 = vpack.c.b16 %v2046, %v2044
      %v2063 = vpack.c.b16 %v2047, %v2045
      %v2064 = vpack.c.b16 %v2050, %v2048
      %v2065 = vpack.c.b16 %v2051, %v2049
      %v2066 = vpack.c.b16 %v2054, %v2052
      %v2067 = vpack.c.b16 %v2055, %v2053
      %v2068 = vpack.c.b16 %v2058, %v2056
      %v2069 = vpack.c.b16 %v2059, %v2057
      %v2070 = vpack.c.b16 %v2060, %v2060
      %v2071 = vpack.c.b16 %v2061, %v2061
      %v2081 = vsel %vm622, %v2034, 0
      %v2084 = vsel %vm327, %v2070, 0
      %v2087 = vsel %vm327, %v2071, 0
      %2089 = vmatpush.bf16.msra.mxu0 0
      %2090 = vmatpush.bf16.msra.mxu0 0
      %2091 = vmatpush.bf16.msra.mxu0 0
      %2092 = vmatpush.bf16.msra.mxu0 %v2084
      %2093 = vmatpush.bf16.msra.mxu0 %v2068
      %2094 = vmatpush.bf16.msra.mxu0 %v2066
      %2095 = vmatpush.bf16.msra.mxu0 %v2064
      %2096 = vmatpush.bf16.msra.mxu0 %v2062
      %2097 = vmatmul.bf16.gmra.mxu0 %v2081
      %v2098 = vpop.f32.mrf.mxu0
      %v2099 = vadd.f32 0.0, %v2098
      %v2100 = vpop.f32.mrf.mxu0
      %v2101 = vadd.f32 0.0, %v2100
      %2102 = vdwg.mxu0
      %2103 = vmatpush.bf16.msra.mxu0 0
      %2104 = vmatpush.bf16.msra.mxu0 0
      %2105 = vmatpush.bf16.msra.mxu0 0
      %2106 = vmatpush.bf16.msra.mxu0 %v2087
      %2107 = vmatpush.bf16.msra.mxu0 %v2069
      %2108 = vmatpush.bf16.msra.mxu0 %v2067
      %2109 = vmatpush.bf16.msra.mxu0 %v2065
      %2110 = vmatpush.bf16.msra.mxu0 %v2063
      %2111 = vmatmul.bf16.gmra.mxu0 %v2081
      %v2112 = vpop.f32.mrf.mxu0
      %v2113 = vadd.f32 0.0, %v2112
      %v2114 = vpop.f32.mrf.mxu0
      %v2115 = vadd.f32 0.0, %v2114
      %2116 = vdwg.mxu0
      %v2117 = vsub.f32 %v1393, %v2099
      %v2118 = vsub.f32 %v1394, %v2113
      %v2119 = vsub.f32 %v1395, %v2101
      %v2120 = vsub.f32 %v1396, %v2115
      %v2121 = vadd.f32 %v2117, %v642
      %v2122 = vadd.f32 %v2118, %v656
      %v2123 = vadd.f32 %v2119, %v644
      %v2124 = vadd.f32 %v2120, %v658
      %v2125 = vmax.f32 %v2121, 0.0
      %v2126 = vmax.f32 %v2122, 0.0
      %v2127 = vmax.f32 %v2123, 0.0
      %v2128 = vmax.f32 %v2124, 0.0
      %v2129 = vld [vmem:[%s1 + $0x60] sm:$0xf]
      %v2130 = vpack.c.bf16 %v2127, %v2125
      %v2131 = vpack.c.bf16 %v2128, %v2126
      %v2133 = vsel %vm1079, %v2129, 0
      %2135 = vmatpush.bf16.msra.mxu0 0
      %2136 = vmatpush.bf16.msra.mxu0 0
      %2137 = vmatpush.bf16.msra.mxu0 0
      %2138 = vmatpush.bf16.msra.mxu0 0
      %2139 = vmatpush.bf16.msra.mxu0 0
      %2140 = vmatpush.bf16.msra.mxu0 0
      %2141 = vmatpush.bf16.msra.mxu0 0
      %2142 = vmatpush.bf16.msra.mxu0 %v2130
      %2143 = vmatmul.bf16.gmra.mxu0 %v2133
      %v2144 = vpop.f32.mrf.mxu0
      %v2145 = vadd.f32 0.0, %v2144
      %v2146 = vpop.f32.mrf.mxu0
      %2147 = vdwg.mxu0
      %2148 = vmatpush.bf16.msra.mxu0 0
      %2149 = vmatpush.bf16.msra.mxu0 0
      %2150 = vmatpush.bf16.msra.mxu0 0
      %2151 = vmatpush.bf16.msra.mxu0 0
      %2152 = vmatpush.bf16.msra.mxu0 0
      %2153 = vmatpush.bf16.msra.mxu0 0
      %2154 = vmatpush.bf16.msra.mxu0 0
      %2155 = vmatpush.bf16.msra.mxu0 %v2131
      %2156 = vmatmul.bf16.gmra.mxu0 %v2133
      %v2157 = vpop.f32.mrf.mxu0
      %v2158 = vadd.f32 0.0, %v2157
      %v2159 = vpop.f32.mrf.mxu0
      %2160 = vdwg.mxu0
      %v2161 = vmul.f32 %v2145, %v382
      %v2162 = vmul.f32 %v2158, %v397
      %2163 = vst [vmem:[#allocation2 + $0x8] sm:$0xff] %v2161
      %2164 = vst [vmem:[#allocation2 + $0x10] sm:$0xff] %v2162
      %v2165 = vmul.f32 %v2161, %v176
      %v2166 = vmul.f32 %v2162, %v177
      %2167 = vst [vmem:[#allocation2 + $0x48] sm:$0xff] %v2165
      %2168 = vst [vmem:[#allocation2 + $0x50] sm:$0xff] %v2166
      %v2169 = vmul.f32 %v2161, %v182
      %v2170 = vmul.f32 %v2162, %v183
      %2171 = vst [vmem:[#allocation2 + $0x88] sm:$0xff] %v2169
      %2172 = vst [vmem:[#allocation2 + $0x90] sm:$0xff] %v2170
      %v2173 = vld [vmem:[#allocation2 + $0x40] sm:$0xff]
      %v2174 = vld [vmem:[#allocation2 + $0x48] sm:$0xff]
      %v2175 = vld [vmem:[#allocation2 + $0x50] sm:$0xff]
      %v2176 = vpack.c.bf16 %v2174, %v2173
      %v2177 = vpack.c.bf16 %v2175, %v2175
      %2180 = vrot.lane.b32.xlu0 %v2176, 17
      %v2181 = vpop.permute.xlu0 %2180
      %2182 = vrot.lane.b32.xlu0 %v2177, 17
      %v2183 = vpop.permute.xlu0 %2182
      %v2184 = vrot.slane %v2181, 4
      %v2185 = vrot.slane %v2183, 4
      %v2186 = vsel %vm425, %v2184, %v2185
      %v2187 = vsel %vm427, %v2181, %v2186
      %2189 = vst [vmem:[#allocation3] sm:$0xff] %v2187
      %v2190 = vld [vmem:[#allocation2] sm:$0xff]
      %v2191 = vld [vmem:[#allocation2 + $0x8] sm:$0xff]
      %v2192 = vld [vmem:[#allocation2 + $0x10] sm:$0xff]
      %v2193 = vpack.c.bf16 %v2191, %v2190
      %v2194 = vpack.c.bf16 %v2192, %v2192
      %2197 = vrot.lane.b32.xlu0 %v2193, 16
      %v2198 = vpop.permute.xlu0 %2197
      %2199 = vrot.lane.b32.xlu0 %v2194, 16
      %v2200 = vpop.permute.xlu0 %2199
      %v2201 = vrot.slane %v2198, 4
      %v2202 = vrot.slane %v2200, 4
      %v2203 = vsel %vm425, %v2201, %v2202
      %v2204 = vsel %vm445, %v2198, %v2203
      %2206 = vst [vmem:[#allocation3 + $0x8] sm:$0xff] %v2204
      %v2207 = vld [vmem:[#allocation2 + $0x80] sm:$0xff]
      %v2208 = vld [vmem:[#allocation2 + $0x88] sm:$0xff]
      %v2209 = vld [vmem:[#allocation2 + $0x90] sm:$0xff]
      %v2210 = vpack.c.bf16 %v2208, %v2207
      %v2211 = vpack.c.bf16 %v2209, %v2209
      %2214 = vrot.lane.b32.xlu0 %v2210, 15
      %v2215 = vpop.permute.xlu0 %2214
      %2216 = vrot.lane.b32.xlu0 %v2211, 15
      %v2217 = vpop.permute.xlu0 %2216
      %v2218 = vrot.slane %v2215, 4
      %v2219 = vrot.slane %v2217, 4
      %v2220 = vsel %vm425, %v2218, %v2219
      %v2221 = vsel %vm463, %v2215, %v2220
      %2223 = vst [vmem:[#allocation3 + $0x10] sm:$0xff] %v2221
      %v2224 = vld [vmem:[#allocation2 + $0x40] sm:$0xff]
      %v2225 = vld [vmem:[#allocation2 + $0x48] sm:$0xff]
      %v2226 = vld [vmem:[#allocation2 + $0x50] sm:$0xff]
      %v2227 = vpack.c.bf16 %v2225, %v2224
      %v2228 = vpack.c.bf16 %v2226, %v2226
      %2231 = vrot.lane.b32.xlu0 %v2227, 1
      %v2232 = vpop.permute.xlu0 %2231
      %2233 = vrot.lane.b32.xlu0 %v2228, 1
      %v2234 = vpop.permute.xlu0 %2233
      %v2235 = vrot.slane %v2232, 4
      %v2236 = vrot.slane %v2234, 4
      %v2237 = vsel %vm425, %v2235, %v2236
      %v2238 = vsel %vm481, %v2232, %v2237
      %2240 = vst [vmem:[#allocation3 + $0x18] sm:$0xff] %v2238
      %v2241 = vld [vmem:[#allocation2 + $0x8] sm:$0xff]
      %v2242 = vld [vmem:[#allocation2 + $0x10] sm:$0xff]
      %v2243 = vpack.c.bf16 %v2242, %v2241
      %2244 = vst [vmem:[#allocation3 + $0x20] sm:$0xff] %v2243
      %v2245 = vld [vmem:[#allocation2 + $0x88] sm:$0xff]
      %v2246 = vld [vmem:[#allocation2 + $0x90] sm:$0xff]
      %v2247 = vld [vmem:[#allocation2 + $0x98] sm:$0xff]
      %v2248 = vpack.c.bf16 %v2246, %v2245
      %v2249 = vpack.c.bf16 %v2247, %v2247
      %2252 = vrot.lane.b32.xlu0 %v2248, 127
      %v2253 = vpop.permute.xlu0 %2252
      %2254 = vrot.lane.b32.xlu0 %v2249, 127
      %v2255 = vpop.permute.xlu0 %2254
      %v2256 = vrot.slane %v2253, 4
      %v2257 = vrot.slane %v2255, 4
      %v2258 = vsel %vm425, %v2256, %v2257
      %v2259 = vsel %vm503, %v2253, %v2258
      %2261 = vst [vmem:[#allocation3 + $0x28] sm:$0xff] %v2259
      %v2262 = vld [vmem:[#allocation2 + $0x48] sm:$0xff]
      %v2263 = vld [vmem:[#allocation2 + $0x50] sm:$0xff]
      %v2264 = vld [vmem:[#allocation2 + $0x58] sm:$0xff]
      %v2265 = vpack.c.bf16 %v2263, %v2262
      %v2266 = vpack.c.bf16 %v2264, %v2264
      %2269 = vrot.lane.b32.xlu0 %v2265, 113
      %v2270 = vpop.permute.xlu0 %2269
      %2271 = vrot.lane.b32.xlu0 %v2266, 113
      %v2272 = vpop.permute.xlu0 %2271
      %v2273 = vrot.slane %v2270, 4
      %v2274 = vrot.slane %v2272, 4
      %v2275 = vsel %vm425, %v2273, %v2274
      %v2276 = vsel %vm521, %v2270, %v2275
      %2278 = vst [vmem:[#allocation3 + $0x30] sm:$0xff] %v2276
      %v2279 = vld [vmem:[#allocation2 + $0x8] sm:$0xff]
      %v2280 = vld [vmem:[#allocation2 + $0x10] sm:$0xff]
      %v2281 = vld [vmem:[#allocation2 + $0x18] sm:$0xff]
      %v2282 = vpack.c.bf16 %v2280, %v2279
      %v2283 = vpack.c.bf16 %v2281, %v2281
      %2286 = vrot.lane.b32.xlu0 %v2282, 112
      %v2287 = vpop.permute.xlu0 %2286
      %2288 = vrot.lane.b32.xlu0 %v2283, 112
      %v2289 = vpop.permute.xlu0 %2288
      %v2290 = vrot.slane %v2287, 4
      %v2291 = vrot.slane %v2289, 4
      %v2292 = vsel %vm425, %v2290, %v2291
      %v2293 = vsel %vm539, %v2287, %v2292
      %2295 = vst [vmem:[#allocation3 + $0x38] sm:$0xff] %v2293
      %v2296 = vld [vmem:[#allocation2 + $0x88] sm:$0xff]
      %v2297 = vld [vmem:[#allocation2 + $0x90] sm:$0xff]
      %v2298 = vld [vmem:[#allocation2 + $0x98] sm:$0xff]
      %v2299 = vpack.c.bf16 %v2297, %v2296
      %v2300 = vpack.c.bf16 %v2298, %v2298
      %2303 = vrot.lane.b32.xlu0 %v2299, 111
      %v2304 = vpop.permute.xlu0 %2303
      %2305 = vrot.lane.b32.xlu0 %v2300, 111
      %v2306 = vpop.permute.xlu0 %2305
      %v2307 = vrot.slane %v2304, 4
      %v2308 = vrot.slane %v2306, 4
      %v2309 = vsel %vm425, %v2307, %v2308
      %v2310 = vsel %vm557, %v2304, %v2309
      %2312 = vst [vmem:[#allocation3 + $0x40] sm:$0xff] %v2310
      %v2313 = vld [vmem:[%s1 + $0x20] sm:$0xf]
      %v2314 = vld [vmem:[%s1 + $0x28] sm:$0xf]
      %v2315 = vld [vmem:[#allocation3] sm:$0xff]
      %v2316 = vld [vmem:[#allocation3 + $0x8] sm:$0xff]
      %v2317 = vld [vmem:[#allocation3 + $0x10] sm:$0xff]
      %v2318 = vld [vmem:[#allocation3 + $0x18] sm:$0xff]
      %v2319 = vld [vmem:[#allocation3 + $0x20] sm:$0xff]
      %v2320 = vld [vmem:[#allocation3 + $0x28] sm:$0xff]
      %v2321 = vld [vmem:[#allocation3 + $0x30] sm:$0xff]
      %v2322 = vld [vmem:[#allocation3 + $0x38] sm:$0xff]
      %v2323 = vld [vmem:[#allocation3 + $0x40] sm:$0xff]
      %v2326 = vunpack.c.l.b16 %v2313
      %v2327 = vunpack.c.l.b16 %v2314
      %v2328 = vpack.c.b16 %v2327, %v2326
      %v2338 = vunpack.c.l.b16 %v2315
      %v2339 = vunpack.c.h.b16 %v2315
      %v2340 = vunpack.c.l.b16 %v2316
      %v2341 = vunpack.c.h.b16 %v2316
      %v2342 = vunpack.c.l.b16 %v2317
      %v2343 = vunpack.c.h.b16 %v2317
      %v2344 = vunpack.c.l.b16 %v2318
      %v2345 = vunpack.c.h.b16 %v2318
      %v2346 = vunpack.c.l.b16 %v2319
      %v2347 = vunpack.c.h.b16 %v2319
      %v2348 = vunpack.c.l.b16 %v2320
      %v2349 = vunpack.c.h.b16 %v2320
      %v2350 = vunpack.c.l.b16 %v2321
      %v2351 = vunpack.c.h.b16 %v2321
      %v2352 = vunpack.c.l.b16 %v2322
      %v2353 = vunpack.c.h.b16 %v2322
      %v2354 = vunpack.c.l.b16 %v2323
      %v2355 = vunpack.c.h.b16 %v2323
      %v2356 = vpack.c.b16 %v2340, %v2338
      %v2357 = vpack.c.b16 %v2341, %v2339
      %v2358 = vpack.c.b16 %v2344, %v2342
      %v2359 = vpack.c.b16 %v2345, %v2343
      %v2360 = vpack.c.b16 %v2348, %v2346
      %v2361 = vpack.c.b16 %v2349, %v2347
      %v2362 = vpack.c.b16 %v2352, %v2350
      %v2363 = vpack.c.b16 %v2353, %v2351
      %v2364 = vpack.c.b16 %v2354, %v2354
      %v2365 = vpack.c.b16 %v2355, %v2355
      %v2375 = vsel %vm622, %v2328, 0
      %v2378 = vsel %vm327, %v2364, 0
      %v2381 = vsel %vm327, %v2365, 0
      %2383 = vmatpush.bf16.msra.mxu0 0
      %2384 = vmatpush.bf16.msra.mxu0 0
      %2385 = vmatpush.bf16.msra.mxu0 0
      %2386 = vmatpush.bf16.msra.mxu0 %v2378
      %2387 = vmatpush.bf16.msra.mxu0 %v2362
      %2388 = vmatpush.bf16.msra.mxu0 %v2360
      %2389 = vmatpush.bf16.msra.mxu0 %v2358
      %2390 = vmatpush.bf16.msra.mxu0 %v2356
      %2391 = vmatmul.bf16.gmra.mxu0 %v2375
      %v2392 = vpop.f32.mrf.mxu0
      %v2393 = vadd.f32 0.0, %v2392
      %v2394 = vpop.f32.mrf.mxu0
      %v2395 = vadd.f32 0.0, %v2394
      %2396 = vdwg.mxu0
      %2397 = vmatpush.bf16.msra.mxu0 0
      %2398 = vmatpush.bf16.msra.mxu0 0
      %2399 = vmatpush.bf16.msra.mxu0 0
      %2400 = vmatpush.bf16.msra.mxu0 %v2381
      %2401 = vmatpush.bf16.msra.mxu0 %v2363
      %2402 = vmatpush.bf16.msra.mxu0 %v2361
      %2403 = vmatpush.bf16.msra.mxu0 %v2359
      %2404 = vmatpush.bf16.msra.mxu0 %v2357
      %2405 = vmatmul.bf16.gmra.mxu0 %v2375
      %v2406 = vpop.f32.mrf.mxu0
      %v2407 = vadd.f32 0.0, %v2406
      %v2408 = vpop.f32.mrf.mxu0
      %v2409 = vadd.f32 0.0, %v2408
      %2410 = vdwg.mxu0
      %v2411 = vmax.f32 %v2393, 0.0
      %v2412 = vmax.f32 %v2407, 0.0
      %v2413 = vmax.f32 %v2395, 0.0
      %v2414 = vmax.f32 %v2409, 0.0
      %2415 = vst [vmem:[#allocation2 + $0x8] sm:$0xff] %v2411
      %2416 = vst [vmem:[#allocation2 + $0x10] sm:$0xff] %v2412
      %2417 = vst [vmem:[#allocation2 + $0x28] sm:$0xff] %v2413
      %2418 = vst [vmem:[#allocation2 + $0x30] sm:$0xff] %v2414
      %v2419 = vmul.f32 %v2411, %v176
      %v2420 = vmul.f32 %v2412, %v177
      %v2421 = vmul.f32 %v2413, %v176
      %v2422 = vmul.f32 %v2414, %v177
      %2423 = vst [vmem:[#allocation2 + $0x48] sm:$0xff] %v2419
      %2424 = vst [vmem:[#allocation2 + $0x50] sm:$0xff] %v2420
      %2425 = vst [vmem:[#allocation2 + $0x68] sm:$0xff] %v2421
      %2426 = vst [vmem:[#allocation2 + $0x70] sm:$0xff] %v2422
      %v2427 = vmul.f32 %v2411, %v182
      %v2428 = vmul.f32 %v2412, %v183
      %v2429 = vmul.f32 %v2413, %v182
      %v2430 = vmul.f32 %v2414, %v183
      %2431 = vst [vmem:[#allocation2 + $0x88] sm:$0xff] %v2427
      %2432 = vst [vmem:[#allocation2 + $0x90] sm:$0xff] %v2428
      %2433 = vst [vmem:[#allocation2 + $0xa8] sm:$0xff] %v2429
      %2434 = vst [vmem:[#allocation2 + $0xb0] sm:$0xff] %v2430
      %v2435 = vld [vmem:[#allocation2 + $0x40] sm:$0xff]
      %v2436 = vld [vmem:[#allocation2 + $0x48] sm:$0xff]
      %v2437 = vld [vmem:[#allocation2 + $0x50] sm:$0xff]
      %v2438 = vld [vmem:[#allocation2 + $0x60] sm:$0xff]
      %v2439 = vld [vmem:[#allocation2 + $0x68] sm:$0xff]
      %v2440 = vld [vmem:[#allocation2 + $0x70] sm:$0xff]
      %v2441 = vpack.c.bf16 %v2436, %v2435
      %v2442 = vpack.c.bf16 %v2437, %v2437
      %v2443 = vpack.c.bf16 %v2439, %v2438
      %v2444 = vpack.c.bf16 %v2440, %v2440
      %2449 = vrot.lane.b32.xlu0 %v2441, 17
      %v2450 = vpop.permute.xlu0 %2449
      %2451 = vrot.lane.b32.xlu0 %v2442, 17
      %v2452 = vpop.permute.xlu0 %2451
      %2453 = vrot.lane.b32.xlu0 %v2443, 17
      %v2454 = vpop.permute.xlu0 %2453
      %2455 = vrot.lane.b32.xlu0 %v2444, 17
      %v2456 = vpop.permute.xlu0 %2455
      %v2457 = vrot.slane %v2450, 4
      %v2458 = vrot.slane %v2452, 4
      %v2459 = vrot.slane %v2454, 4
      %v2460 = vrot.slane %v2456, 4
      %v2461 = vsel %vm425, %v2457, %v2458
      %v2462 = vsel %vm427, %v2450, %v2461
      %v2463 = vsel %vm425, %v2459, %v2460
      %v2464 = vsel %vm427, %v2454, %v2463
      %2467 = vst [vmem:[#allocation3] sm:$0xff] %v2462
      %2468 = vst [vmem:[#allocation3 + $0x8] sm:$0xff] %v2464
      %v2469 = vld [vmem:[#allocation2] sm:$0xff]
      %v2470 = vld [vmem:[#allocation2 + $0x8] sm:$0xff]
      %v2471 = vld [vmem:[#allocation2 + $0x10] sm:$0xff]
      %v2472 = vld [vmem:[#allocation2 + $0x20] sm:$0xff]
      %v2473 = vld [vmem:[#allocation2 + $0x28] sm:$0xff]
      %v2474 = vld [vmem:[#allocation2 + $0x30] sm:$0xff]
      %v2475 = vpack.c.bf16 %v2470, %v2469
      %v2476 = vpack.c.bf16 %v2471, %v2471
      %v2477 = vpack.c.bf16 %v2473, %v2472
      %v2478 = vpack.c.bf16 %v2474, %v2474
      %2483 = vrot.lane.b32.xlu0 %v2475, 16
      %v2484 = vpop.permute.xlu0 %2483
      %2485 = vrot.lane.b32.xlu0 %v2476, 16
      %v2486 = vpop.permute.xlu0 %2485
      %2487 = vrot.lane.b32.xlu0 %v2477, 16
      %v2488 = vpop.permute.xlu0 %2487
      %2489 = vrot.lane.b32.xlu0 %v2478, 16
      %v2490 = vpop.permute.xlu0 %2489
      %v2491 = vrot.slane %v2484, 4
      %v2492 = vrot.slane %v2486, 4
      %v2493 = vrot.slane %v2488, 4
      %v2494 = vrot.slane %v2490, 4
      %v2495 = vsel %vm425, %v2491, %v2492
      %v2496 = vsel %vm445, %v2484, %v2495
      %v2497 = vsel %vm425, %v2493, %v2494
      %v2498 = vsel %vm445, %v2488, %v2497
      %2501 = vst [vmem:[#allocation3 + $0x10] sm:$0xff] %v2496
      %2502 = vst [vmem:[#allocation3 + $0x18] sm:$0xff] %v2498
      %v2503 = vld [vmem:[#allocation2 + $0x80] sm:$0xff]
      %v2504 = vld [vmem:[#allocation2 + $0x88] sm:$0xff]
      %v2505 = vld [vmem:[#allocation2 + $0x90] sm:$0xff]
      %v2506 = vld [vmem:[#allocation2 + $0xa0] sm:$0xff]
      %v2507 = vld [vmem:[#allocation2 + $0xa8] sm:$0xff]
      %v2508 = vld [vmem:[#allocation2 + $0xb0] sm:$0xff]
      %v2509 = vpack.c.bf16 %v2504, %v2503
      %v2510 = vpack.c.bf16 %v2505, %v2505
      %v2511 = vpack.c.bf16 %v2507, %v2506
      %v2512 = vpack.c.bf16 %v2508, %v2508
      %2517 = vrot.lane.b32.xlu0 %v2509, 15
      %v2518 = vpop.permute.xlu0 %2517
      %2519 = vrot.lane.b32.xlu0 %v2510, 15
      %v2520 = vpop.permute.xlu0 %2519
      %2521 = vrot.lane.b32.xlu0 %v2511, 15
      %v2522 = vpop.permute.xlu0 %2521
      %2523 = vrot.lane.b32.xlu0 %v2512, 15
      %v2524 = vpop.permute.xlu0 %2523
      %v2525 = vrot.slane %v2518, 4
      %v2526 = vrot.slane %v2520, 4
      %v2527 = vrot.slane %v2522, 4
      %v2528 = vrot.slane %v2524, 4
      %v2529 = vsel %vm425, %v2525, %v2526
      %v2530 = vsel %vm463, %v2518, %v2529
      %v2531 = vsel %vm425, %v2527, %v2528
      %v2532 = vsel %vm463, %v2522, %v2531
      %2535 = vst [vmem:[#allocation3 + $0x20] sm:$0xff] %v2530
      %2536 = vst [vmem:[#allocation3 + $0x28] sm:$0xff] %v2532
      %v2537 = vld [vmem:[#allocation2 + $0x40] sm:$0xff]
      %v2538 = vld [vmem:[#allocation2 + $0x48] sm:$0xff]
      %v2539 = vld [vmem:[#allocation2 + $0x50] sm:$0xff]
      %v2540 = vld [vmem:[#allocation2 + $0x60] sm:$0xff]
      %v2541 = vld [vmem:[#allocation2 + $0x68] sm:$0xff]
      %v2542 = vld [vmem:[#allocation2 + $0x70] sm:$0xff]
      %v2543 = vpack.c.bf16 %v2538, %v2537
      %v2544 = vpack.c.bf16 %v2539, %v2539
      %v2545 = vpack.c.bf16 %v2541, %v2540
      %v2546 = vpack.c.bf16 %v2542, %v2542
      %2551 = vrot.lane.b32.xlu0 %v2543, 1
      %v2552 = vpop.permute.xlu0 %2551
      %2553 = vrot.lane.b32.xlu0 %v2544, 1
      %v2554 = vpop.permute.xlu0 %2553
      %2555 = vrot.lane.b32.xlu0 %v2545, 1
      %v2556 = vpop.permute.xlu0 %2555
      %2557 = vrot.lane.b32.xlu0 %v2546, 1
      %v2558 = vpop.permute.xlu0 %2557
      %v2559 = vrot.slane %v2552, 4
      %v2560 = vrot.slane %v2554, 4
      %v2561 = vrot.slane %v2556, 4
      %v2562 = vrot.slane %v2558, 4
      %v2563 = vsel %vm425, %v2559, %v2560
      %v2564 = vsel %vm481, %v2552, %v2563
      %v2565 = vsel %vm425, %v2561, %v2562
      %v2566 = vsel %vm481, %v2556, %v2565
      %2569 = vst [vmem:[#allocation3 + $0x30] sm:$0xff] %v2564
      %2570 = vst [vmem:[#allocation3 + $0x38] sm:$0xff] %v2566
      %v2571 = vld [vmem:[#allocation2 + $0x8] sm:$0xff]
      %v2572 = vld [vmem:[#allocation2 + $0x10] sm:$0xff]
      %v2573 = vld [vmem:[#allocation2 + $0x28] sm:$0xff]
      %v2574 = vld [vmem:[#allocation2 + $0x30] sm:$0xff]
      %v2575 = vpack.c.bf16 %v2572, %v2571
      %v2576 = vpack.c.bf16 %v2574, %v2573
      %2577 = vst [vmem:[#allocation3 + $0x40] sm:$0xff] %v2575
      %2578 = vst [vmem:[#allocation3 + $0x48] sm:$0xff] %v2576
      %v2579 = vld [vmem:[#allocation2 + $0x88] sm:$0xff]
      %v2580 = vld [vmem:[#allocation2 + $0x90] sm:$0xff]
      %v2581 = vld [vmem:[#allocation2 + $0x98] sm:$0xff]
      %v2582 = vld [vmem:[#allocation2 + $0xa8] sm:$0xff]
      %v2583 = vld [vmem:[#allocation2 + $0xb0] sm:$0xff]
      %v2584 = vld [vmem:[#allocation2 + $0xb8] sm:$0xff]
      %v2585 = vpack.c.bf16 %v2580, %v2579
      %v2586 = vpack.c.bf16 %v2581, %v2581
      %v2587 = vpack.c.bf16 %v2583, %v2582
      %v2588 = vpack.c.bf16 %v2584, %v2584
      %2593 = vrot.lane.b32.xlu0 %v2585, 127
      %v2594 = vpop.permute.xlu0 %2593
      %2595 = vrot.lane.b32.xlu0 %v2586, 127
      %v2596 = vpop.permute.xlu0 %2595
      %2597 = vrot.lane.b32.xlu0 %v2587, 127
      %v2598 = vpop.permute.xlu0 %2597
      %2599 = vrot.lane.b32.xlu0 %v2588, 127
      %v2600 = vpop.permute.xlu0 %2599
      %v2601 = vrot.slane %v2594, 4
      %v2602 = vrot.slane %v2596, 4
      %v2603 = vrot.slane %v2598, 4
      %v2604 = vrot.slane %v2600, 4
      %v2605 = vsel %vm425, %v2601, %v2602
      %v2606 = vsel %vm503, %v2594, %v2605
      %v2607 = vsel %vm425, %v2603, %v2604
      %v2608 = vsel %vm503, %v2598, %v2607
      %2611 = vst [vmem:[#allocation3 + $0x50] sm:$0xff] %v2606
      %2612 = vst [vmem:[#allocation3 + $0x58] sm:$0xff] %v2608
      %v2613 = vld [vmem:[#allocation2 + $0x48] sm:$0xff]
      %v2614 = vld [vmem:[#allocation2 + $0x50] sm:$0xff]
      %v2615 = vld [vmem:[#allocation2 + $0x58] sm:$0xff]
      %v2616 = vld [vmem:[#allocation2 + $0x68] sm:$0xff]
      %v2617 = vld [vmem:[#allocation2 + $0x70] sm:$0xff]
      %v2618 = vld [vmem:[#allocation2 + $0x78] sm:$0xff]
      %v2619 = vpack.c.bf16 %v2614, %v2613
      %v2620 = vpack.c.bf16 %v2615, %v2615
      %v2621 = vpack.c.bf16 %v2617, %v2616
      %v2622 = vpack.c.bf16 %v2618, %v2618
      %2627 = vrot.lane.b32.xlu0 %v2619, 113
      %v2628 = vpop.permute.xlu0 %2627
      %2629 = vrot.lane.b32.xlu0 %v2620, 113
      %v2630 = vpop.permute.xlu0 %2629
      %2631 = vrot.lane.b32.xlu0 %v2621, 113
      %v2632 = vpop.permute.xlu0 %2631
      %2633 = vrot.lane.b32.xlu0 %v2622, 113
      %v2634 = vpop.permute.xlu0 %2633
      %v2635 = vrot.slane %v2628, 4
      %v2636 = vrot.slane %v2630, 4
      %v2637 = vrot.slane %v2632, 4
      %v2638 = vrot.slane %v2634, 4
      %v2639 = vsel %vm425, %v2635, %v2636
      %v2640 = vsel %vm521, %v2628, %v2639
      %v2641 = vsel %vm425, %v2637, %v2638
      %v2642 = vsel %vm521, %v2632, %v2641
      %2645 = vst [vmem:[#allocation3 + $0x60] sm:$0xff] %v2640
      %2646 = vst [vmem:[#allocation3 + $0x68] sm:$0xff] %v2642
      %v2647 = vld [vmem:[#allocation2 + $0x8] sm:$0xff]
      %v2648 = vld [vmem:[#allocation2 + $0x10] sm:$0xff]
      %v2649 = vld [vmem:[#allocation2 + $0x18] sm:$0xff]
      %v2650 = vld [vmem:[#allocation2 + $0x28] sm:$0xff]
      %v2651 = vld [vmem:[#allocation2 + $0x30] sm:$0xff]
      %v2652 = vld [vmem:[#allocation2 + $0x38] sm:$0xff]
      %v2653 = vpack.c.bf16 %v2648, %v2647
      %v2654 = vpack.c.bf16 %v2649, %v2649
      %v2655 = vpack.c.bf16 %v2651, %v2650
      %v2656 = vpack.c.bf16 %v2652, %v2652
      %2661 = vrot.lane.b32.xlu0 %v2653, 112
      %v2662 = vpop.permute.xlu0 %2661
      %2663 = vrot.lane.b32.xlu0 %v2654, 112
      %v2664 = vpop.permute.xlu0 %2663
      %2665 = vrot.lane.b32.xlu0 %v2655, 112
      %v2666 = vpop.permute.xlu0 %2665
      %2667 = vrot.lane.b32.xlu0 %v2656, 112
      %v2668 = vpop.permute.xlu0 %2667
      %v2669 = vrot.slane %v2662, 4
      %v2670 = vrot.slane %v2664, 4
      %v2671 = vrot.slane %v2666, 4
      %v2672 = vrot.slane %v2668, 4
      %v2673 = vsel %vm425, %v2669, %v2670
      %v2674 = vsel %vm539, %v2662, %v2673
      %v2675 = vsel %vm425, %v2671, %v2672
      %v2676 = vsel %vm539, %v2666, %v2675
      %2679 = vst [vmem:[#allocation3 + $0x70] sm:$0xff] %v2674
      %2680 = vst [vmem:[#allocation3 + $0x78] sm:$0xff] %v2676
      %v2681 = vld [vmem:[#allocation2 + $0x88] sm:$0xff]
      %v2682 = vld [vmem:[#allocation2 + $0x90] sm:$0xff]
      %v2683 = vld [vmem:[#allocation2 + $0x98] sm:$0xff]
      %v2684 = vld [vmem:[#allocation2 + $0xa8] sm:$0xff]
      %v2685 = vld [vmem:[#allocation2 + $0xb0] sm:$0xff]
      %v2686 = vld [vmem:[#allocation2 + $0xb8] sm:$0xff]
      %v2687 = vpack.c.bf16 %v2682, %v2681
      %v2688 = vpack.c.bf16 %v2683, %v2683
      %v2689 = vpack.c.bf16 %v2685, %v2684
      %v2690 = vpack.c.bf16 %v2686, %v2686
      %2695 = vrot.lane.b32.xlu0 %v2687, 111
      %v2696 = vpop.permute.xlu0 %2695
      %2697 = vrot.lane.b32.xlu0 %v2688, 111
      %v2698 = vpop.permute.xlu0 %2697
      %2699 = vrot.lane.b32.xlu0 %v2689, 111
      %v2700 = vpop.permute.xlu0 %2699
      %2701 = vrot.lane.b32.xlu0 %v2690, 111
      %v2702 = vpop.permute.xlu0 %2701
      %v2703 = vrot.slane %v2696, 4
      %v2704 = vrot.slane %v2698, 4
      %v2705 = vrot.slane %v2700, 4
      %v2706 = vrot.slane %v2702, 4
      %v2707 = vsel %vm425, %v2703, %v2704
      %v2708 = vsel %vm557, %v2696, %v2707
      %v2709 = vsel %vm425, %v2705, %v2706
      %v2710 = vsel %vm557, %v2700, %v2709
      %2713 = vst [vmem:[#allocation3 + $0x80] sm:$0xff] %v2708
      %2714 = vst [vmem:[#allocation3 + $0x88] sm:$0xff] %v2710
      %v2715 = vld [vmem:[%s1 + $0x58] sm:$0xff]
      %v2716 = vld [vmem:[#allocation3] sm:$0xff]
      %v2717 = vld [vmem:[#allocation3 + $0x8] sm:$0xff]
      %v2718 = vld [vmem:[#allocation3 + $0x10] sm:$0xff]
      %v2719 = vld [vmem:[#allocation3 + $0x18] sm:$0xff]
      %v2720 = vld [vmem:[#allocation3 + $0x20] sm:$0xff]
      %v2721 = vld [vmem:[#allocation3 + $0x28] sm:$0xff]
      %v2722 = vld [vmem:[#allocation3 + $0x30] sm:$0xff]
      %v2723 = vld [vmem:[#allocation3 + $0x38] sm:$0xff]
      %v2724 = vld [vmem:[#allocation3 + $0x40] sm:$0xff]
      %v2725 = vld [vmem:[#allocation3 + $0x48] sm:$0xff]
      %v2726 = vld [vmem:[#allocation3 + $0x50] sm:$0xff]
      %v2727 = vld [vmem:[#allocation3 + $0x58] sm:$0xff]
      %v2728 = vld [vmem:[#allocation3 + $0x60] sm:$0xff]
      %v2729 = vld [vmem:[#allocation3 + $0x68] sm:$0xff]
      %v2730 = vld [vmem:[#allocation3 + $0x70] sm:$0xff]
      %v2731 = vld [vmem:[#allocation3 + $0x78] sm:$0xff]
      %v2732 = vld [vmem:[#allocation3 + $0x80] sm:$0xff]
      %v2733 = vld [vmem:[#allocation3 + $0x88] sm:$0xff]
      %v2735 = vunpack.c.l.b16 %v2715
      %v2736 = vunpack.c.h.b16 %v2715
      %v2737 = vpack.c.b16 %v2735, %v2735
      %v2738 = vpack.c.b16 %v2736, %v2736
      %v2758 = vunpack.c.l.b16 %v2716
      %v2759 = vunpack.c.h.b16 %v2716
      %v2760 = vunpack.c.l.b16 %v2717
      %v2761 = vunpack.c.h.b16 %v2717
      %v2762 = vunpack.c.l.b16 %v2718
      %v2763 = vunpack.c.h.b16 %v2718
      %v2764 = vunpack.c.l.b16 %v2719
      %v2765 = vunpack.c.h.b16 %v2719
      %v2766 = vunpack.c.l.b16 %v2720
      %v2767 = vunpack.c.h.b16 %v2720
      %v2768 = vunpack.c.l.b16 %v2721
      %v2769 = vunpack.c.h.b16 %v2721
      %v2770 = vunpack.c.l.b16 %v2722
      %v2771 = vunpack.c.h.b16 %v2722
      %v2772 = vunpack.c.l.b16 %v2723
      %v2773 = vunpack.c.h.b16 %v2723
      %v2774 = vunpack.c.l.b16 %v2724
      %v2775 = vunpack.c.h.b16 %v2724
      %v2776 = vunpack.c.l.b16 %v2725
      %v2777 = vunpack.c.h.b16 %v2725
      %v2778 = vunpack.c.l.b16 %v2726
      %v2779 = vunpack.c.h.b16 %v2726
      %v2780 = vunpack.c.l.b16 %v2727
      %v2781 = vunpack.c.h.b16 %v2727
      %v2782 = vunpack.c.l.b16 %v2728
      %v2783 = vunpack.c.h.b16 %v2728
      %v2784 = vunpack.c.l.b16 %v2729
      %v2785 = vunpack.c.h.b16 %v2729
      %v2786 = vunpack.c.l.b16 %v2730
      %v2787 = vunpack.c.h.b16 %v2730
      %v2788 = vunpack.c.l.b16 %v2731
      %v2789 = vunpack.c.h.b16 %v2731
      %v2790 = vunpack.c.l.b16 %v2732
      %v2791 = vunpack.c.h.b16 %v2732
      %v2792 = vunpack.c.l.b16 %v2733
      %v2793 = vunpack.c.h.b16 %v2733
      %v2794 = vpack.c.b16 %v2760, %v2758
      %v2795 = vpack.c.b16 %v2761, %v2759
      %v2796 = vpack.c.b16 %v2764, %v2762
      %v2797 = vpack.c.b16 %v2765, %v2763
      %v2798 = vpack.c.b16 %v2768, %v2766
      %v2799 = vpack.c.b16 %v2769, %v2767
      %v2800 = vpack.c.b16 %v2772, %v2770
      %v2801 = vpack.c.b16 %v2773, %v2771
      %v2802 = vpack.c.b16 %v2776, %v2774
      %v2803 = vpack.c.b16 %v2777, %v2775
      %v2804 = vpack.c.b16 %v2780, %v2778
      %v2805 = vpack.c.b16 %v2781, %v2779
      %v2806 = vpack.c.b16 %v2784, %v2782
      %v2807 = vpack.c.b16 %v2785, %v2783
      %v2808 = vpack.c.b16 %v2788, %v2786
      %v2809 = vpack.c.b16 %v2789, %v2787
      %v2810 = vpack.c.b16 %v2792, %v2790
      %v2811 = vpack.c.b16 %v2793, %v2791
      %v2831 = vsel %vm1079, %v2738, 0
      %2833 = vmatpush.bf16.msra.mxu0 %v2808
      %2834 = vmatpush.bf16.msra.mxu0 %v2806
      %2835 = vmatpush.bf16.msra.mxu0 %v2804
      %2836 = vmatpush.bf16.msra.mxu0 %v2802
      %2837 = vmatpush.bf16.msra.mxu0 %v2800
      %2838 = vmatpush.bf16.msra.mxu0 %v2798
      %2839 = vmatpush.bf16.msra.mxu0 %v2796
      %2840 = vmatpush.bf16.msra.mxu0 %v2794
      %2841 = vmatmul.bf16.gmra.mxu0 %v2737
      %v2842 = vpop.f32.mrf.mxu0
      %v2843 = vadd.f32 0.0, %v2842
      %v2844 = vpop.f32.mrf.mxu0
      %2845 = vdwg.mxu0
      %2846 = vmatpush.bf16.msra.mxu0 0
      %2847 = vmatpush.bf16.msra.mxu0 0
      %2848 = vmatpush.bf16.msra.mxu0 0
      %2849 = vmatpush.bf16.msra.mxu0 0
      %2850 = vmatpush.bf16.msra.mxu0 0
      %2851 = vmatpush.bf16.msra.mxu0 0
      %2852 = vmatpush.bf16.msra.mxu0 0
      %2853 = vmatpush.bf16.msra.mxu0 %v2810
      %2854 = vmatmul.bf16.gmra.mxu0 %v2831
      %v2855 = vpop.f32.mrf.mxu0
      %v2856 = vadd.f32 %v2843, %v2855
      %v2857 = vpop.f32.mrf.mxu0
      %2858 = vdwg.mxu0
      %2859 = vmatpush.bf16.msra.mxu0 %v2809
      %2860 = vmatpush.bf16.msra.mxu0 %v2807
      %2861 = vmatpush.bf16.msra.mxu0 %v2805
      %2862 = vmatpush.bf16.msra.mxu0 %v2803
      %2863 = vmatpush.bf16.msra.mxu0 %v2801
      %2864 = vmatpush.bf16.msra.mxu0 %v2799
      %2865 = vmatpush.bf16.msra.mxu0 %v2797
      %2866 = vmatpush.bf16.msra.mxu0 %v2795
      %2867 = vmatmul.bf16.gmra.mxu0 %v2737
      %v2868 = vpop.f32.mrf.mxu0
      %v2869 = vadd.f32 0.0, %v2868
      %v2870 = vpop.f32.mrf.mxu0
      %2871 = vdwg.mxu0
      %2872 = vmatpush.bf16.msra.mxu0 0
      %2873 = vmatpush.bf16.msra.mxu0 0
      %2874 = vmatpush.bf16.msra.mxu0 0
      %2875 = vmatpush.bf16.msra.mxu0 0
      %2876 = vmatpush.bf16.msra.mxu0 0
      %2877 = vmatpush.bf16.msra.mxu0 0
      %2878 = vmatpush.bf16.msra.mxu0 0
      %2879 = vmatpush.bf16.msra.mxu0 %v2811
      %2880 = vmatmul.bf16.gmra.mxu0 %v2831
      %v2881 = vpop.f32.mrf.mxu0
      %v2882 = vadd.f32 %v2869, %v2881
      %v2883 = vpop.f32.mrf.mxu0
      %2884 = vdwg.mxu0
      %v2885 = vmul.f32 %v2856, %v398
      %v2886 = vmul.f32 %v2882, %v399
      %2887 = vst [vmem:[#allocation2 + $0x8] sm:$0xff] %v2885
      %2888 = vst [vmem:[#allocation2 + $0x10] sm:$0xff] %v2886
      %v2889 = vmul.f32 %v2885, %v176
      %v2890 = vmul.f32 %v2886, %v177
      %2891 = vst [vmem:[#allocation2 + $0x48] sm:$0xff] %v2889
      %2892 = vst [vmem:[#allocation2 + $0x50] sm:$0xff] %v2890
      %v2893 = vmul.f32 %v2885, %v182
      %v2894 = vmul.f32 %v2886, %v183
      %2895 = vst [vmem:[#allocation2 + $0x88] sm:$0xff] %v2893
      %2896 = vst [vmem:[#allocation2 + $0x90] sm:$0xff] %v2894
      %v2897 = vld [vmem:[#allocation2 + $0x40] sm:$0xff]
      %v2898 = vld [vmem:[#allocation2 + $0x48] sm:$0xff]
      %v2899 = vld [vmem:[#allocation2 + $0x50] sm:$0xff]
      %v2900 = vpack.c.bf16 %v2898, %v2897
      %v2901 = vpack.c.bf16 %v2899, %v2899
      %2904 = vrot.lane.b32.xlu0 %v2900, 17
      %v2905 = vpop.permute.xlu0 %2904
      %2906 = vrot.lane.b32.xlu0 %v2901, 17
      %v2907 = vpop.permute.xlu0 %2906
      %v2908 = vrot.slane %v2905, 4
      %v2909 = vrot.slane %v2907, 4
      %v2910 = vsel %vm425, %v2908, %v2909
      %v2911 = vsel %vm427, %v2905, %v2910
      %2913 = vst [vmem:[#allocation3] sm:$0xff] %v2911
      %v2914 = vld [vmem:[#allocation2] sm:$0xff]
      %v2915 = vld [vmem:[#allocation2 + $0x8] sm:$0xff]
      %v2916 = vld [vmem:[#allocation2 + $0x10] sm:$0xff]
      %v2917 = vpack.c.bf16 %v2915, %v2914
      %v2918 = vpack.c.bf16 %v2916, %v2916
      %2921 = vrot.lane.b32.xlu0 %v2917, 16
      %v2922 = vpop.permute.xlu0 %2921
      %2923 = vrot.lane.b32.xlu0 %v2918, 16
      %v2924 = vpop.permute.xlu0 %2923
      %v2925 = vrot.slane %v2922, 4
      %v2926 = vrot.slane %v2924, 4
      %v2927 = vsel %vm425, %v2925, %v2926
      %v2928 = vsel %vm445, %v2922, %v2927
      %2930 = vst [vmem:[#allocation3 + $0x8] sm:$0xff] %v2928
      %v2931 = vld [vmem:[#allocation2 + $0x80] sm:$0xff]
      %v2932 = vld [vmem:[#allocation2 + $0x88] sm:$0xff]
      %v2933 = vld [vmem:[#allocation2 + $0x90] sm:$0xff]
      %v2934 = vpack.c.bf16 %v2932, %v2931
      %v2935 = vpack.c.bf16 %v2933, %v2933
      %2938 = vrot.lane.b32.xlu0 %v2934, 15
      %v2939 = vpop.permute.xlu0 %2938
      %2940 = vrot.lane.b32.xlu0 %v2935, 15
      %v2941 = vpop.permute.xlu0 %2940
      %v2942 = vrot.slane %v2939, 4
      %v2943 = vrot.slane %v2941, 4
      %v2944 = vsel %vm425, %v2942, %v2943
      %v2945 = vsel %vm463, %v2939, %v2944
      %2947 = vst [vmem:[#allocation3 + $0x10] sm:$0xff] %v2945
      %v2948 = vld [vmem:[#allocation2 + $0x40] sm:$0xff]
      %v2949 = vld [vmem:[#allocation2 + $0x48] sm:$0xff]
      %v2950 = vld [vmem:[#allocation2 + $0x50] sm:$0xff]
      %v2951 = vpack.c.bf16 %v2949, %v2948
      %v2952 = vpack.c.bf16 %v2950, %v2950
      %2955 = vrot.lane.b32.xlu0 %v2951, 1
      %v2956 = vpop.permute.xlu0 %2955
      %2957 = vrot.lane.b32.xlu0 %v2952, 1
      %v2958 = vpop.permute.xlu0 %2957
      %v2959 = vrot.slane %v2956, 4
      %v2960 = vrot.slane %v2958, 4
      %v2961 = vsel %vm425, %v2959, %v2960
      %v2962 = vsel %vm481, %v2956, %v2961
      %2964 = vst [vmem:[#allocation3 + $0x18] sm:$0xff] %v2962
      %v2965 = vld [vmem:[#allocation2 + $0x8] sm:$0xff]
      %v2966 = vld [vmem:[#allocation2 + $0x10] sm:$0xff]
      %v2967 = vpack.c.bf16 %v2966, %v2965
      %2968 = vst [vmem:[#allocation3 + $0x20] sm:$0xff] %v2967
      %v2969 = vld [vmem:[#allocation2 + $0x88] sm:$0xff]
      %v2970 = vld [vmem:[#allocation2 + $0x90] sm:$0xff]
      %v2971 = vld [vmem:[#allocation2 + $0x98] sm:$0xff]
      %v2972 = vpack.c.bf16 %v2970, %v2969
      %v2973 = vpack.c.bf16 %v2971, %v2971
      %2976 = vrot.lane.b32.xlu0 %v2972, 127
      %v2977 = vpop.permute.xlu0 %2976
      %2978 = vrot.lane.b32.xlu0 %v2973, 127
      %v2979 = vpop.permute.xlu0 %2978
      %v2980 = vrot.slane %v2977, 4
      %v2981 = vrot.slane %v2979, 4
      %v2982 = vsel %vm425, %v2980, %v2981
      %v2983 = vsel %vm503, %v2977, %v2982
      %2985 = vst [vmem:[#allocation3 + $0x28] sm:$0xff] %v2983
      %v2986 = vld [vmem:[#allocation2 + $0x48] sm:$0xff]
      %v2987 = vld [vmem:[#allocation2 + $0x50] sm:$0xff]
      %v2988 = vld [vmem:[#allocation2 + $0x58] sm:$0xff]
      %v2989 = vpack.c.bf16 %v2987, %v2986
      %v2990 = vpack.c.bf16 %v2988, %v2988
      %2993 = vrot.lane.b32.xlu0 %v2989, 113
      %v2994 = vpop.permute.xlu0 %2993
      %2995 = vrot.lane.b32.xlu0 %v2990, 113
      %v2996 = vpop.permute.xlu0 %2995
      %v2997 = vrot.slane %v2994, 4
      %v2998 = vrot.slane %v2996, 4
      %v2999 = vsel %vm425, %v2997, %v2998
      %v3000 = vsel %vm521, %v2994, %v2999
      %3002 = vst [vmem:[#allocation3 + $0x30] sm:$0xff] %v3000
      %v3003 = vld [vmem:[#allocation2 + $0x8] sm:$0xff]
      %v3004 = vld [vmem:[#allocation2 + $0x10] sm:$0xff]
      %v3005 = vld [vmem:[#allocation2 + $0x18] sm:$0xff]
      %v3006 = vpack.c.bf16 %v3004, %v3003
      %v3007 = vpack.c.bf16 %v3005, %v3005
      %3010 = vrot.lane.b32.xlu0 %v3006, 112
      %v3011 = vpop.permute.xlu0 %3010
      %3012 = vrot.lane.b32.xlu0 %v3007, 112
      %v3013 = vpop.permute.xlu0 %3012
      %v3014 = vrot.slane %v3011, 4
      %v3015 = vrot.slane %v3013, 4
      %v3016 = vsel %vm425, %v3014, %v3015
      %v3017 = vsel %vm539, %v3011, %v3016
      %3019 = vst [vmem:[#allocation3 + $0x38] sm:$0xff] %v3017
      %v3020 = vld [vmem:[#allocation2 + $0x88] sm:$0xff]
      %v3021 = vld [vmem:[#allocation2 + $0x90] sm:$0xff]
      %v3022 = vld [vmem:[#allocation2 + $0x98] sm:$0xff]
      %v3023 = vpack.c.bf16 %v3021, %v3020
      %v3024 = vpack.c.bf16 %v3022, %v3022
      %3027 = vrot.lane.b32.xlu0 %v3023, 111
      %v3028 = vpop.permute.xlu0 %3027
      %3029 = vrot.lane.b32.xlu0 %v3024, 111
      %v3030 = vpop.permute.xlu0 %3029
      %v3031 = vrot.slane %v3028, 4
      %v3032 = vrot.slane %v3030, 4
      %v3033 = vsel %vm425, %v3031, %v3032
      %v3034 = vsel %vm557, %v3028, %v3033
      %3036 = vst [vmem:[#allocation3 + $0x40] sm:$0xff] %v3034
      %v3037 = vld [vmem:[%s1 + $0x30] sm:$0xf]
      %v3038 = vld [vmem:[%s1 + $0x38] sm:$0xf]
      %v3039 = vld [vmem:[#allocation3] sm:$0xff]
      %v3040 = vld [vmem:[#allocation3 + $0x8] sm:$0xff]
      %v3041 = vld [vmem:[#allocation3 + $0x10] sm:$0xff]
      %v3042 = vld [vmem:[#allocation3 + $0x18] sm:$0xff]
      %v3043 = vld [vmem:[#allocation3 + $0x20] sm:$0xff]
      %v3044 = vld [vmem:[#allocation3 + $0x28] sm:$0xff]
      %v3045 = vld [vmem:[#allocation3 + $0x30] sm:$0xff]
      %v3046 = vld [vmem:[#allocation3 + $0x38] sm:$0xff]
      %v3047 = vld [vmem:[#allocation3 + $0x40] sm:$0xff]
      %v3050 = vunpack.c.l.b16 %v3037
      %v3051 = vunpack.c.l.b16 %v3038
      %v3052 = vpack.c.b16 %v3051, %v3050
      %v3062 = vunpack.c.l.b16 %v3039
      %v3063 = vunpack.c.h.b16 %v3039
      %v3064 = vunpack.c.l.b16 %v3040
      %v3065 = vunpack.c.h.b16 %v3040
      %v3066 = vunpack.c.l.b16 %v3041
      %v3067 = vunpack.c.h.b16 %v3041
      %v3068 = vunpack.c.l.b16 %v3042
      %v3069 = vunpack.c.h.b16 %v3042
      %v3070 = vunpack.c.l.b16 %v3043
      %v3071 = vunpack.c.h.b16 %v3043
      %v3072 = vunpack.c.l.b16 %v3044
      %v3073 = vunpack.c.h.b16 %v3044
      %v3074 = vunpack.c.l.b16 %v3045
      %v3075 = vunpack.c.h.b16 %v3045
      %v3076 = vunpack.c.l.b16 %v3046
      %v3077 = vunpack.c.h.b16 %v3046
      %v3078 = vunpack.c.l.b16 %v3047
      %v3079 = vunpack.c.h.b16 %v3047
      %v3080 = vpack.c.b16 %v3064, %v3062
      %v3081 = vpack.c.b16 %v3065, %v3063
      %v3082 = vpack.c.b16 %v3068, %v3066
      %v3083 = vpack.c.b16 %v3069, %v3067
      %v3084 = vpack.c.b16 %v3072, %v3070
      %v3085 = vpack.c.b16 %v3073, %v3071
      %v3086 = vpack.c.b16 %v3076, %v3074
      %v3087 = vpack.c.b16 %v3077, %v3075
      %v3088 = vpack.c.b16 %v3078, %v3078
      %v3089 = vpack.c.b16 %v3079, %v3079
      %v3099 = vsel %vm622, %v3052, 0
      %v3102 = vsel %vm327, %v3088, 0
      %v3105 = vsel %vm327, %v3089, 0
      %3107 = vmatpush.bf16.msra.mxu0 0
      %3108 = vmatpush.bf16.msra.mxu0 0
      %3109 = vmatpush.bf16.msra.mxu0 0
      %3110 = vmatpush.bf16.msra.mxu0 %v3102
      %3111 = vmatpush.bf16.msra.mxu0 %v3086
      %3112 = vmatpush.bf16.msra.mxu0 %v3084
      %3113 = vmatpush.bf16.msra.mxu0 %v3082
      %3114 = vmatpush.bf16.msra.mxu0 %v3080
      %3115 = vmatmul.bf16.gmra.mxu0 %v3099
      %v3116 = vpop.f32.mrf.mxu0
      %v3117 = vadd.f32 0.0, %v3116
      %v3118 = vpop.f32.mrf.mxu0
      %v3119 = vadd.f32 0.0, %v3118
      %3120 = vdwg.mxu0
      %3121 = vmatpush.bf16.msra.mxu0 0
      %3122 = vmatpush.bf16.msra.mxu0 0
      %3123 = vmatpush.bf16.msra.mxu0 0
      %3124 = vmatpush.bf16.msra.mxu0 %v3105
      %3125 = vmatpush.bf16.msra.mxu0 %v3087
      %3126 = vmatpush.bf16.msra.mxu0 %v3085
      %3127 = vmatpush.bf16.msra.mxu0 %v3083
      %3128 = vmatpush.bf16.msra.mxu0 %v3081
      %3129 = vmatmul.bf16.gmra.mxu0 %v3099
      %v3130 = vpop.f32.mrf.mxu0
      %v3131 = vadd.f32 0.0, %v3130
      %v3132 = vpop.f32.mrf.mxu0
      %v3133 = vadd.f32 0.0, %v3132
      %3134 = vdwg.mxu0
      %v3135 = vsub.f32 %v2411, %v3117
      %v3136 = vsub.f32 %v2412, %v3131
      %v3137 = vsub.f32 %v2413, %v3119
      %v3138 = vsub.f32 %v2414, %v3133
      %v3139 = vadd.f32 %v3135, %v2393
      %v3140 = vadd.f32 %v3136, %v2407
      %v3141 = vadd.f32 %v3137, %v2395
      %v3142 = vadd.f32 %v3138, %v2409
      %v3143 = vmax.f32 %v3139, 0.0
      %v3144 = vmax.f32 %v3140, 0.0
      %v3145 = vmax.f32 %v3141, 0.0
      %v3146 = vmax.f32 %v3142, 0.0
      %3147 = vst [vmem:[#allocation2 + $0x8] sm:$0xff] %v3143
      %3148 = vst [vmem:[#allocation2 + $0x10] sm:$0xff] %v3144
      %3149 = vst [vmem:[#allocation2 + $0x28] sm:$0xff] %v3145
      %3150 = vst [vmem:[#allocation2 + $0x30] sm:$0xff] %v3146
      %v3151 = vmul.f32 %v3143, %v176
      %v3152 = vmul.f32 %v3144, %v177
      %v3153 = vmul.f32 %v3145, %v176
      %v3154 = vmul.f32 %v3146, %v177
      %3155 = vst [vmem:[#allocation2 + $0x48] sm:$0xff] %v3151
      %3156 = vst [vmem:[#allocation2 + $0x50] sm:$0xff] %v3152
      %3157 = vst [vmem:[#allocation2 + $0x68] sm:$0xff] %v3153
      %3158 = vst [vmem:[#allocation2 + $0x70] sm:$0xff] %v3154
      %v3159 = vmul.f32 %v3143, %v182
      %v3160 = vmul.f32 %v3144, %v183
      %v3161 = vmul.f32 %v3145, %v182
      %v3162 = vmul.f32 %v3146, %v183
      %3163 = vst [vmem:[#allocation2 + $0x88] sm:$0xff] %v3159
      %3164 = vst [vmem:[#allocation2 + $0x90] sm:$0xff] %v3160
      %3165 = vst [vmem:[#allocation2 + $0xa8] sm:$0xff] %v3161
      %3166 = vst [vmem:[#allocation2 + $0xb0] sm:$0xff] %v3162
      %v3167 = vld [vmem:[#allocation2 + $0x40] sm:$0xff]
      %v3168 = vld [vmem:[#allocation2 + $0x48] sm:$0xff]
      %v3169 = vld [vmem:[#allocation2 + $0x50] sm:$0xff]
      %v3170 = vld [vmem:[#allocation2 + $0x60] sm:$0xff]
      %v3171 = vld [vmem:[#allocation2 + $0x68] sm:$0xff]
      %v3172 = vld [vmem:[#allocation2 + $0x70] sm:$0xff]
      %v3173 = vpack.c.bf16 %v3168, %v3167
      %v3174 = vpack.c.bf16 %v3169, %v3169
      %v3175 = vpack.c.bf16 %v3171, %v3170
      %v3176 = vpack.c.bf16 %v3172, %v3172
      %3181 = vrot.lane.b32.xlu0 %v3173, 17
      %v3182 = vpop.permute.xlu0 %3181
      %3183 = vrot.lane.b32.xlu0 %v3174, 17
      %v3184 = vpop.permute.xlu0 %3183
      %3185 = vrot.lane.b32.xlu0 %v3175, 17
      %v3186 = vpop.permute.xlu0 %3185
      %3187 = vrot.lane.b32.xlu0 %v3176, 17
      %v3188 = vpop.permute.xlu0 %3187
      %v3189 = vrot.slane %v3182, 4
      %v3190 = vrot.slane %v3184, 4
      %v3191 = vrot.slane %v3186, 4
      %v3192 = vrot.slane %v3188, 4
      %v3193 = vsel %vm425, %v3189, %v3190
      %v3194 = vsel %vm427, %v3182, %v3193
      %v3195 = vsel %vm425, %v3191, %v3192
      %v3196 = vsel %vm427, %v3186, %v3195
      %3199 = vst [vmem:[#allocation3] sm:$0xff] %v3194
      %3200 = vst [vmem:[#allocation3 + $0x8] sm:$0xff] %v3196
      %v3201 = vld [vmem:[#allocation2] sm:$0xff]
      %v3202 = vld [vmem:[#allocation2 + $0x8] sm:$0xff]
      %v3203 = vld [vmem:[#allocation2 + $0x10] sm:$0xff]
      %v3204 = vld [vmem:[#allocation2 + $0x20] sm:$0xff]
      %v3205 = vld [vmem:[#allocation2 + $0x28] sm:$0xff]
      %v3206 = vld [vmem:[#allocation2 + $0x30] sm:$0xff]
      %v3207 = vpack.c.bf16 %v3202, %v3201
      %v3208 = vpack.c.bf16 %v3203, %v3203
      %v3209 = vpack.c.bf16 %v3205, %v3204
      %v3210 = vpack.c.bf16 %v3206, %v3206
      %3215 = vrot.lane.b32.xlu0 %v3207, 16
      %v3216 = vpop.permute.xlu0 %3215
      %3217 = vrot.lane.b32.xlu0 %v3208, 16
      %v3218 = vpop.permute.xlu0 %3217
      %3219 = vrot.lane.b32.xlu0 %v3209, 16
      %v3220 = vpop.permute.xlu0 %3219
      %3221 = vrot.lane.b32.xlu0 %v3210, 16
      %v3222 = vpop.permute.xlu0 %3221
      %v3223 = vrot.slane %v3216, 4
      %v3224 = vrot.slane %v3218, 4
      %v3225 = vrot.slane %v3220, 4
      %v3226 = vrot.slane %v3222, 4
      %v3227 = vsel %vm425, %v3223, %v3224
      %v3228 = vsel %vm445, %v3216, %v3227
      %v3229 = vsel %vm425, %v3225, %v3226
      %v3230 = vsel %vm445, %v3220, %v3229
      %3233 = vst [vmem:[#allocation3 + $0x10] sm:$0xff] %v3228
      %3234 = vst [vmem:[#allocation3 + $0x18] sm:$0xff] %v3230
      %v3235 = vld [vmem:[#allocation2 + $0x80] sm:$0xff]
      %v3236 = vld [vmem:[#allocation2 + $0x88] sm:$0xff]
      %v3237 = vld [vmem:[#allocation2 + $0x90] sm:$0xff]
      %v3238 = vld [vmem:[#allocation2 + $0xa0] sm:$0xff]
      %v3239 = vld [vmem:[#allocation2 + $0xa8] sm:$0xff]
      %v3240 = vld [vmem:[#allocation2 + $0xb0] sm:$0xff]
      %v3241 = vpack.c.bf16 %v3236, %v3235
      %v3242 = vpack.c.bf16 %v3237, %v3237
      %v3243 = vpack.c.bf16 %v3239, %v3238
      %v3244 = vpack.c.bf16 %v3240, %v3240
      %3249 = vrot.lane.b32.xlu0 %v3241, 15
      %v3250 = vpop.permute.xlu0 %3249
      %3251 = vrot.lane.b32.xlu0 %v3242, 15
      %v3252 = vpop.permute.xlu0 %3251
      %3253 = vrot.lane.b32.xlu0 %v3243, 15
      %v3254 = vpop.permute.xlu0 %3253
      %3255 = vrot.lane.b32.xlu0 %v3244, 15
      %v3256 = vpop.permute.xlu0 %3255
      %v3257 = vrot.slane %v3250, 4
      %v3258 = vrot.slane %v3252, 4
      %v3259 = vrot.slane %v3254, 4
      %v3260 = vrot.slane %v3256, 4
      %v3261 = vsel %vm425, %v3257, %v3258
      %v3262 = vsel %vm463, %v3250, %v3261
      %v3263 = vsel %vm425, %v3259, %v3260
      %v3264 = vsel %vm463, %v3254, %v3263
      %3267 = vst [vmem:[#allocation3 + $0x20] sm:$0xff] %v3262
      %3268 = vst [vmem:[#allocation3 + $0x28] sm:$0xff] %v3264
      %v3269 = vld [vmem:[#allocation2 + $0x40] sm:$0xff]
      %v3270 = vld [vmem:[#allocation2 + $0x48] sm:$0xff]
      %v3271 = vld [vmem:[#allocation2 + $0x50] sm:$0xff]
      %v3272 = vld [vmem:[#allocation2 + $0x60] sm:$0xff]
      %v3273 = vld [vmem:[#allocation2 + $0x68] sm:$0xff]
      %v3274 = vld [vmem:[#allocation2 + $0x70] sm:$0xff]
      %v3275 = vpack.c.bf16 %v3270, %v3269
      %v3276 = vpack.c.bf16 %v3271, %v3271
      %v3277 = vpack.c.bf16 %v3273, %v3272
      %v3278 = vpack.c.bf16 %v3274, %v3274
      %3283 = vrot.lane.b32.xlu0 %v3275, 1
      %v3284 = vpop.permute.xlu0 %3283
      %3285 = vrot.lane.b32.xlu0 %v3276, 1
      %v3286 = vpop.permute.xlu0 %3285
      %3287 = vrot.lane.b32.xlu0 %v3277, 1
      %v3288 = vpop.permute.xlu0 %3287
      %3289 = vrot.lane.b32.xlu0 %v3278, 1
      %v3290 = vpop.permute.xlu0 %3289
      %v3291 = vrot.slane %v3284, 4
      %v3292 = vrot.slane %v3286, 4
      %v3293 = vrot.slane %v3288, 4
      %v3294 = vrot.slane %v3290, 4
      %v3295 = vsel %vm425, %v3291, %v3292
      %v3296 = vsel %vm481, %v3284, %v3295
      %v3297 = vsel %vm425, %v3293, %v3294
      %v3298 = vsel %vm481, %v3288, %v3297
      %3301 = vst [vmem:[#allocation3 + $0x30] sm:$0xff] %v3296
      %3302 = vst [vmem:[#allocation3 + $0x38] sm:$0xff] %v3298
      %v3303 = vld [vmem:[#allocation2 + $0x8] sm:$0xff]
      %v3304 = vld [vmem:[#allocation2 + $0x10] sm:$0xff]
      %v3305 = vld [vmem:[#allocation2 + $0x28] sm:$0xff]
      %v3306 = vld [vmem:[#allocation2 + $0x30] sm:$0xff]
      %v3307 = vpack.c.bf16 %v3304, %v3303
      %v3308 = vpack.c.bf16 %v3306, %v3305
      %3309 = vst [vmem:[#allocation3 + $0x40] sm:$0xff] %v3307
      %3310 = vst [vmem:[#allocation3 + $0x48] sm:$0xff] %v3308
      %v3311 = vld [vmem:[#allocation2 + $0x88] sm:$0xff]
      %v3312 = vld [vmem:[#allocation2 + $0x90] sm:$0xff]
      %v3313 = vld [vmem:[#allocation2 + $0x98] sm:$0xff]
      %v3314 = vld [vmem:[#allocation2 + $0xa8] sm:$0xff]
      %v3315 = vld [vmem:[#allocation2 + $0xb0] sm:$0xff]
      %v3316 = vld [vmem:[#allocation2 + $0xb8] sm:$0xff]
      %v3317 = vpack.c.bf16 %v3312, %v3311
      %v3318 = vpack.c.bf16 %v3313, %v3313
      %v3319 = vpack.c.bf16 %v3315, %v3314
      %v3320 = vpack.c.bf16 %v3316, %v3316
      %3325 = vrot.lane.b32.xlu0 %v3317, 127
      %v3326 = vpop.permute.xlu0 %3325
      %3327 = vrot.lane.b32.xlu0 %v3318, 127
      %v3328 = vpop.permute.xlu0 %3327
      %3329 = vrot.lane.b32.xlu0 %v3319, 127
      %v3330 = vpop.permute.xlu0 %3329
      %3331 = vrot.lane.b32.xlu0 %v3320, 127
      %v3332 = vpop.permute.xlu0 %3331
      %v3333 = vrot.slane %v3326, 4
      %v3334 = vrot.slane %v3328, 4
      %v3335 = vrot.slane %v3330, 4
      %v3336 = vrot.slane %v3332, 4
      %v3337 = vsel %vm425, %v3333, %v3334
      %v3338 = vsel %vm503, %v3326, %v3337
      %v3339 = vsel %vm425, %v3335, %v3336
      %v3340 = vsel %vm503, %v3330, %v3339
      %3343 = vst [vmem:[#allocation3 + $0x50] sm:$0xff] %v3338
      %3344 = vst [vmem:[#allocation3 + $0x58] sm:$0xff] %v3340
      %v3345 = vld [vmem:[#allocation2 + $0x48] sm:$0xff]
      %v3346 = vld [vmem:[#allocation2 + $0x50] sm:$0xff]
      %v3347 = vld [vmem:[#allocation2 + $0x58] sm:$0xff]
      %v3348 = vld [vmem:[#allocation2 + $0x68] sm:$0xff]
      %v3349 = vld [vmem:[#allocation2 + $0x70] sm:$0xff]
      %v3350 = vld [vmem:[#allocation2 + $0x78] sm:$0xff]
      %v3351 = vpack.c.bf16 %v3346, %v3345
      %v3352 = vpack.c.bf16 %v3347, %v3347
      %v3353 = vpack.c.bf16 %v3349, %v3348
      %v3354 = vpack.c.bf16 %v3350, %v3350
      %3359 = vrot.lane.b32.xlu0 %v3351, 113
      %v3360 = vpop.permute.xlu0 %3359
      %3361 = vrot.lane.b32.xlu0 %v3352, 113
      %v3362 = vpop.permute.xlu0 %3361
      %3363 = vrot.lane.b32.xlu0 %v3353, 113
      %v3364 = vpop.permute.xlu0 %3363
      %3365 = vrot.lane.b32.xlu0 %v3354, 113
      %v3366 = vpop.permute.xlu0 %3365
      %v3367 = vrot.slane %v3360, 4
      %v3368 = vrot.slane %v3362, 4
      %v3369 = vrot.slane %v3364, 4
      %v3370 = vrot.slane %v3366, 4
      %v3371 = vsel %vm425, %v3367, %v3368
      %v3372 = vsel %vm521, %v3360, %v3371
      %v3373 = vsel %vm425, %v3369, %v3370
      %v3374 = vsel %vm521, %v3364, %v3373
      %3377 = vst [vmem:[#allocation3 + $0x60] sm:$0xff] %v3372
      %3378 = vst [vmem:[#allocation3 + $0x68] sm:$0xff] %v3374
      %v3379 = vld [vmem:[#allocation2 + $0x8] sm:$0xff]
      %v3380 = vld [vmem:[#allocation2 + $0x10] sm:$0xff]
      %v3381 = vld [vmem:[#allocation2 + $0x18] sm:$0xff]
      %v3382 = vld [vmem:[#allocation2 + $0x28] sm:$0xff]
      %v3383 = vld [vmem:[#allocation2 + $0x30] sm:$0xff]
      %v3384 = vld [vmem:[#allocation2 + $0x38] sm:$0xff]
      %v3385 = vpack.c.bf16 %v3380, %v3379
      %v3386 = vpack.c.bf16 %v3381, %v3381
      %v3387 = vpack.c.bf16 %v3383, %v3382
      %v3388 = vpack.c.bf16 %v3384, %v3384
      %3393 = vrot.lane.b32.xlu0 %v3385, 112
      %v3394 = vpop.permute.xlu0 %3393
      %3395 = vrot.lane.b32.xlu0 %v3386, 112
      %v3396 = vpop.permute.xlu0 %3395
      %3397 = vrot.lane.b32.xlu0 %v3387, 112
      %v3398 = vpop.permute.xlu0 %3397
      %3399 = vrot.lane.b32.xlu0 %v3388, 112
      %v3400 = vpop.permute.xlu0 %3399
      %v3401 = vrot.slane %v3394, 4
      %v3402 = vrot.slane %v3396, 4
      %v3403 = vrot.slane %v3398, 4
      %v3404 = vrot.slane %v3400, 4
      %v3405 = vsel %vm425, %v3401, %v3402
      %v3406 = vsel %vm539, %v3394, %v3405
      %v3407 = vsel %vm425, %v3403, %v3404
      %v3408 = vsel %vm539, %v3398, %v3407
      %3411 = vst [vmem:[#allocation3 + $0x70] sm:$0xff] %v3406
      %3412 = vst [vmem:[#allocation3 + $0x78] sm:$0xff] %v3408
      %v3413 = vld [vmem:[#allocation2 + $0x88] sm:$0xff]
      %v3414 = vld [vmem:[#allocation2 + $0x90] sm:$0xff]
      %v3415 = vld [vmem:[#allocation2 + $0x98] sm:$0xff]
      %v3416 = vld [vmem:[#allocation2 + $0xa8] sm:$0xff]
      %v3417 = vld [vmem:[#allocation2 + $0xb0] sm:$0xff]
      %v3418 = vld [vmem:[#allocation2 + $0xb8] sm:$0xff]
      %v3419 = vpack.c.bf16 %v3414, %v3413
      %v3420 = vpack.c.bf16 %v3415, %v3415
      %v3421 = vpack.c.bf16 %v3417, %v3416
      %v3422 = vpack.c.bf16 %v3418, %v3418
      %3427 = vrot.lane.b32.xlu0 %v3419, 111
      %v3428 = vpop.permute.xlu0 %3427
      %3429 = vrot.lane.b32.xlu0 %v3420, 111
      %v3430 = vpop.permute.xlu0 %3429
      %3431 = vrot.lane.b32.xlu0 %v3421, 111
      %v3432 = vpop.permute.xlu0 %3431
      %3433 = vrot.lane.b32.xlu0 %v3422, 111
      %v3434 = vpop.permute.xlu0 %3433
      %v3435 = vrot.slane %v3428, 4
      %v3436 = vrot.slane %v3430, 4
      %v3437 = vrot.slane %v3432, 4
      %v3438 = vrot.slane %v3434, 4
      %v3439 = vsel %vm425, %v3435, %v3436
      %v3440 = vsel %vm557, %v3428, %v3439
      %v3441 = vsel %vm425, %v3437, %v3438
      %v3442 = vsel %vm557, %v3432, %v3441
      %3445 = vst [vmem:[#allocation3 + $0x80] sm:$0xff] %v3440
      %3446 = vst [vmem:[#allocation3 + $0x88] sm:$0xff] %v3442
      %v3447 = vld [vmem:[%s1 + $0x58] sm:$0xff]
      %v3448 = vld [vmem:[#allocation3] sm:$0xff]
      %v3449 = vld [vmem:[#allocation3 + $0x8] sm:$0xff]
      %v3450 = vld [vmem:[#allocation3 + $0x10] sm:$0xff]
      %v3451 = vld [vmem:[#allocation3 + $0x18] sm:$0xff]
      %v3452 = vld [vmem:[#allocation3 + $0x20] sm:$0xff]
      %v3453 = vld [vmem:[#allocation3 + $0x28] sm:$0xff]
      %v3454 = vld [vmem:[#allocation3 + $0x30] sm:$0xff]
      %v3455 = vld [vmem:[#allocation3 + $0x38] sm:$0xff]
      %v3456 = vld [vmem:[#allocation3 + $0x40] sm:$0xff]
      %v3457 = vld [vmem:[#allocation3 + $0x48] sm:$0xff]
      %v3458 = vld [vmem:[#allocation3 + $0x50] sm:$0xff]
      %v3459 = vld [vmem:[#allocation3 + $0x58] sm:$0xff]
      %v3460 = vld [vmem:[#allocation3 + $0x60] sm:$0xff]
      %v3461 = vld [vmem:[#allocation3 + $0x68] sm:$0xff]
      %v3462 = vld [vmem:[#allocation3 + $0x70] sm:$0xff]
      %v3463 = vld [vmem:[#allocation3 + $0x78] sm:$0xff]
      %v3464 = vld [vmem:[#allocation3 + $0x80] sm:$0xff]
      %v3465 = vld [vmem:[#allocation3 + $0x88] sm:$0xff]
      %v3467 = vunpack.c.l.b16 %v3447
      %v3468 = vunpack.c.h.b16 %v3447
      %v3469 = vpack.c.b16 %v3467, %v3467
      %v3470 = vpack.c.b16 %v3468, %v3468
      %v3490 = vunpack.c.l.b16 %v3448
      %v3491 = vunpack.c.h.b16 %v3448
      %v3492 = vunpack.c.l.b16 %v3449
      %v3493 = vunpack.c.h.b16 %v3449
      %v3494 = vunpack.c.l.b16 %v3450
      %v3495 = vunpack.c.h.b16 %v3450
      %v3496 = vunpack.c.l.b16 %v3451
      %v3497 = vunpack.c.h.b16 %v3451
      %v3498 = vunpack.c.l.b16 %v3452
      %v3499 = vunpack.c.h.b16 %v3452
      %v3500 = vunpack.c.l.b16 %v3453
      %v3501 = vunpack.c.h.b16 %v3453
      %v3502 = vunpack.c.l.b16 %v3454
      %v3503 = vunpack.c.h.b16 %v3454
      %v3504 = vunpack.c.l.b16 %v3455
      %v3505 = vunpack.c.h.b16 %v3455
      %v3506 = vunpack.c.l.b16 %v3456
      %v3507 = vunpack.c.h.b16 %v3456
      %v3508 = vunpack.c.l.b16 %v3457
      %v3509 = vunpack.c.h.b16 %v3457
      %v3510 = vunpack.c.l.b16 %v3458
      %v3511 = vunpack.c.h.b16 %v3458
      %v3512 = vunpack.c.l.b16 %v3459
      %v3513 = vunpack.c.h.b16 %v3459
      %v3514 = vunpack.c.l.b16 %v3460
      %v3515 = vunpack.c.h.b16 %v3460
      %v3516 = vunpack.c.l.b16 %v3461
      %v3517 = vunpack.c.h.b16 %v3461
      %v3518 = vunpack.c.l.b16 %v3462
      %v3519 = vunpack.c.h.b16 %v3462
      %v3520 = vunpack.c.l.b16 %v3463
      %v3521 = vunpack.c.h.b16 %v3463
      %v3522 = vunpack.c.l.b16 %v3464
      %v3523 = vunpack.c.h.b16 %v3464
      %v3524 = vunpack.c.l.b16 %v3465
      %v3525 = vunpack.c.h.b16 %v3465
      %v3526 = vpack.c.b16 %v3492, %v3490
      %v3527 = vpack.c.b16 %v3493, %v3491
      %v3528 = vpack.c.b16 %v3496, %v3494
      %v3529 = vpack.c.b16 %v3497, %v3495
      %v3530 = vpack.c.b16 %v3500, %v3498
      %v3531 = vpack.c.b16 %v3501, %v3499
      %v3532 = vpack.c.b16 %v3504, %v3502
      %v3533 = vpack.c.b16 %v3505, %v3503
      %v3534 = vpack.c.b16 %v3508, %v3506
      %v3535 = vpack.c.b16 %v3509, %v3507
      %v3536 = vpack.c.b16 %v3512, %v3510
      %v3537 = vpack.c.b16 %v3513, %v3511
      %v3538 = vpack.c.b16 %v3516, %v3514
      %v3539 = vpack.c.b16 %v3517, %v3515
      %v3540 = vpack.c.b16 %v3520, %v3518
      %v3541 = vpack.c.b16 %v3521, %v3519
      %v3542 = vpack.c.b16 %v3524, %v3522
      %v3543 = vpack.c.b16 %v3525, %v3523
      %v3563 = vsel %vm1079, %v3470, 0
      %3565 = vmatpush.bf16.msra.mxu0 %v3540
      %3566 = vmatpush.bf16.msra.mxu0 %v3538
      %3567 = vmatpush.bf16.msra.mxu0 %v3536
      %3568 = vmatpush.bf16.msra.mxu0 %v3534
      %3569 = vmatpush.bf16.msra.mxu0 %v3532
      %3570 = vmatpush.bf16.msra.mxu0 %v3530
      %3571 = vmatpush.bf16.msra.mxu0 %v3528
      %3572 = vmatpush.bf16.msra.mxu0 %v3526
      %3573 = vmatmul.bf16.gmra.mxu0 %v3469
      %v3574 = vpop.f32.mrf.mxu0
      %v3575 = vadd.f32 0.0, %v3574
      %v3576 = vpop.f32.mrf.mxu0
      %3577 = vdwg.mxu0
      %3578 = vmatpush.bf16.msra.mxu0 0
      %3579 = vmatpush.bf16.msra.mxu0 0
      %3580 = vmatpush.bf16.msra.mxu0 0
      %3581 = vmatpush.bf16.msra.mxu0 0
      %3582 = vmatpush.bf16.msra.mxu0 0
      %3583 = vmatpush.bf16.msra.mxu0 0
      %3584 = vmatpush.bf16.msra.mxu0 0
      %3585 = vmatpush.bf16.msra.mxu0 %v3542
      %3586 = vmatmul.bf16.gmra.mxu0 %v3563
      %v3587 = vpop.f32.mrf.mxu0
      %v3588 = vadd.f32 %v3575, %v3587
      %v3589 = vpop.f32.mrf.mxu0
      %3590 = vdwg.mxu0
      %3591 = vmatpush.bf16.msra.mxu0 %v3541
      %3592 = vmatpush.bf16.msra.mxu0 %v3539
      %3593 = vmatpush.bf16.msra.mxu0 %v3537
      %3594 = vmatpush.bf16.msra.mxu0 %v3535
      %3595 = vmatpush.bf16.msra.mxu0 %v3533
      %3596 = vmatpush.bf16.msra.mxu0 %v3531
      %3597 = vmatpush.bf16.msra.mxu0 %v3529
      %3598 = vmatpush.bf16.msra.mxu0 %v3527
      %3599 = vmatmul.bf16.gmra.mxu0 %v3469
      %v3600 = vpop.f32.mrf.mxu0
      %v3601 = vadd.f32 0.0, %v3600
      %v3602 = vpop.f32.mrf.mxu0
      %3603 = vdwg.mxu0
      %3604 = vmatpush.bf16.msra.mxu0 0
      %3605 = vmatpush.bf16.msra.mxu0 0
      %3606 = vmatpush.bf16.msra.mxu0 0
      %3607 = vmatpush.bf16.msra.mxu0 0
      %3608 = vmatpush.bf16.msra.mxu0 0
      %3609 = vmatpush.bf16.msra.mxu0 0
      %3610 = vmatpush.bf16.msra.mxu0 0
      %3611 = vmatpush.bf16.msra.mxu0 %v3543
      %3612 = vmatmul.bf16.gmra.mxu0 %v3563
      %v3613 = vpop.f32.mrf.mxu0
      %v3614 = vadd.f32 %v3601, %v3613
      %v3615 = vpop.f32.mrf.mxu0
      %3616 = vdwg.mxu0
      %v3617 = vmul.f32 %v3588, %v398
      %v3618 = vmul.f32 %v3614, %v399
      %3619 = vst [vmem:[#allocation2 + $0x8] sm:$0xff] %v3617
      %3620 = vst [vmem:[#allocation2 + $0x10] sm:$0xff] %v3618
      %v3621 = vmul.f32 %v3617, %v176
      %v3622 = vmul.f32 %v3618, %v177
      %3623 = vst [vmem:[#allocation2 + $0x48] sm:$0xff] %v3621
      %3624 = vst [vmem:[#allocation2 + $0x50] sm:$0xff] %v3622
      %v3625 = vmul.f32 %v3617, %v182
      %v3626 = vmul.f32 %v3618, %v183
      %3627 = vst [vmem:[#allocation2 + $0x88] sm:$0xff] %v3625
      %3628 = vst [vmem:[#allocation2 + $0x90] sm:$0xff] %v3626
      %v3629 = vld [vmem:[#allocation2 + $0x40] sm:$0xff]
      %v3630 = vld [vmem:[#allocation2 + $0x48] sm:$0xff]
      %v3631 = vld [vmem:[#allocation2 + $0x50] sm:$0xff]
      %v3632 = vpack.c.bf16 %v3630, %v3629
      %v3633 = vpack.c.bf16 %v3631, %v3631
      %3636 = vrot.lane.b32.xlu0 %v3632, 17
      %v3637 = vpop.permute.xlu0 %3636
      %3638 = vrot.lane.b32.xlu0 %v3633, 17
      %v3639 = vpop.permute.xlu0 %3638
      %v3640 = vrot.slane %v3637, 4
      %v3641 = vrot.slane %v3639, 4
      %v3642 = vsel %vm425, %v3640, %v3641
      %v3643 = vsel %vm427, %v3637, %v3642
      %3645 = vst [vmem:[#allocation3] sm:$0xff] %v3643
      %v3646 = vld [vmem:[#allocation2] sm:$0xff]
      %v3647 = vld [vmem:[#allocation2 + $0x8] sm:$0xff]
      %v3648 = vld [vmem:[#allocation2 + $0x10] sm:$0xff]
      %v3649 = vpack.c.bf16 %v3647, %v3646
      %v3650 = vpack.c.bf16 %v3648, %v3648
      %3653 = vrot.lane.b32.xlu0 %v3649, 16
      %v3654 = vpop.permute.xlu0 %3653
      %3655 = vrot.lane.b32.xlu0 %v3650, 16
      %v3656 = vpop.permute.xlu0 %3655
      %v3657 = vrot.slane %v3654, 4
      %v3658 = vrot.slane %v3656, 4
      %v3659 = vsel %vm425, %v3657, %v3658
      %v3660 = vsel %vm445, %v3654, %v3659
      %3662 = vst [vmem:[#allocation3 + $0x8] sm:$0xff] %v3660
      %v3663 = vld [vmem:[#allocation2 + $0x80] sm:$0xff]
      %v3664 = vld [vmem:[#allocation2 + $0x88] sm:$0xff]
      %v3665 = vld [vmem:[#allocation2 + $0x90] sm:$0xff]
      %v3666 = vpack.c.bf16 %v3664, %v3663
      %v3667 = vpack.c.bf16 %v3665, %v3665
      %3670 = vrot.lane.b32.xlu0 %v3666, 15
      %v3671 = vpop.permute.xlu0 %3670
      %3672 = vrot.lane.b32.xlu0 %v3667, 15
      %v3673 = vpop.permute.xlu0 %3672
      %v3674 = vrot.slane %v3671, 4
      %v3675 = vrot.slane %v3673, 4
      %v3676 = vsel %vm425, %v3674, %v3675
      %v3677 = vsel %vm463, %v3671, %v3676
      %3679 = vst [vmem:[#allocation3 + $0x10] sm:$0xff] %v3677
      %v3680 = vld [vmem:[#allocation2 + $0x40] sm:$0xff]
      %v3681 = vld [vmem:[#allocation2 + $0x48] sm:$0xff]
      %v3682 = vld [vmem:[#allocation2 + $0x50] sm:$0xff]
      %v3683 = vpack.c.bf16 %v3681, %v3680
      %v3684 = vpack.c.bf16 %v3682, %v3682
      %3687 = vrot.lane.b32.xlu0 %v3683, 1
      %v3688 = vpop.permute.xlu0 %3687
      %3689 = vrot.lane.b32.xlu0 %v3684, 1
      %v3690 = vpop.permute.xlu0 %3689
      %v3691 = vrot.slane %v3688, 4
      %v3692 = vrot.slane %v3690, 4
      %v3693 = vsel %vm425, %v3691, %v3692
      %v3694 = vsel %vm481, %v3688, %v3693
      %3696 = vst [vmem:[#allocation3 + $0x18] sm:$0xff] %v3694
      %v3697 = vld [vmem:[#allocation2 + $0x8] sm:$0xff]
      %v3698 = vld [vmem:[#allocation2 + $0x10] sm:$0xff]
      %v3699 = vpack.c.bf16 %v3698, %v3697
      %3700 = vst [vmem:[#allocation3 + $0x20] sm:$0xff] %v3699
      %v3701 = vld [vmem:[#allocation2 + $0x88] sm:$0xff]
      %v3702 = vld [vmem:[#allocation2 + $0x90] sm:$0xff]
      %v3703 = vld [vmem:[#allocation2 + $0x98] sm:$0xff]
      %v3704 = vpack.c.bf16 %v3702, %v3701
      %v3705 = vpack.c.bf16 %v3703, %v3703
      %3708 = vrot.lane.b32.xlu0 %v3704, 127
      %v3709 = vpop.permute.xlu0 %3708
      %3710 = vrot.lane.b32.xlu0 %v3705, 127
      %v3711 = vpop.permute.xlu0 %3710
      %v3712 = vrot.slane %v3709, 4
      %v3713 = vrot.slane %v3711, 4
      %v3714 = vsel %vm425, %v3712, %v3713
      %v3715 = vsel %vm503, %v3709, %v3714
      %3717 = vst [vmem:[#allocation3 + $0x28] sm:$0xff] %v3715
      %v3718 = vld [vmem:[#allocation2 + $0x48] sm:$0xff]
      %v3719 = vld [vmem:[#allocation2 + $0x50] sm:$0xff]
      %v3720 = vld [vmem:[#allocation2 + $0x58] sm:$0xff]
      %v3721 = vpack.c.bf16 %v3719, %v3718
      %v3722 = vpack.c.bf16 %v3720, %v3720
      %3725 = vrot.lane.b32.xlu0 %v3721, 113
      %v3726 = vpop.permute.xlu0 %3725
      %3727 = vrot.lane.b32.xlu0 %v3722, 113
      %v3728 = vpop.permute.xlu0 %3727
      %v3729 = vrot.slane %v3726, 4
      %v3730 = vrot.slane %v3728, 4
      %v3731 = vsel %vm425, %v3729, %v3730
      %v3732 = vsel %vm521, %v3726, %v3731
      %3734 = vst [vmem:[#allocation3 + $0x30] sm:$0xff] %v3732
      %v3735 = vld [vmem:[#allocation2 + $0x8] sm:$0xff]
      %v3736 = vld [vmem:[#allocation2 + $0x10] sm:$0xff]
      %v3737 = vld [vmem:[#allocation2 + $0x18] sm:$0xff]
      %v3738 = vpack.c.bf16 %v3736, %v3735
      %v3739 = vpack.c.bf16 %v3737, %v3737
      %3742 = vrot.lane.b32.xlu0 %v3738, 112
      %v3743 = vpop.permute.xlu0 %3742
      %3744 = vrot.lane.b32.xlu0 %v3739, 112
      %v3745 = vpop.permute.xlu0 %3744
      %v3746 = vrot.slane %v3743, 4
      %v3747 = vrot.slane %v3745, 4
      %v3748 = vsel %vm425, %v3746, %v3747
      %v3749 = vsel %vm539, %v3743, %v3748
      %3751 = vst [vmem:[#allocation3 + $0x38] sm:$0xff] %v3749
      %v3752 = vld [vmem:[#allocation2 + $0x88] sm:$0xff]
      %v3753 = vld [vmem:[#allocation2 + $0x90] sm:$0xff]
      %v3754 = vld [vmem:[#allocation2 + $0x98] sm:$0xff]
      %v3755 = vpack.c.bf16 %v3753, %v3752
      %v3756 = vpack.c.bf16 %v3754, %v3754
      %3759 = vrot.lane.b32.xlu0 %v3755, 111
      %v3760 = vpop.permute.xlu0 %3759
      %3761 = vrot.lane.b32.xlu0 %v3756, 111
      %v3762 = vpop.permute.xlu0 %3761
      %v3763 = vrot.slane %v3760, 4
      %v3764 = vrot.slane %v3762, 4
      %v3765 = vsel %vm425, %v3763, %v3764
      %v3766 = vsel %vm557, %v3760, %v3765
      %3768 = vst [vmem:[#allocation3 + $0x40] sm:$0xff] %v3766
      %v3769 = vld [vmem:[%s1 + $0x30] sm:$0xf]
      %v3770 = vld [vmem:[%s1 + $0x38] sm:$0xf]
      %v3771 = vld [vmem:[#allocation3] sm:$0xff]
      %v3772 = vld [vmem:[#allocation3 + $0x8] sm:$0xff]
      %v3773 = vld [vmem:[#allocation3 + $0x10] sm:$0xff]
      %v3774 = vld [vmem:[#allocation3 + $0x18] sm:$0xff]
      %v3775 = vld [vmem:[#allocation3 + $0x20] sm:$0xff]
      %v3776 = vld [vmem:[#allocation3 + $0x28] sm:$0xff]
      %v3777 = vld [vmem:[#allocation3 + $0x30] sm:$0xff]
      %v3778 = vld [vmem:[#allocation3 + $0x38] sm:$0xff]
      %v3779 = vld [vmem:[#allocation3 + $0x40] sm:$0xff]
      %v3782 = vunpack.c.l.b16 %v3769
      %v3783 = vunpack.c.l.b16 %v3770
      %v3784 = vpack.c.b16 %v3783, %v3782
      %v3794 = vunpack.c.l.b16 %v3771
      %v3795 = vunpack.c.h.b16 %v3771
      %v3796 = vunpack.c.l.b16 %v3772
      %v3797 = vunpack.c.h.b16 %v3772
      %v3798 = vunpack.c.l.b16 %v3773
      %v3799 = vunpack.c.h.b16 %v3773
      %v3800 = vunpack.c.l.b16 %v3774
      %v3801 = vunpack.c.h.b16 %v3774
      %v3802 = vunpack.c.l.b16 %v3775
      %v3803 = vunpack.c.h.b16 %v3775
      %v3804 = vunpack.c.l.b16 %v3776
      %v3805 = vunpack.c.h.b16 %v3776
      %v3806 = vunpack.c.l.b16 %v3777
      %v3807 = vunpack.c.h.b16 %v3777
      %v3808 = vunpack.c.l.b16 %v3778
      %v3809 = vunpack.c.h.b16 %v3778
      %v3810 = vunpack.c.l.b16 %v3779
      %v3811 = vunpack.c.h.b16 %v3779
      %v3812 = vpack.c.b16 %v3796, %v3794
      %v3813 = vpack.c.b16 %v3797, %v3795
      %v3814 = vpack.c.b16 %v3800, %v3798
      %v3815 = vpack.c.b16 %v3801, %v3799
      %v3816 = vpack.c.b16 %v3804, %v3802
      %v3817 = vpack.c.b16 %v3805, %v3803
      %v3818 = vpack.c.b16 %v3808, %v3806
      %v3819 = vpack.c.b16 %v3809, %v3807
      %v3820 = vpack.c.b16 %v3810, %v3810
      %v3821 = vpack.c.b16 %v3811, %v3811
      %v3831 = vsel %vm622, %v3784, 0
      %v3834 = vsel %vm327, %v3820, 0
      %v3837 = vsel %vm327, %v3821, 0
      %3839 = vmatpush.bf16.msra.mxu0 0
      %3840 = vmatpush.bf16.msra.mxu0 0
      %3841 = vmatpush.bf16.msra.mxu0 0
      %3842 = vmatpush.bf16.msra.mxu0 %v3834
      %3843 = vmatpush.bf16.msra.mxu0 %v3818
      %3844 = vmatpush.bf16.msra.mxu0 %v3816
      %3845 = vmatpush.bf16.msra.mxu0 %v3814
      %3846 = vmatpush.bf16.msra.mxu0 %v3812
      %3847 = vmatmul.bf16.gmra.mxu0 %v3831
      %v3848 = vpop.f32.mrf.mxu0
      %v3849 = vadd.f32 0.0, %v3848
      %v3850 = vpop.f32.mrf.mxu0
      %v3851 = vadd.f32 0.0, %v3850
      %3852 = vdwg.mxu0
      %3853 = vmatpush.bf16.msra.mxu0 0
      %3854 = vmatpush.bf16.msra.mxu0 0
      %3855 = vmatpush.bf16.msra.mxu0 0
      %3856 = vmatpush.bf16.msra.mxu0 %v3837
      %3857 = vmatpush.bf16.msra.mxu0 %v3819
      %3858 = vmatpush.bf16.msra.mxu0 %v3817
      %3859 = vmatpush.bf16.msra.mxu0 %v3815
      %3860 = vmatpush.bf16.msra.mxu0 %v3813
      %3861 = vmatmul.bf16.gmra.mxu0 %v3831
      %v3862 = vpop.f32.mrf.mxu0
      %v3863 = vadd.f32 0.0, %v3862
      %v3864 = vpop.f32.mrf.mxu0
      %v3865 = vadd.f32 0.0, %v3864
      %3866 = vdwg.mxu0
      %v3867 = vsub.f32 %v3143, %v3849
      %v3868 = vsub.f32 %v3144, %v3863
      %v3869 = vsub.f32 %v3145, %v3851
      %v3870 = vsub.f32 %v3146, %v3865
      %v3871 = vadd.f32 %v3867, %v2393
      %v3872 = vadd.f32 %v3868, %v2407
      %v3873 = vadd.f32 %v3869, %v2395
      %v3874 = vadd.f32 %v3870, %v2409
      %v3875 = vmax.f32 %v3871, 0.0
      %v3876 = vmax.f32 %v3872, 0.0
      %v3877 = vmax.f32 %v3873, 0.0
      %v3878 = vmax.f32 %v3874, 0.0
      %3879 = vst [vmem:[#allocation2 + $0x8] sm:$0xff] %v3875
      %3880 = vst [vmem:[#allocation2 + $0x10] sm:$0xff] %v3876
      %3881 = vst [vmem:[#allocation2 + $0x28] sm:$0xff] %v3877
      %3882 = vst [vmem:[#allocation2 + $0x30] sm:$0xff] %v3878
      %v3883 = vmul.f32 %v3875, %v176
      %v3884 = vmul.f32 %v3876, %v177
      %v3885 = vmul.f32 %v3877, %v176
      %v3886 = vmul.f32 %v3878, %v177
      %3887 = vst [vmem:[#allocation2 + $0x48] sm:$0xff] %v3883
      %3888 = vst [vmem:[#allocation2 + $0x50] sm:$0xff] %v3884
      %3889 = vst [vmem:[#allocation2 + $0x68] sm:$0xff] %v3885
      %3890 = vst [vmem:[#allocation2 + $0x70] sm:$0xff] %v3886
      %v3891 = vmul.f32 %v3875, %v182
      %v3892 = vmul.f32 %v3876, %v183
      %v3893 = vmul.f32 %v3877, %v182
      %v3894 = vmul.f32 %v3878, %v183
      %3895 = vst [vmem:[#allocation2 + $0x88] sm:$0xff] %v3891
      %3896 = vst [vmem:[#allocation2 + $0x90] sm:$0xff] %v3892
      %3897 = vst [vmem:[#allocation2 + $0xa8] sm:$0xff] %v3893
      %3898 = vst [vmem:[#allocation2 + $0xb0] sm:$0xff] %v3894
      %v3899 = vld [vmem:[#allocation2 + $0x40] sm:$0xff]
      %v3900 = vld [vmem:[#allocation2 + $0x48] sm:$0xff]
      %v3901 = vld [vmem:[#allocation2 + $0x50] sm:$0xff]
      %v3902 = vld [vmem:[#allocation2 + $0x60] sm:$0xff]
      %v3903 = vld [vmem:[#allocation2 + $0x68] sm:$0xff]
      %v3904 = vld [vmem:[#allocation2 + $0x70] sm:$0xff]
      %v3905 = vpack.c.bf16 %v3900, %v3899
      %v3906 = vpack.c.bf16 %v3901, %v3901
      %v3907 = vpack.c.bf16 %v3903, %v3902
      %v3908 = vpack.c.bf16 %v3904, %v3904
      %3913 = vrot.lane.b32.xlu0 %v3905, 17
      %v3914 = vpop.permute.xlu0 %3913
      %3915 = vrot.lane.b32.xlu0 %v3906, 17
      %v3916 = vpop.permute.xlu0 %3915
      %3917 = vrot.lane.b32.xlu0 %v3907, 17
      %v3918 = vpop.permute.xlu0 %3917
      %3919 = vrot.lane.b32.xlu0 %v3908, 17
      %v3920 = vpop.permute.xlu0 %3919
      %v3921 = vrot.slane %v3914, 4
      %v3922 = vrot.slane %v3916, 4
      %v3923 = vrot.slane %v3918, 4
      %v3924 = vrot.slane %v3920, 4
      %v3925 = vsel %vm425, %v3921, %v3922
      %v3926 = vsel %vm427, %v3914, %v3925
      %v3927 = vsel %vm425, %v3923, %v3924
      %v3928 = vsel %vm427, %v3918, %v3927
      %3931 = vst [vmem:[#allocation3] sm:$0xff] %v3926
      %3932 = vst [vmem:[#allocation3 + $0x8] sm:$0xff] %v3928
      %v3933 = vld [vmem:[#allocation2] sm:$0xff]
      %v3934 = vld [vmem:[#allocation2 + $0x8] sm:$0xff]
      %v3935 = vld [vmem:[#allocation2 + $0x10] sm:$0xff]
      %v3936 = vld [vmem:[#allocation2 + $0x20] sm:$0xff]
      %v3937 = vld [vmem:[#allocation2 + $0x28] sm:$0xff]
      %v3938 = vld [vmem:[#allocation2 + $0x30] sm:$0xff]
      %v3939 = vpack.c.bf16 %v3934, %v3933
      %v3940 = vpack.c.bf16 %v3935, %v3935
      %v3941 = vpack.c.bf16 %v3937, %v3936
      %v3942 = vpack.c.bf16 %v3938, %v3938
      %3947 = vrot.lane.b32.xlu0 %v3939, 16
      %v3948 = vpop.permute.xlu0 %3947
      %3949 = vrot.lane.b32.xlu0 %v3940, 16
      %v3950 = vpop.permute.xlu0 %3949
      %3951 = vrot.lane.b32.xlu0 %v3941, 16
      %v3952 = vpop.permute.xlu0 %3951
      %3953 = vrot.lane.b32.xlu0 %v3942, 16
      %v3954 = vpop.permute.xlu0 %3953
      %v3955 = vrot.slane %v3948, 4
      %v3956 = vrot.slane %v3950, 4
      %v3957 = vrot.slane %v3952, 4
      %v3958 = vrot.slane %v3954, 4
      %v3959 = vsel %vm425, %v3955, %v3956
      %v3960 = vsel %vm445, %v3948, %v3959
      %v3961 = vsel %vm425, %v3957, %v3958
      %v3962 = vsel %vm445, %v3952, %v3961
      %3965 = vst [vmem:[#allocation3 + $0x10] sm:$0xff] %v3960
      %3966 = vst [vmem:[#allocation3 + $0x18] sm:$0xff] %v3962
      %v3967 = vld [vmem:[#allocation2 + $0x80] sm:$0xff]
      %v3968 = vld [vmem:[#allocation2 + $0x88] sm:$0xff]
      %v3969 = vld [vmem:[#allocation2 + $0x90] sm:$0xff]
      %v3970 = vld [vmem:[#allocation2 + $0xa0] sm:$0xff]
      %v3971 = vld [vmem:[#allocation2 + $0xa8] sm:$0xff]
      %v3972 = vld [vmem:[#allocation2 + $0xb0] sm:$0xff]
      %v3973 = vpack.c.bf16 %v3968, %v3967
      %v3974 = vpack.c.bf16 %v3969, %v3969
      %v3975 = vpack.c.bf16 %v3971, %v3970
      %v3976 = vpack.c.bf16 %v3972, %v3972
      %3981 = vrot.lane.b32.xlu0 %v3973, 15
      %v3982 = vpop.permute.xlu0 %3981
      %3983 = vrot.lane.b32.xlu0 %v3974, 15
      %v3984 = vpop.permute.xlu0 %3983
      %3985 = vrot.lane.b32.xlu0 %v3975, 15
      %v3986 = vpop.permute.xlu0 %3985
      %3987 = vrot.lane.b32.xlu0 %v3976, 15
      %v3988 = vpop.permute.xlu0 %3987
      %v3989 = vrot.slane %v3982, 4
      %v3990 = vrot.slane %v3984, 4
      %v3991 = vrot.slane %v3986, 4
      %v3992 = vrot.slane %v3988, 4
      %v3993 = vsel %vm425, %v3989, %v3990
      %v3994 = vsel %vm463, %v3982, %v3993
      %v3995 = vsel %vm425, %v3991, %v3992
      %v3996 = vsel %vm463, %v3986, %v3995
      %3999 = vst [vmem:[#allocation3 + $0x20] sm:$0xff] %v3994
      %4000 = vst [vmem:[#allocation3 + $0x28] sm:$0xff] %v3996
      %v4001 = vld [vmem:[#allocation2 + $0x40] sm:$0xff]
      %v4002 = vld [vmem:[#allocation2 + $0x48] sm:$0xff]
      %v4003 = vld [vmem:[#allocation2 + $0x50] sm:$0xff]
      %v4004 = vld [vmem:[#allocation2 + $0x60] sm:$0xff]
      %v4005 = vld [vmem:[#allocation2 + $0x68] sm:$0xff]
      %v4006 = vld [vmem:[#allocation2 + $0x70] sm:$0xff]
      %v4007 = vpack.c.bf16 %v4002, %v4001
      %v4008 = vpack.c.bf16 %v4003, %v4003
      %v4009 = vpack.c.bf16 %v4005, %v4004
      %v4010 = vpack.c.bf16 %v4006, %v4006
      %4015 = vrot.lane.b32.xlu0 %v4007, 1
      %v4016 = vpop.permute.xlu0 %4015
      %4017 = vrot.lane.b32.xlu0 %v4008, 1
      %v4018 = vpop.permute.xlu0 %4017
      %4019 = vrot.lane.b32.xlu0 %v4009, 1
      %v4020 = vpop.permute.xlu0 %4019
      %4021 = vrot.lane.b32.xlu0 %v4010, 1
      %v4022 = vpop.permute.xlu0 %4021
      %v4023 = vrot.slane %v4016, 4
      %v4024 = vrot.slane %v4018, 4
      %v4025 = vrot.slane %v4020, 4
      %v4026 = vrot.slane %v4022, 4
      %v4027 = vsel %vm425, %v4023, %v4024
      %v4028 = vsel %vm481, %v4016, %v4027
      %v4029 = vsel %vm425, %v4025, %v4026
      %v4030 = vsel %vm481, %v4020, %v4029
      %4033 = vst [vmem:[#allocation3 + $0x30] sm:$0xff] %v4028
      %4034 = vst [vmem:[#allocation3 + $0x38] sm:$0xff] %v4030
      %v4035 = vld [vmem:[#allocation2 + $0x8] sm:$0xff]
      %v4036 = vld [vmem:[#allocation2 + $0x10] sm:$0xff]
      %v4037 = vld [vmem:[#allocation2 + $0x28] sm:$0xff]
      %v4038 = vld [vmem:[#allocation2 + $0x30] sm:$0xff]
      %v4039 = vpack.c.bf16 %v4036, %v4035
      %v4040 = vpack.c.bf16 %v4038, %v4037
      %4041 = vst [vmem:[#allocation3 + $0x40] sm:$0xff] %v4039
      %4042 = vst [vmem:[#allocation3 + $0x48] sm:$0xff] %v4040
      %v4043 = vld [vmem:[#allocation2 + $0x88] sm:$0xff]
      %v4044 = vld [vmem:[#allocation2 + $0x90] sm:$0xff]
      %v4045 = vld [vmem:[#allocation2 + $0x98] sm:$0xff]
      %v4046 = vld [vmem:[#allocation2 + $0xa8] sm:$0xff]
      %v4047 = vld [vmem:[#allocation2 + $0xb0] sm:$0xff]
      %v4048 = vld [vmem:[#allocation2 + $0xb8] sm:$0xff]
      %v4049 = vpack.c.bf16 %v4044, %v4043
      %v4050 = vpack.c.bf16 %v4045, %v4045
      %v4051 = vpack.c.bf16 %v4047, %v4046
      %v4052 = vpack.c.bf16 %v4048, %v4048
      %4057 = vrot.lane.b32.xlu0 %v4049, 127
      %v4058 = vpop.permute.xlu0 %4057
      %4059 = vrot.lane.b32.xlu0 %v4050, 127
      %v4060 = vpop.permute.xlu0 %4059
      %4061 = vrot.lane.b32.xlu0 %v4051, 127
      %v4062 = vpop.permute.xlu0 %4061
      %4063 = vrot.lane.b32.xlu0 %v4052, 127
      %v4064 = vpop.permute.xlu0 %4063
      %v4065 = vrot.slane %v4058, 4
      %v4066 = vrot.slane %v4060, 4
      %v4067 = vrot.slane %v4062, 4
      %v4068 = vrot.slane %v4064, 4
      %v4069 = vsel %vm425, %v4065, %v4066
      %v4070 = vsel %vm503, %v4058, %v4069
      %v4071 = vsel %vm425, %v4067, %v4068
      %v4072 = vsel %vm503, %v4062, %v4071
      %4075 = vst [vmem:[#allocation3 + $0x50] sm:$0xff] %v4070
      %4076 = vst [vmem:[#allocation3 + $0x58] sm:$0xff] %v4072
      %v4077 = vld [vmem:[#allocation2 + $0x48] sm:$0xff]
      %v4078 = vld [vmem:[#allocation2 + $0x50] sm:$0xff]
      %v4079 = vld [vmem:[#allocation2 + $0x58] sm:$0xff]
      %v4080 = vld [vmem:[#allocation2 + $0x68] sm:$0xff]
      %v4081 = vld [vmem:[#allocation2 + $0x70] sm:$0xff]
      %v4082 = vld [vmem:[#allocation2 + $0x78] sm:$0xff]
      %v4083 = vpack.c.bf16 %v4078, %v4077
      %v4084 = vpack.c.bf16 %v4079, %v4079
      %v4085 = vpack.c.bf16 %v4081, %v4080
      %v4086 = vpack.c.bf16 %v4082, %v4082
      %4091 = vrot.lane.b32.xlu0 %v4083, 113
      %v4092 = vpop.permute.xlu0 %4091
      %4093 = vrot.lane.b32.xlu0 %v4084, 113
      %v4094 = vpop.permute.xlu0 %4093
      %4095 = vrot.lane.b32.xlu0 %v4085, 113
      %v4096 = vpop.permute.xlu0 %4095
      %4097 = vrot.lane.b32.xlu0 %v4086, 113
      %v4098 = vpop.permute.xlu0 %4097
      %v4099 = vrot.slane %v4092, 4
      %v4100 = vrot.slane %v4094, 4
      %v4101 = vrot.slane %v4096, 4
      %v4102 = vrot.slane %v4098, 4
      %v4103 = vsel %vm425, %v4099, %v4100
      %v4104 = vsel %vm521, %v4092, %v4103
      %v4105 = vsel %vm425, %v4101, %v4102
      %v4106 = vsel %vm521, %v4096, %v4105
      %4109 = vst [vmem:[#allocation3 + $0x60] sm:$0xff] %v4104
      %4110 = vst [vmem:[#allocation3 + $0x68] sm:$0xff] %v4106
      %v4111 = vld [vmem:[#allocation2 + $0x8] sm:$0xff]
      %v4112 = vld [vmem:[#allocation2 + $0x10] sm:$0xff]
      %v4113 = vld [vmem:[#allocation2 + $0x18] sm:$0xff]
      %v4114 = vld [vmem:[#allocation2 + $0x28] sm:$0xff]
      %v4115 = vld [vmem:[#allocation2 + $0x30] sm:$0xff]
      %v4116 = vld [vmem:[#allocation2 + $0x38] sm:$0xff]
      %v4117 = vpack.c.bf16 %v4112, %v4111
      %v4118 = vpack.c.bf16 %v4113, %v4113
      %v4119 = vpack.c.bf16 %v4115, %v4114
      %v4120 = vpack.c.bf16 %v4116, %v4116
      %4125 = vrot.lane.b32.xlu0 %v4117, 112
      %v4126 = vpop.permute.xlu0 %4125
      %4127 = vrot.lane.b32.xlu0 %v4118, 112
      %v4128 = vpop.permute.xlu0 %4127
      %4129 = vrot.lane.b32.xlu0 %v4119, 112
      %v4130 = vpop.permute.xlu0 %4129
      %4131 = vrot.lane.b32.xlu0 %v4120, 112
      %v4132 = vpop.permute.xlu0 %4131
      %v4133 = vrot.slane %v4126, 4
      %v4134 = vrot.slane %v4128, 4
      %v4135 = vrot.slane %v4130, 4
      %v4136 = vrot.slane %v4132, 4
      %v4137 = vsel %vm425, %v4133, %v4134
      %v4138 = vsel %vm539, %v4126, %v4137
      %v4139 = vsel %vm425, %v4135, %v4136
      %v4140 = vsel %vm539, %v4130, %v4139
      %4143 = vst [vmem:[#allocation3 + $0x70] sm:$0xff] %v4138
      %4144 = vst [vmem:[#allocation3 + $0x78] sm:$0xff] %v4140
      %v4145 = vld [vmem:[#allocation2 + $0x88] sm:$0xff]
      %v4146 = vld [vmem:[#allocation2 + $0x90] sm:$0xff]
      %v4147 = vld [vmem:[#allocation2 + $0x98] sm:$0xff]
      %v4148 = vld [vmem:[#allocation2 + $0xa8] sm:$0xff]
      %v4149 = vld [vmem:[#allocation2 + $0xb0] sm:$0xff]
      %v4150 = vld [vmem:[#allocation2 + $0xb8] sm:$0xff]
      %v4151 = vpack.c.bf16 %v4146, %v4145
      %v4152 = vpack.c.bf16 %v4147, %v4147
      %v4153 = vpack.c.bf16 %v4149, %v4148
      %v4154 = vpack.c.bf16 %v4150, %v4150
      %4159 = vrot.lane.b32.xlu0 %v4151, 111
      %v4160 = vpop.permute.xlu0 %4159
      %4161 = vrot.lane.b32.xlu0 %v4152, 111
      %v4162 = vpop.permute.xlu0 %4161
      %4163 = vrot.lane.b32.xlu0 %v4153, 111
      %v4164 = vpop.permute.xlu0 %4163
      %4165 = vrot.lane.b32.xlu0 %v4154, 111
      %v4166 = vpop.permute.xlu0 %4165
      %v4167 = vrot.slane %v4160, 4
      %v4168 = vrot.slane %v4162, 4
      %v4169 = vrot.slane %v4164, 4
      %v4170 = vrot.slane %v4166, 4
      %v4171 = vsel %vm425, %v4167, %v4168
      %v4172 = vsel %vm557, %v4160, %v4171
      %v4173 = vsel %vm425, %v4169, %v4170
      %v4174 = vsel %vm557, %v4164, %v4173
      %4177 = vst [vmem:[#allocation3 + $0x80] sm:$0xff] %v4172
      %4178 = vst [vmem:[#allocation3 + $0x88] sm:$0xff] %v4174
      %v4179 = vld [vmem:[%s1 + $0x40] sm:$0xff]
      %v4180 = vld [vmem:[%s1 + $0x48] sm:$0xff]
      %v4181 = vld [vmem:[#allocation3] sm:$0xff]
      %v4182 = vld [vmem:[#allocation3 + $0x8] sm:$0xff]
      %v4183 = vld [vmem:[#allocation3 + $0x10] sm:$0xff]
      %v4184 = vld [vmem:[#allocation3 + $0x18] sm:$0xff]
      %v4185 = vld [vmem:[#allocation3 + $0x20] sm:$0xff]
      %v4186 = vld [vmem:[#allocation3 + $0x28] sm:$0xff]
      %v4187 = vld [vmem:[#allocation3 + $0x30] sm:$0xff]
      %v4188 = vld [vmem:[#allocation3 + $0x38] sm:$0xff]
      %v4189 = vld [vmem:[#allocation3 + $0x40] sm:$0xff]
      %v4190 = vld [vmem:[#allocation3 + $0x48] sm:$0xff]
      %v4191 = vld [vmem:[#allocation3 + $0x50] sm:$0xff]
      %v4192 = vld [vmem:[#allocation3 + $0x58] sm:$0xff]
      %v4193 = vld [vmem:[#allocation3 + $0x60] sm:$0xff]
      %v4194 = vld [vmem:[#allocation3 + $0x68] sm:$0xff]
      %v4195 = vld [vmem:[#allocation3 + $0x70] sm:$0xff]
      %v4196 = vld [vmem:[#allocation3 + $0x78] sm:$0xff]
      %v4197 = vld [vmem:[#allocation3 + $0x80] sm:$0xff]
      %v4198 = vld [vmem:[#allocation3 + $0x88] sm:$0xff]
      %v4201 = vunpack.c.l.b16 %v4179
      %v4202 = vunpack.c.h.b16 %v4179
      %v4203 = vunpack.c.l.b16 %v4180
      %v4204 = vunpack.c.h.b16 %v4180
      %v4205 = vpack.c.b16 %v4203, %v4201
      %v4206 = vpack.c.b16 %v4204, %v4202
      %v4226 = vunpack.c.l.b16 %v4181
      %v4227 = vunpack.c.h.b16 %v4181
      %v4228 = vunpack.c.l.b16 %v4182
      %v4229 = vunpack.c.h.b16 %v4182
      %v4230 = vunpack.c.l.b16 %v4183
      %v4231 = vunpack.c.h.b16 %v4183
      %v4232 = vunpack.c.l.b16 %v4184
      %v4233 = vunpack.c.h.b16 %v4184
      %v4234 = vunpack.c.l.b16 %v4185
      %v4235 = vunpack.c.h.b16 %v4185
      %v4236 = vunpack.c.l.b16 %v4186
      %v4237 = vunpack.c.h.b16 %v4186
      %v4238 = vunpack.c.l.b16 %v4187
      %v4239 = vunpack.c.h.b16 %v4187
      %v4240 = vunpack.c.l.b16 %v4188
      %v4241 = vunpack.c.h.b16 %v4188
      %v4242 = vunpack.c.l.b16 %v4189
      %v4243 = vunpack.c.h.b16 %v4189
      %v4244 = vunpack.c.l.b16 %v4190
      %v4245 = vunpack.c.h.b16 %v4190
      %v4246 = vunpack.c.l.b16 %v4191
      %v4247 = vunpack.c.h.b16 %v4191
      %v4248 = vunpack.c.l.b16 %v4192
      %v4249 = vunpack.c.h.b16 %v4192
      %v4250 = vunpack.c.l.b16 %v4193
      %v4251 = vunpack.c.h.b16 %v4193
      %v4252 = vunpack.c.l.b16 %v4194
      %v4253 = vunpack.c.h.b16 %v4194
      %v4254 = vunpack.c.l.b16 %v4195
      %v4255 = vunpack.c.h.b16 %v4195
      %v4256 = vunpack.c.l.b16 %v4196
      %v4257 = vunpack.c.h.b16 %v4196
      %v4258 = vunpack.c.l.b16 %v4197
      %v4259 = vunpack.c.h.b16 %v4197
      %v4260 = vunpack.c.l.b16 %v4198
      %v4261 = vunpack.c.h.b16 %v4198
      %v4262 = vpack.c.b16 %v4228, %v4226
      %v4263 = vpack.c.b16 %v4229, %v4227
      %v4264 = vpack.c.b16 %v4232, %v4230
      %v4265 = vpack.c.b16 %v4233, %v4231
      %v4266 = vpack.c.b16 %v4236, %v4234
      %v4267 = vpack.c.b16 %v4237, %v4235
      %v4268 = vpack.c.b16 %v4240, %v4238
      %v4269 = vpack.c.b16 %v4241, %v4239
      %v4270 = vpack.c.b16 %v4244, %v4242
      %v4271 = vpack.c.b16 %v4245, %v4243
      %v4272 = vpack.c.b16 %v4248, %v4246
      %v4273 = vpack.c.b16 %v4249, %v4247
      %v4274 = vpack.c.b16 %v4252, %v4250
      %v4275 = vpack.c.b16 %v4253, %v4251
      %v4276 = vpack.c.b16 %v4256, %v4254
      %v4277 = vpack.c.b16 %v4257, %v4255
      %v4278 = vpack.c.b16 %v4260, %v4258
      %v4279 = vpack.c.b16 %v4261, %v4259
      %v4299 = vsel %vm1079, %v4206, 0
      %4301 = vmatpush.bf16.msra.mxu0 %v4276
      %4302 = vmatpush.bf16.msra.mxu0 %v4274
      %4303 = vmatpush.bf16.msra.mxu0 %v4272
      %4304 = vmatpush.bf16.msra.mxu0 %v4270
      %4305 = vmatpush.bf16.msra.mxu0 %v4268
      %4306 = vmatpush.bf16.msra.mxu0 %v4266
      %4307 = vmatpush.bf16.msra.mxu0 %v4264
      %4308 = vmatpush.bf16.msra.mxu0 %v4262
      %4309 = vmatmul.bf16.gmra.mxu0 %v4205
      %v4310 = vpop.f32.mrf.mxu0
      %v4311 = vadd.f32 0.0, %v4310
      %v4312 = vpop.f32.mrf.mxu0
      %v4313 = vadd.f32 0.0, %v4312
      %4314 = vdwg.mxu0
      %4315 = vmatpush.bf16.msra.mxu0 0
      %4316 = vmatpush.bf16.msra.mxu0 0
      %4317 = vmatpush.bf16.msra.mxu0 0
      %4318 = vmatpush.bf16.msra.mxu0 0
      %4319 = vmatpush.bf16.msra.mxu0 0
      %4320 = vmatpush.bf16.msra.mxu0 0
      %4321 = vmatpush.bf16.msra.mxu0 0
      %4322 = vmatpush.bf16.msra.mxu0 %v4278
      %4323 = vmatmul.bf16.gmra.mxu0 %v4299
      %v4324 = vpop.f32.mrf.mxu0
      %v4325 = vadd.f32 %v4311, %v4324
      %v4326 = vpop.f32.mrf.mxu0
      %v4327 = vadd.f32 %v4313, %v4326
      %4328 = vdwg.mxu0
      %4329 = vmatpush.bf16.msra.mxu0 %v4277
      %4330 = vmatpush.bf16.msra.mxu0 %v4275
      %4331 = vmatpush.bf16.msra.mxu0 %v4273
      %4332 = vmatpush.bf16.msra.mxu0 %v4271
      %4333 = vmatpush.bf16.msra.mxu0 %v4269
      %4334 = vmatpush.bf16.msra.mxu0 %v4267
      %4335 = vmatpush.bf16.msra.mxu0 %v4265
      %4336 = vmatpush.bf16.msra.mxu0 %v4263
      %4337 = vmatmul.bf16.gmra.mxu0 %v4205
      %v4338 = vpop.f32.mrf.mxu0
      %v4339 = vadd.f32 0.0, %v4338
      %v4340 = vpop.f32.mrf.mxu0
      %v4341 = vadd.f32 0.0, %v4340
      %4342 = vdwg.mxu0
      %4343 = vmatpush.bf16.msra.mxu0 0
      %4344 = vmatpush.bf16.msra.mxu0 0
      %4345 = vmatpush.bf16.msra.mxu0 0
      %4346 = vmatpush.bf16.msra.mxu0 0
      %4347 = vmatpush.bf16.msra.mxu0 0
      %4348 = vmatpush.bf16.msra.mxu0 0
      %4349 = vmatpush.bf16.msra.mxu0 0
      %4350 = vmatpush.bf16.msra.mxu0 %v4279
      %4351 = vmatmul.bf16.gmra.mxu0 %v4299
      %v4352 = vpop.f32.mrf.mxu0
      %v4353 = vadd.f32 %v4339, %v4352
      %v4354 = vpop.f32.mrf.mxu0
      %v4355 = vadd.f32 %v4341, %v4354
      %4356 = vdwg.mxu0
      %4357 = vst [vmem:[%s143] sm:$0xff] %v4325
      %4358 = vst [vmem:[%s143 + $0x8] sm:$0xff] %v4353
      %4359 = vst [vmem:[%s143 + $0x10] sm:$0xff] %v4327
      %4360 = vst [vmem:[%s143 + $0x18] sm:$0xff] %v4355
      %p4361 = scmp.lt.s32.totalorder %s13, 1
      %s4362 = scalar_select %p4361, %s13, 1
      %s4363 = smul.addr %s4362, 4
      %s4364 = smul.addr %s4363, 8
      %s4365 = scalar_lea.vmem %s2, %s4364
      // Predicated region
      $region29: #{esl_backbone_forward.1} parent=27 // pred_check
        %p4366 = pneg %p78
      $region30: #{esl_backbone_forward.1} parent=27 // pred_check_branch
        %4368 = sbr.rel (%p4366) target = $region32
      $region31: #{esl_backbone_forward.1} parent=27 // pred_region
        _
      $region32: #{esl_backbone_forward.1} parent=27 // pred_fallthru
        _
    $region28: #{esl_backbone_forward.1} parent=5 // pred_fallthru
      _
    %p4369 = scmp.le.s32.totalorder 2, %s8
    // Predicated region
    $region33: #{esl_backbone_forward.1} parent=5 // pred_check
      %p4370 = pneg %p4369
    $region34: #{esl_backbone_forward.1} parent=5 // pred_check_branch
      %4372 = sbr.rel (%p4370) target = $region36
    $region35: #{esl_backbone_forward.1} parent=5 // pred_region
      %s4373 = ssub.s32 %s8, 2
      // Predicated region
      $region37: #{esl_backbone_forward.1} parent=35 // pred_check
        %p4374 = pneg %p84
      $region38: #{esl_backbone_forward.1} parent=35 // pred_check_branch
        %4376 = sbr.rel (%p4374) target = $region40
      $region39: #{esl_backbone_forward.1} parent=35 // pred_region
        %p4377 = scmp.lt.s32.totalorder %s14, 1
        %s4378 = scalar_select %p4377, %s14, 1
        %s4379 = smul.addr %s4378, 4
        %s4380 = smul.addr %s4379, 8
        %s4381 = scalar_lea.vmem %s2, %s4380
      $region40: #{esl_backbone_forward.1} parent=35 // pred_fallthru
        _
    $region36: #{esl_backbone_forward.1} parent=5 // pred_fallthru
      _
  $region6: #{esl_backbone_forward.1} parent=0 // loop_footer
    %s12 = sadd.s32 1, %s8
  $region7: #{esl_backbone_forward.1} parent=0 // loop_footer_branch
    %7 = sbr.rel target = $region3
  $region8: #{esl_backbone_forward.1} parent=0 // loop_exit
    _

</llo_original>
